<compile_context>
chip_gen: v7x
topology: tpu7x:2x2x1
jax: 0.10.0
libtpu: 0.0.40
codegen_flags: <defaults>
</compile_context>

<pallas_src>
import numpy as np
import jax
import jax.numpy as jnp
from jax.experimental import pallas as pl
from jax.experimental.pallas import tpu as pltpu

TILE_N = 8     # images per grid step; TILE_N*OH = 112/56/32 (8- and 16-aligned)
C_PAD = 32     # layer-3 / head channel padding: 4*32 = 128 lanes (lane-dense)
OUT_PAD = 128  # padded output width (multiple of 128 -> unmasked stores)


# ----------------------------- fused Pallas kernel ---------------------------

def _mnist_cnn_kernel(x_ref,
                      r1_ref, m1_ref, b1_ref,
                      r2_ref, m2_ref, b2_ref,
                      r3_ref, m3_ref, b3_ref,
                      pr_ref, pc_ref,
                      o_ref):
    """Full Mnist_CNN forward for one batch tile (TILE_N images), in VMEM.

    Activation layout: 2-D slab  h[(n, row), (col, channel)]
      (TN*28, 28) -> (TN*14, 14*16) -> (TN*7, 7*16) -> (TN*4, 4*C_PAD = 128)
    r*_ref : (3*TN*OH, TN*H)      bf16  tap-stacked 0/1 row gather
    m*_ref : (3, W*Cin, OW*Cout)  bf16  col gather + channel mix (per tap)
    b*_ref : (1, OW*Cout)         f32   bias, tiled over OW
    pr_ref : (TN, TN*4)           bf16  row-mean of the 4x4 pool
    pc_ref : (4*C_PAD, OUT_PAD)   bf16  col-mean of the 4x4 pool (+ lane pad)
    """

    def conv_relu(hb, r_ref, m_ref, b_ref, rows):
        # one gather dot for all 3 kernel-row taps (taps stacked along M)
        t = jnp.dot(r_ref[...], hb, preferred_element_type=jnp.float32)
        tb = t.astype(jnp.bfloat16)
        # tap accumulation as a straight `acc +=` chain into one f32 accumulator
        acc = jnp.dot(tb[0 * rows:1 * rows], m_ref[0],
                      preferred_element_type=jnp.float32)
        acc += jnp.dot(tb[1 * rows:2 * rows], m_ref[1],
                       preferred_element_type=jnp.float32)
        acc += jnp.dot(tb[2 * rows:3 * rows], m_ref[2],
                       preferred_element_type=jnp.float32)
        return jnp.maximum(acc + b_ref[...], 0.0).astype(jnp.bfloat16)

    hb = x_ref[...].astype(jnp.bfloat16)                      # (TN*28, 28)
    hb = conv_relu(hb, r1_ref, m1_ref, b1_ref, TILE_N * 14)   # (TN*14, 224)
    hb = conv_relu(hb, r2_ref, m2_ref, b2_ref, TILE_N * 7)    # (TN*7,  112)
    hb = conv_relu(hb, r3_ref, m3_ref, b3_ref, TILE_N * 4)    # (TN*4,  128)
    # fused 4x4 average pool: mean over rows (oh), then over (ow, c) lane groups
    p = jnp.dot(pr_ref[...], hb, preferred_element_type=jnp.float32)     # (TN, 128)
    out = jnp.dot(p.astype(jnp.bfloat16), pc_ref[...],
                  preferred_element_type=jnp.float32)                    # (TN, OUT_PAD)
    o_ref[...] = out.astype(o_ref.dtype)


# ------------------------------- Pallas wrapper -------------------------------

def _const_spec(a):
    zeros = (0,) * a.ndim
    return pl.BlockSpec(a.shape, lambda i, _z=zeros: _z)


def mnist_cnn_forward(x, prepped, pr, pc):
    """x: (N, 784) float32 -> (N, 10), matching Mnist_CNN.forward semantics."""
    N = x.shape[0]
    pad = (-N) % TILE_N
    if pad:
        x = jnp.concatenate([x, jnp.zeros((pad, x.shape[1]), x.dtype)], axis=0)
    NP = N + pad
    x2 = x.reshape(NP * 28, 28)                 # slab rows (n, h), cols w (Cin=1)
    (r1, m1, b1), (r2, m2, b2), (r3, m3, b3) = prepped
    weights = (r1, m1, b1, r2, m2, b2, r3, m3, b3, pr, pc)

    out = pl.pallas_call(
        _mnist_cnn_kernel,
        out_shape=jax.ShapeDtypeStruct((NP, OUT_PAD), jnp.float32),
        grid=(NP // TILE_N,),
        in_specs=[pl.BlockSpec((TILE_N * 28, 28), lambda i: (i, 0))]
                 + [_const_spec(a) for a in weights],
        out_specs=pl.BlockSpec((TILE_N, OUT_PAD), lambda i: (i, 0)),
        compiler_params=pltpu.CompilerParams(
            dimension_semantics=("parallel",)),
    )(x2, *weights)
    return out[:N, :10]


# -------------------- one-time (init) parameter re-layout ---------------------

def _row_gather_stack(H, OH, tn):
    """(3*tn*OH, tn*H) 0/1 tap-stacked row gather: vstack_k kron(I_tn, R_k)."""
    mats = []
    for ki in range(3):
        r = np.zeros((OH, H), np.float32)
        for oh in range(OH):
            h = 2 * oh + ki - 1
            if 0 <= h < H:
                r[oh, h] = 1.0
        mats.append(np.kron(np.eye(tn, dtype=np.float32), r))
    return np.concatenate(mats, axis=0)


def _col_select(W, OW):
    """Three (W, OW) 0/1 matrices selecting padded input col 2*ow + kj - 1."""
    mats = []
    for kj in range(3):
        c = np.zeros((W, OW), np.float32)
        for ow in range(OW):
            w = 2 * ow + kj - 1
            if 0 <= w < W:
                c[w, ow] = 1.0
        mats.append(c)
    return mats


def _prep_layer(w, b, H, W, tn, cout_pad=None):
    """Fold one Conv2d(k=3, s=2, p=1) into fixed-size structured matrices."""
    w = np.asarray(w, np.float32)
    b = np.asarray(b, np.float32)
    Cout, Cin, KH, KW = w.shape
    OH, OW = (H - 1) // 2 + 1, (W - 1) // 2 + 1
    cp = Cout if cout_pad is None else cout_pad
    r = jnp.asarray(_row_gather_stack(H, OH, tn), jnp.bfloat16)
    csel = _col_select(W, OW)
    taps = []
    for ki in range(KH):
        m = np.zeros((W * Cin, OW * cp), np.float32)
        for kj in range(KW):
            wt = np.zeros((Cin, cp), np.float32)
            wt[:, :Cout] = w[:, :, ki, kj].T                 # (Cin, cp)
            m += np.kron(csel[kj], wt)                       # (W*Cin, OW*cp)
        taps.append(m)
    m = jnp.asarray(np.stack(taps), jnp.bfloat16)            # (3, W*Cin, OW*cp)
    bp = np.zeros((cp,), np.float32)
    bp[:Cout] = b
    brow = jnp.asarray(np.tile(bp, OW)[None, :], jnp.float32)  # (1, OW*cp)
    return (r, m, brow), OH, OW


def prepare_params(params, tn=TILE_N):
    """Hoisted weight transform: build all structured matrices once at init."""
    prepped, H, W = [], 28, 28
    for li, (w, b) in enumerate(params):
        cp = C_PAD if li == len(params) - 1 else None
        layer, H, W = _prep_layer(w, b, H, W, tn, cp)
        prepped.append(layer)
    # 4x4 average pool as two tiny matmuls; head padded to OUT_PAD lanes
    pr = np.kron(np.eye(tn, dtype=np.float32),
                 np.full((1, H), 1.0 / H, np.float32))          # (tn, tn*4)
    pc_core = np.kron(np.full((W, 1), 1.0 / W, np.float32),
                      np.eye(C_PAD, dtype=np.float32))          # (4*C_PAD, C_PAD)
    pc = np.zeros((W * C_PAD, OUT_PAD), np.float32)
    pc[:, :C_PAD] = pc_core
    return (tuple(prepped),
            jnp.asarray(pr, jnp.bfloat16),
            jnp.asarray(pc, jnp.bfloat16))


# ----------------------------------- params -----------------------------------

def init_params(key):
    """Deterministic Conv2d params, PyTorch OIHW shapes + per-channel bias."""
    shapes = [(16, 1, 3, 3), (16, 16, 3, 3), (10, 16, 3, 3)]
    params = []
    for i, s in enumerate(shapes):
        kw, kb = jax.random.split(jax.random.fold_in(key, i))
        fan_in = s[1] * s[2] * s[3]
        bound = 1.0 / float(np.sqrt(fan_in))
        w = jax.random.uniform(kw, s, jnp.float32, -bound, bound)
        b = jax.random.uniform(kb, (s[0],), jnp.float32, -bound, bound)
        params.append((w, b))
    return params


def reference_forward(x, params):
    """Pure-JAX reference (mirrors the PyTorch forward, NCHW)."""
    N = x.shape[0]
    h = x.reshape(N, 1, 28, 28)
    for w, b in params:
        h = jax.lax.conv_general_dilated(
            h, w, window_strides=(2, 2), padding=((1, 1), (1, 1)),
            dimension_numbers=('NCHW', 'OIHW', 'NCHW'))
        h = jax.nn.relu(h + b[None, :, None, None])
    return jnp.mean(h, axis=(2, 3))                    # avg_pool2d(4) on 4x4 map


# ------------------------------------ main -------------------------------------

if __name__ == "__main__":
    key = jax.random.PRNGKey(0)
    kx, kp = jax.random.split(key)
    N = 16                                             # 2 grid steps of TILE_N=8
    x = jax.random.normal(kx, (N, 784), dtype=jnp.float32)
    params = init_params(kp)

    prepped, pr, pc = prepare_params(params)           # weight re-layout, once
    fwd = jax.jit(mnist_cnn_forward)                   # single fused kernel

    out = jax.block_until_ready(fwd(x, prepped, pr, pc))
    assert out.shape == (N, 10), out.shape

    ref = jax.block_until_ready(reference_forward(x, params))
    err = float(jnp.max(jnp.abs(out - ref)))
    assert err < 3e-2, f"max abs err {err}"

    print("KERNEL_OK")
</pallas_src>

<mosaic_0001>
module attributes {stable_mosaic.version = 11 : i64} {
  func.func @_mnist_cnn_kernel(%arg0: i32, %arg1: memref<224x28xf32, #tpu.memory_space<vmem>>, %arg2: memref<336x224xbf16, #tpu.memory_space<vmem>>, %arg3: memref<3x28x224xbf16, #tpu.memory_space<vmem>>, %arg4: memref<1x224xf32, #tpu.memory_space<vmem>>, %arg5: memref<168x112xbf16, #tpu.memory_space<vmem>>, %arg6: memref<3x224x112xbf16, #tpu.memory_space<vmem>>, %arg7: memref<1x112xf32, #tpu.memory_space<vmem>>, %arg8: memref<96x56xbf16, #tpu.memory_space<vmem>>, %arg9: memref<3x112x128xbf16, #tpu.memory_space<vmem>>, %arg10: memref<1x128xf32, #tpu.memory_space<vmem>>, %arg11: memref<8x32xbf16, #tpu.memory_space<vmem>>, %arg12: memref<128x128xbf16, #tpu.memory_space<vmem>>, %arg13: memref<8x128xf32, #tpu.memory_space<vmem>>) attributes {dimension_semantics = [#tpu.dimension_semantics<parallel>], iteration_bounds = array<i64: 2>, scalar_prefetch = 0 : i64, scratch_operands = 0 : i64, tpu.core_type = #tpu.core_type<tc>, window_params = [{transform_indices = @transform_0, window_bounds = array<i64: 224, 28>}, {pipeline_mode = #tpu.pipeline_mode<synchronous>, transform_indices = @transform_1, window_bounds = array<i64: 336, 224>}, {pipeline_mode = #tpu.pipeline_mode<synchronous>, transform_indices = @transform_2, window_bounds = array<i64: 3, 28, 224>}, {pipeline_mode = #tpu.pipeline_mode<synchronous>, transform_indices = @transform_3, window_bounds = array<i64: 1, 224>}, {pipeline_mode = #tpu.pipeline_mode<synchronous>, transform_indices = @transform_4, window_bounds = array<i64: 168, 112>}, {pipeline_mode = #tpu.pipeline_mode<synchronous>, transform_indices = @transform_5, window_bounds = array<i64: 3, 224, 112>}, {pipeline_mode = #tpu.pipeline_mode<synchronous>, transform_indices = @transform_6, window_bounds = array<i64: 1, 112>}, {pipeline_mode = #tpu.pipeline_mode<synchronous>, transform_indices = @transform_7, window_bounds = array<i64: 96, 56>}, {pipeline_mode = #tpu.pipeline_mode<synchronous>, transform_indices = @transform_8, window_bounds = array<i64: 3, 112, 128>}, {pipeline_mode = #tpu.pipeline_mode<synchronous>, transform_indices = @transform_9, window_bounds = array<i64: 1, 128>}, {pipeline_mode = #tpu.pipeline_mode<synchronous>, transform_indices = @transform_10, window_bounds = array<i64: 8, 32>}, {pipeline_mode = #tpu.pipeline_mode<synchronous>, transform_indices = @transform_11, window_bounds = array<i64: 128, 128>}, {transform_indices = @transform_12, window_bounds = array<i64: 8, 128>}]} {
    %c0 = arith.constant 0 : index
    %c0_0 = arith.constant 0 : index
    %0 = vector.load %arg1[%c0, %c0_0] : memref<224x28xf32, #tpu.memory_space<vmem>>, vector<224x28xf32>
    %1 = arith.truncf %0 : vector<224x28xf32> to vector<224x28xbf16>
    %c0_1 = arith.constant 0 : index
    %c0_2 = arith.constant 0 : index
    %2 = vector.load %arg2[%c0_1, %c0_2] : memref<336x224xbf16, #tpu.memory_space<vmem>>, vector<336x224xbf16>
    %cst = arith.constant dense<0.000000e+00> : vector<336x28xf32>
    %3 = tpu.matmul %2, %1, %cst {dimension_numbers = #tpu.dot_dimension_numbers<[1], [0], [0], [1], [0, 0, 1, 1], [], []>} : vector<336x224xbf16>, vector<224x28xbf16>, vector<336x28xf32> -> vector<336x28xf32>
    %4 = arith.truncf %3 : vector<336x28xf32> to vector<336x28xbf16>
    %5 = vector.extract_strided_slice %4 {offsets = [0, 0], sizes = [112, 28], strides = [1, 1]} : vector<336x28xbf16> to vector<112x28xbf16>
    %c0_3 = arith.constant 0 : index
    %c0_4 = arith.constant 0 : index
    %c0_5 = arith.constant 0 : index
    %6 = vector.load %arg3[%c0_3, %c0_4, %c0_5] : memref<3x28x224xbf16, #tpu.memory_space<vmem>>, vector<1x28x224xbf16>
    %7 = vector.shape_cast %6 : vector<1x28x224xbf16> to vector<28x224xbf16>
    %cst_6 = arith.constant dense<0.000000e+00> : vector<112x224xf32>
    %8 = tpu.matmul %5, %7, %cst_6 {dimension_numbers = #tpu.dot_dimension_numbers<[1], [0], [0], [1], [0, 0, 1, 1], [], []>} : vector<112x28xbf16>, vector<28x224xbf16>, vector<112x224xf32> -> vector<112x224xf32>
    %9 = vector.extract_strided_slice %4 {offsets = [112, 0], sizes = [112, 28], strides = [1, 1]} : vector<336x28xbf16> to vector<112x28xbf16>
    %c1 = arith.constant 1 : index
    %c0_7 = arith.constant 0 : index
    %c0_8 = arith.constant 0 : index
    %10 = vector.load %arg3[%c1, %c0_7, %c0_8] : memref<3x28x224xbf16, #tpu.memory_space<vmem>>, vector<1x28x224xbf16>
    %11 = vector.shape_cast %10 : vector<1x28x224xbf16> to vector<28x224xbf16>
    %cst_9 = arith.constant dense<0.000000e+00> : vector<112x224xf32>
    %12 = tpu.matmul %9, %11, %cst_9 {dimension_numbers = #tpu.dot_dimension_numbers<[1], [0], [0], [1], [0, 0, 1, 1], [], []>} : vector<112x28xbf16>, vector<28x224xbf16>, vector<112x224xf32> -> vector<112x224xf32>
    %13 = arith.addf %8, %12 : vector<112x224xf32>
    %14 = vector.extract_strided_slice %4 {offsets = [224, 0], sizes = [112, 28], strides = [1, 1]} : vector<336x28xbf16> to vector<112x28xbf16>
    %c2 = arith.constant 2 : index
    %c0_10 = arith.constant 0 : index
    %c0_11 = arith.constant 0 : index
    %15 = vector.load %arg3[%c2, %c0_10, %c0_11] : memref<3x28x224xbf16, #tpu.memory_space<vmem>>, vector<1x28x224xbf16>
    %16 = vector.shape_cast %15 : vector<1x28x224xbf16> to vector<28x224xbf16>
    %cst_12 = arith.constant dense<0.000000e+00> : vector<112x224xf32>
    %17 = tpu.matmul %14, %16, %cst_12 {dimension_numbers = #tpu.dot_dimension_numbers<[1], [0], [0], [1], [0, 0, 1, 1], [], []>} : vector<112x28xbf16>, vector<28x224xbf16>, vector<112x224xf32> -> vector<112x224xf32>
    %18 = arith.addf %13, %17 : vector<112x224xf32>
    %c0_13 = arith.constant 0 : index
    %c0_14 = arith.constant 0 : index
    %19 = vector.load %arg4[%c0_13, %c0_14] : memref<1x224xf32, #tpu.memory_space<vmem>>, vector<1x224xf32>
    %20 = vector.broadcast %19 : vector<1x224xf32> to vector<112x224xf32>
    %21 = arith.addf %18, %20 : vector<112x224xf32>
    %cst_15 = arith.constant 0.000000e+00 : f32
    %22 = vector.broadcast %cst_15 : f32 to vector<112x224xf32>
    %23 = arith.maximumf %21, %22 : vector<112x224xf32>
    %24 = arith.truncf %23 : vector<112x224xf32> to vector<112x224xbf16>
    %c0_16 = arith.constant 0 : index
    %c0_17 = arith.constant 0 : index
    %25 = vector.load %arg5[%c0_16, %c0_17] : memref<168x112xbf16, #tpu.memory_space<vmem>>, vector<168x112xbf16>
    %cst_18 = arith.constant dense<0.000000e+00> : vector<168x224xf32>
    %26 = tpu.matmul %25, %24, %cst_18 {dimension_numbers = #tpu.dot_dimension_numbers<[1], [0], [0], [1], [0, 0, 1, 1], [], []>} : vector<168x112xbf16>, vector<112x224xbf16>, vector<168x224xf32> -> vector<168x224xf32>
    %27 = arith.truncf %26 : vector<168x224xf32> to vector<168x224xbf16>
    %28 = vector.extract_strided_slice %27 {offsets = [0, 0], sizes = [56, 224], strides = [1, 1]} : vector<168x224xbf16> to vector<56x224xbf16>
    %c0_19 = arith.constant 0 : index
    %c0_20 = arith.constant 0 : index
    %c0_21 = arith.constant 0 : index
    %29 = vector.load %arg6[%c0_19, %c0_20, %c0_21] : memref<3x224x112xbf16, #tpu.memory_space<vmem>>, vector<1x224x112xbf16>
    %30 = vector.shape_cast %29 : vector<1x224x112xbf16> to vector<224x112xbf16>
    %cst_22 = arith.constant dense<0.000000e+00> : vector<56x112xf32>
    %31 = tpu.matmul %28, %30, %cst_22 {dimension_numbers = #tpu.dot_dimension_numbers<[1], [0], [0], [1], [0, 0, 1, 1], [], []>} : vector<56x224xbf16>, vector<224x112xbf16>, vector<56x112xf32> -> vector<56x112xf32>
    %32 = vector.extract_strided_slice %27 {offsets = [56, 0], sizes = [56, 224], strides = [1, 1]} : vector<168x224xbf16> to vector<56x224xbf16>
    %c1_23 = arith.constant 1 : index
    %c0_24 = arith.constant 0 : index
    %c0_25 = arith.constant 0 : index
    %33 = vector.load %arg6[%c1_23, %c0_24, %c0_25] : memref<3x224x112xbf16, #tpu.memory_space<vmem>>, vector<1x224x112xbf16>
    %34 = vector.shape_cast %33 : vector<1x224x112xbf16> to vector<224x112xbf16>
    %cst_26 = arith.constant dense<0.000000e+00> : vector<56x112xf32>
    %35 = tpu.matmul %32, %34, %cst_26 {dimension_numbers = #tpu.dot_dimension_numbers<[1], [0], [0], [1], [0, 0, 1, 1], [], []>} : vector<56x224xbf16>, vector<224x112xbf16>, vector<56x112xf32> -> vector<56x112xf32>
    %36 = arith.addf %31, %35 : vector<56x112xf32>
    %37 = vector.extract_strided_slice %27 {offsets = [112, 0], sizes = [56, 224], strides = [1, 1]} : vector<168x224xbf16> to vector<56x224xbf16>
    %c2_27 = arith.constant 2 : index
    %c0_28 = arith.constant 0 : index
    %c0_29 = arith.constant 0 : index
    %38 = vector.load %arg6[%c2_27, %c0_28, %c0_29] : memref<3x224x112xbf16, #tpu.memory_space<vmem>>, vector<1x224x112xbf16>
    %39 = vector.shape_cast %38 : vector<1x224x112xbf16> to vector<224x112xbf16>
    %cst_30 = arith.constant dense<0.000000e+00> : vector<56x112xf32>
    %40 = tpu.matmul %37, %39, %cst_30 {dimension_numbers = #tpu.dot_dimension_numbers<[1], [0], [0], [1], [0, 0, 1, 1], [], []>} : vector<56x224xbf16>, vector<224x112xbf16>, vector<56x112xf32> -> vector<56x112xf32>
    %41 = arith.addf %36, %40 : vector<56x112xf32>
    %c0_31 = arith.constant 0 : index
    %c0_32 = arith.constant 0 : index
    %42 = vector.load %arg7[%c0_31, %c0_32] : memref<1x112xf32, #tpu.memory_space<vmem>>, vector<1x112xf32>
    %43 = vector.broadcast %42 : vector<1x112xf32> to vector<56x112xf32>
    %44 = arith.addf %41, %43 : vector<56x112xf32>
    %cst_33 = arith.constant 0.000000e+00 : f32
    %45 = vector.broadcast %cst_33 : f32 to vector<56x112xf32>
    %46 = arith.maximumf %44, %45 : vector<56x112xf32>
    %47 = arith.truncf %46 : vector<56x112xf32> to vector<56x112xbf16>
    %c0_34 = arith.constant 0 : index
    %c0_35 = arith.constant 0 : index
    %48 = vector.load %arg8[%c0_34, %c0_35] : memref<96x56xbf16, #tpu.memory_space<vmem>>, vector<96x56xbf16>
    %cst_36 = arith.constant dense<0.000000e+00> : vector<96x112xf32>
    %49 = tpu.matmul %48, %47, %cst_36 {dimension_numbers = #tpu.dot_dimension_numbers<[1], [0], [0], [1], [0, 0, 1, 1], [], []>} : vector<96x56xbf16>, vector<56x112xbf16>, vector<96x112xf32> -> vector<96x112xf32>
    %50 = arith.truncf %49 : vector<96x112xf32> to vector<96x112xbf16>
    %51 = vector.extract_strided_slice %50 {offsets = [0, 0], sizes = [32, 112], strides = [1, 1]} : vector<96x112xbf16> to vector<32x112xbf16>
    %c0_37 = arith.constant 0 : index
    %c0_38 = arith.constant 0 : index
    %c0_39 = arith.constant 0 : index
    %52 = vector.load %arg9[%c0_37, %c0_38, %c0_39] : memref<3x112x128xbf16, #tpu.memory_space<vmem>>, vector<1x112x128xbf16>
    %53 = vector.shape_cast %52 : vector<1x112x128xbf16> to vector<112x128xbf16>
    %cst_40 = arith.constant dense<0.000000e+00> : vector<32x128xf32>
    %54 = tpu.matmul %51, %53, %cst_40 {dimension_numbers = #tpu.dot_dimension_numbers<[1], [0], [0], [1], [0, 0, 1, 1], [], []>} : vector<32x112xbf16>, vector<112x128xbf16>, vector<32x128xf32> -> vector<32x128xf32>
    %55 = vector.extract_strided_slice %50 {offsets = [32, 0], sizes = [32, 112], strides = [1, 1]} : vector<96x112xbf16> to vector<32x112xbf16>
    %c1_41 = arith.constant 1 : index
    %c0_42 = arith.constant 0 : index
    %c0_43 = arith.constant 0 : index
    %56 = vector.load %arg9[%c1_41, %c0_42, %c0_43] : memref<3x112x128xbf16, #tpu.memory_space<vmem>>, vector<1x112x128xbf16>
    %57 = vector.shape_cast %56 : vector<1x112x128xbf16> to vector<112x128xbf16>
    %cst_44 = arith.constant dense<0.000000e+00> : vector<32x128xf32>
    %58 = tpu.matmul %55, %57, %cst_44 {dimension_numbers = #tpu.dot_dimension_numbers<[1], [0], [0], [1], [0, 0, 1, 1], [], []>} : vector<32x112xbf16>, vector<112x128xbf16>, vector<32x128xf32> -> vector<32x128xf32>
    %59 = arith.addf %54, %58 : vector<32x128xf32>
    %60 = vector.extract_strided_slice %50 {offsets = [64, 0], sizes = [32, 112], strides = [1, 1]} : vector<96x112xbf16> to vector<32x112xbf16>
    %c2_45 = arith.constant 2 : index
    %c0_46 = arith.constant 0 : index
    %c0_47 = arith.constant 0 : index
    %61 = vector.load %arg9[%c2_45, %c0_46, %c0_47] : memref<3x112x128xbf16, #tpu.memory_space<vmem>>, vector<1x112x128xbf16>
    %62 = vector.shape_cast %61 : vector<1x112x128xbf16> to vector<112x128xbf16>
    %cst_48 = arith.constant dense<0.000000e+00> : vector<32x128xf32>
    %63 = tpu.matmul %60, %62, %cst_48 {dimension_numbers = #tpu.dot_dimension_numbers<[1], [0], [0], [1], [0, 0, 1, 1], [], []>} : vector<32x112xbf16>, vector<112x128xbf16>, vector<32x128xf32> -> vector<32x128xf32>
    %64 = arith.addf %59, %63 : vector<32x128xf32>
    %c0_49 = arith.constant 0 : index
    %c0_50 = arith.constant 0 : index
    %65 = vector.load %arg10[%c0_49, %c0_50] : memref<1x128xf32, #tpu.memory_space<vmem>>, vector<1x128xf32>
    %66 = vector.broadcast %65 : vector<1x128xf32> to vector<32x128xf32>
    %67 = arith.addf %64, %66 : vector<32x128xf32>
    %cst_51 = arith.constant 0.000000e+00 : f32
    %68 = vector.broadcast %cst_51 : f32 to vector<32x128xf32>
    %69 = arith.maximumf %67, %68 : vector<32x128xf32>
    %70 = arith.truncf %69 : vector<32x128xf32> to vector<32x128xbf16>
    %c0_52 = arith.constant 0 : index
    %c0_53 = arith.constant 0 : index
    %71 = vector.load %arg11[%c0_52, %c0_53] : memref<8x32xbf16, #tpu.memory_space<vmem>>, vector<8x32xbf16>
    %cst_54 = arith.constant dense<0.000000e+00> : vector<8x128xf32>
    %72 = tpu.matmul %71, %70, %cst_54 {dimension_numbers = #tpu.dot_dimension_numbers<[1], [0], [0], [1], [0, 0, 1, 1], [], []>} : vector<8x32xbf16>, vector<32x128xbf16>, vector<8x128xf32> -> vector<8x128xf32>
    %73 = arith.truncf %72 : vector<8x128xf32> to vector<8x128xbf16>
    %c0_55 = arith.constant 0 : index
    %c0_56 = arith.constant 0 : index
    %74 = vector.load %arg12[%c0_55, %c0_56] : memref<128x128xbf16, #tpu.memory_space<vmem>>, vector<128x128xbf16>
    %cst_57 = arith.constant dense<0.000000e+00> : vector<8x128xf32>
    %75 = tpu.matmul %73, %74, %cst_57 {dimension_numbers = #tpu.dot_dimension_numbers<[1], [0], [0], [1], [0, 0, 1, 1], [], []>} : vector<8x128xbf16>, vector<128x128xbf16>, vector<8x128xf32> -> vector<8x128xf32>
    %c0_58 = arith.constant 0 : index
    %c0_59 = arith.constant 0 : index
    %76 = vector.load %arg13[%c0_58, %c0_59] : memref<8x128xf32, #tpu.memory_space<vmem>>, vector<8x128xf32>
    tpu.vector_store %arg13[%c0_58, %c0_59], %75 {strides = array<i32>} : memref<8x128xf32, #tpu.memory_space<vmem>>, vector<8x128xf32>,
    return
  }
  func.func @transform_0(%arg0: i32) -> (i32, i32) {
    %c0_i32 = arith.constant 0 : i32
    %c0_i32_0 = arith.constant 0 : i32
    return %arg0, %c0_i32 : i32, i32
  }
  func.func @transform_1(%arg0: i32) -> (i32, i32) {
    %c0_i32 = arith.constant 0 : i32
    %c0_i32_0 = arith.constant 0 : i32
    %c0_i32_1 = arith.constant 0 : i32
    return %c0_i32, %c0_i32_0 : i32, i32
  }
  func.func @transform_2(%arg0: i32) -> (i32, i32, i32) {
    %c0_i32 = arith.constant 0 : i32
    %c0_i32_0 = arith.constant 0 : i32
    %c0_i32_1 = arith.constant 0 : i32
    %c0_i32_2 = arith.constant 0 : i32
    return %c0_i32, %c0_i32_0, %c0_i32_1 : i32, i32, i32
  }
  func.func @transform_3(%arg0: i32) -> (i32, i32) {
    %c0_i32 = arith.constant 0 : i32
    %c0_i32_0 = arith.constant 0 : i32
    %c0_i32_1 = arith.constant 0 : i32
    return %c0_i32, %c0_i32_0 : i32, i32
  }
  func.func @transform_4(%arg0: i32) -> (i32, i32) {
    %c0_i32 = arith.constant 0 : i32
    %c0_i32_0 = arith.constant 0 : i32
    %c0_i32_1 = arith.constant 0 : i32
    return %c0_i32, %c0_i32_0 : i32, i32
  }
  func.func @transform_5(%arg0: i32) -> (i32, i32, i32) {
    %c0_i32 = arith.constant 0 : i32
    %c0_i32_0 = arith.constant 0 : i32
    %c0_i32_1 = arith.constant 0 : i32
    %c0_i32_2 = arith.constant 0 : i32
    return %c0_i32, %c0_i32_0, %c0_i32_1 : i32, i32, i32
  }
  func.func @transform_6(%arg0: i32) -> (i32, i32) {
    %c0_i32 = arith.constant 0 : i32
    %c0_i32_0 = arith.constant 0 : i32
    %c0_i32_1 = arith.constant 0 : i32
    return %c0_i32, %c0_i32_0 : i32, i32
  }
  func.func @transform_7(%arg0: i32) -> (i32, i32) {
    %c0_i32 = arith.constant 0 : i32
    %c0_i32_0 = arith.constant 0 : i32
    %c0_i32_1 = arith.constant 0 : i32
    return %c0_i32, %c0_i32_0 : i32, i32
  }
  func.func @transform_8(%arg0: i32) -> (i32, i32, i32) {
    %c0_i32 = arith.constant 0 : i32
    %c0_i32_0 = arith.constant 0 : i32
    %c0_i32_1 = arith.constant 0 : i32
    %c0_i32_2 = arith.constant 0 : i32
    return %c0_i32, %c0_i32_0, %c0_i32_1 : i32, i32, i32
  }
  func.func @transform_9(%arg0: i32) -> (i32, i32) {
    %c0_i32 = arith.constant 0 : i32
    %c0_i32_0 = arith.constant 0 : i32
    %c0_i32_1 = arith.constant 0 : i32
    return %c0_i32, %c0_i32_0 : i32, i32
  }
  func.func @transform_10(%arg0: i32) -> (i32, i32) {
    %c0_i32 = arith.constant 0 : i32
    %c0_i32_0 = arith.constant 0 : i32
    %c0_i32_1 = arith.constant 0 : i32
    return %c0_i32, %c0_i32_0 : i32, i32
  }
  func.func @transform_11(%arg0: i32) -> (i32, i32) {
    %c0_i32 = arith.constant 0 : i32
    %c0_i32_0 = arith.constant 0 : i32
    %c0_i32_1 = arith.constant 0 : i32
    return %c0_i32, %c0_i32_0 : i32, i32
  }
  func.func @transform_12(%arg0: i32) -> (i32, i32) {
    %c0_i32 = arith.constant 0 : i32
    %c0_i32_0 = arith.constant 0 : i32
    return %arg0, %c0_i32 : i32, i32
  }
}

</mosaic_0001>

<llo_original>
// kernel: mnist_cnn_forward.1
$region0: #{mnist_cnn_forward.1}
  #allocation0 [shape = 'u32[]', space=smem, size = 0x4, offset = 0x4, fixed_abs, tag = 'smem constant byte address 0x4 - core index']
  #allocation1 [shape = 'u32[144,128]{1,0:T(1,128)}', space=vmem, size = 0x12000, scoped, tag = 'internal scratch']
  %s0 = inlined_call_operand.vmem [shape: f32[448,28], index: 0, kind: input, shape index: {}]
  %s1 = inlined_call_operand.vmem [shape: bf16[336,224], index: 1, kind: input, shape index: {}]
  %s2 = inlined_call_operand.vmem [shape: bf16[3,28,224], index: 2, kind: input, shape index: {}]
  %s3 = inlined_call_operand.vmem [shape: f32[1,224], index: 3, kind: input, shape index: {}]
  %s4 = inlined_call_operand.hbm [shape: bf16[168,112], index: 4, kind: input, shape index: {}]
  %s5 = inlined_call_operand.hbm [shape: bf16[3,224,112], index: 5, kind: input, shape index: {}]
  %s6 = inlined_call_operand.hbm [shape: f32[1,112], index: 6, kind: input, shape index: {}]
  %s7 = inlined_call_operand.vmem [shape: bf16[96,56], index: 7, kind: input, shape index: {}]
  %s8 = inlined_call_operand.vmem [shape: bf16[3,112,128], index: 8, kind: input, shape index: {}]
  %s9 = inlined_call_operand.hbm [shape: f32[1,128], index: 9, kind: input, shape index: {}]
  %s10 = inlined_call_operand.vmem [shape: bf16[8,32], index: 10, kind: input, shape index: {}]
  %s11 = inlined_call_operand.vmem [shape: bf16[128,128], index: 11, kind: input, shape index: {}]
  %s12 = inlined_call_operand.hbm [shape: f32[16,128], index: 12, kind: output, shape index: {}]
  %s13 = sld [smem:[#allocation0]]
  $region97: #{mnist_cnn_forward.1} parent=0
    _
  %s15 = ssub.s32 1, %s13
  %s16 = scalar_select 0, %s15, %s13
  $region1: #{mnist_cnn_forward.1} parent=0
    #allocation2 [shape = 'u8[43008]{0}', space=vmem, size = 0xa800, scoped, tag = 'input window, operand 4, single buffered']
    #allocation3 [shape = 's32[2]{0}', space=sflag, size = 0x8, scoped, tag = 'scoped memory for mnist_cnn_forward.1']
    #allocation4 [shape = 's32[2]{0}', space=sflag, size = 0x8, scoped, tag = 'scoped memory for mnist_cnn_forward.1']
    #allocation5 [shape = 'u8[172032]{0}', space=vmem, size = 0x2a000, scoped, tag = 'input window, operand 5, single buffered']
    #allocation6 [shape = 's32[1]{0}', space=sflag, size = 0x4, scoped, tag = 'scoped memory for mnist_cnn_forward.1']
    #allocation7 [shape = 'u8[512]{0}', space=vmem, size = 0x400, scoped, tag = 'input window, operand 6, single buffered']
    #allocation8 [shape = 'u8[512]{0}', space=vmem, size = 0x400, scoped, tag = 'input window, operand 9, single buffered']
    #allocation9 [shape = 's32[1]{0}', space=sflag, size = 0x4, scoped, tag = 'scoped memory for mnist_cnn_forward.1']
    #allocation10 [shape = 'u8[8192]{0}', space=vmem, size = 0x2000, scoped, tag = 'output window, operand 0']
    %17 = vsyncpa [#allocation3], 0
    %18 = vsyncpa [#allocation6], 0
    %19 = vsyncpa [#allocation9], 0
    %20 = vsyncpa [#allocation4], 0
    %s21 = scalar_lea.sflag [#allocation4], 1
    %22 = vsyncpa %s21, 0
    loop: start=0, step=1, limit=4
    $region2: #{mnist_cnn_forward.1} parent=1 // loop_pre_header
      _
    $region3: #{mnist_cnn_forward.1} parent=1 // loop_header
      %s24 = sphi 0, %s28
      %p25 = scmp.ge.s32.totalorder %s24, 4
      %s34 = sphi 0, %s36
      %s37 = sphi 0, %s34
      %s38 = sphi 0, %s37
      %s54 = sphi 0, %s38
      %s58 = sphi 0, %s58
      %s60 = sphi 0, %s58
      %s61 = sphi 0, %s60
      %s75 = sphi 0, %s61
      %s79 = sphi 0, %s79
      %s81 = sphi 0, %s79
      %s82 = sphi 0, %s81
      %s96 = sphi 0, %s82
      %s100 = sphi 0, %s100
      %s102 = sphi 0, %s100
      %s103 = sphi 0, %s102
      %s117 = sphi 0, %s103
      %s121 = sphi 0, %s121
      %s123 = sphi 0, %s121
      %s124 = sphi 0, %s123
      %s138 = sphi 0, %s124
      %s142 = sphi 0, %s142
      %s144 = sphi 0, %s142
      %s145 = sphi 0, %s144
      %s159 = sphi 0, %s145
      %s163 = sphi 0, %s163
      %s165 = sphi 0, %s163
      %s166 = sphi 0, %s165
      %s180 = sphi 0, %s166
      %s184 = sphi 0, %s184
      %s186 = sphi 0, %s184
      %s187 = sphi 0, %s186
      %s201 = sphi 0, %s187
      %s205 = sphi 0, %s205
      %s207 = sphi 0, %s205
      %s208 = sphi 0, %s207
      %s222 = sphi 0, %s208
      %s226 = sphi 0, %s226
      %s228 = sphi 0, %s226
      %s229 = sphi 0, %s228
      %s243 = sphi 0, %s229
      %s247 = sphi 0, %s247
      %s249 = sphi 0, %s247
      %s250 = sphi 0, %s249
      %s264 = sphi 0, %s250
      %s268 = sphi 0, %s268
      %s270 = sphi 0, %s268
      %s271 = sphi 0, %s270
      %s285 = sphi 0, %s271
      %s291 = sphi 0, %s293
      %s294 = sphi 0, %s291
      %s295 = sphi 0, %s294
      %s311 = sphi 0, %s295
    $region4: #{mnist_cnn_forward.1} parent=1 // loop_header_branch
      %27 = sbr.rel (%p25) target = $region8
    $region5: #{mnist_cnn_forward.1} parent=1 // loop_body
      %s29 = ssub.s32 %s24, 1
      %s30 = ssub.s32 %s24, 2
      %s31 = sadd.s32 %s24, 1
      %s32 = ssub.s32 %s24, %s31
      %p33 = scmp.eq.s32.totalorder %s32, 0
      %s35 = sadd.s32 %s34, 1
      %s36 = scalar_select %p33, %s34, %s35
      %p39 = pneg %p33
      %p40 = scmp.eq.s32.totalorder %s24, 1
      %p41 = por %p39, %p40
      %p42 = scmp.ne.s32.totalorder %s34, %s37
      %p43 = scmp.eq.s32.totalorder %s24, 0
      %p44 = por %p42, %p43
      %p45 = scmp.ne.s32.totalorder %s34, %s37
      %p46 = scmp.eq.s32.totalorder %s29, 1
      %p47 = por %p45, %p46
      %p48 = scmp.ne.s32.totalorder %s37, %s38
      %p49 = scmp.eq.s32.totalorder %s29, 0
      %p50 = por %p48, %p49
      %p51 = scmp.ne.s32.totalorder %s37, %s38
      %p52 = scmp.eq.s32.totalorder %s30, 1
      %p53 = por %p51, %p52
      %p55 = scmp.ne.s32.totalorder %s38, %s54
      %p56 = scmp.eq.s32.totalorder %s30, 0
      %p57 = por %p55, %p56
      %s59 = sadd.s32 %s58, 1
      %p62 = scmp.eq.s32.totalorder %s24, 1
      %p63 = scmp.ne.s32.totalorder %s58, %s60
      %p64 = scmp.eq.s32.totalorder %s24, 0
      %p65 = por %p63, %p64
      %p66 = scmp.ne.s32.totalorder %s58, %s60
      %p67 = scmp.eq.s32.totalorder %s29, 1
      %p68 = por %p66, %p67
      %p69 = scmp.ne.s32.totalorder %s60, %s61
      %p70 = scmp.eq.s32.totalorder %s29, 0
      %p71 = por %p69, %p70
      %p72 = scmp.ne.s32.totalorder %s60, %s61
      %p73 = scmp.eq.s32.totalorder %s30, 1
      %p74 = por %p72, %p73
      %p76 = scmp.ne.s32.totalorder %s61, %s75
      %p77 = scmp.eq.s32.totalorder %s30, 0
      %p78 = por %p76, %p77
      %s80 = sadd.s32 %s79, 1
      %p83 = scmp.eq.s32.totalorder %s24, 1
      %p84 = scmp.ne.s32.totalorder %s79, %s81
      %p85 = scmp.eq.s32.totalorder %s24, 0
      %p86 = por %p84, %p85
      %p87 = scmp.ne.s32.totalorder %s79, %s81
      %p88 = scmp.eq.s32.totalorder %s29, 1
      %p89 = por %p87, %p88
      %p90 = scmp.ne.s32.totalorder %s81, %s82
      %p91 = scmp.eq.s32.totalorder %s29, 0
      %p92 = por %p90, %p91
      %p93 = scmp.ne.s32.totalorder %s81, %s82
      %p94 = scmp.eq.s32.totalorder %s30, 1
      %p95 = por %p93, %p94
      %p97 = scmp.ne.s32.totalorder %s82, %s96
      %p98 = scmp.eq.s32.totalorder %s30, 0
      %p99 = por %p97, %p98
      %s101 = sadd.s32 %s100, 1
      %p104 = scmp.eq.s32.totalorder %s24, 1
      %p105 = scmp.ne.s32.totalorder %s100, %s102
      %p106 = scmp.eq.s32.totalorder %s24, 0
      %p107 = por %p105, %p106
      %p108 = scmp.ne.s32.totalorder %s100, %s102
      %p109 = scmp.eq.s32.totalorder %s29, 1
      %p110 = por %p108, %p109
      %p111 = scmp.ne.s32.totalorder %s102, %s103
      %p112 = scmp.eq.s32.totalorder %s29, 0
      %p113 = por %p111, %p112
      %p114 = scmp.ne.s32.totalorder %s102, %s103
      %p115 = scmp.eq.s32.totalorder %s30, 1
      %p116 = por %p114, %p115
      %p118 = scmp.ne.s32.totalorder %s103, %s117
      %p119 = scmp.eq.s32.totalorder %s30, 0
      %p120 = por %p118, %p119
      %s122 = sadd.s32 %s121, 1
      %p125 = scmp.eq.s32.totalorder %s24, 1
      %p126 = scmp.ne.s32.totalorder %s121, %s123
      %p127 = scmp.eq.s32.totalorder %s24, 0
      %p128 = por %p126, %p127
      %p129 = scmp.ne.s32.totalorder %s121, %s123
      %p130 = scmp.eq.s32.totalorder %s29, 1
      %p131 = por %p129, %p130
      %p132 = scmp.ne.s32.totalorder %s123, %s124
      %p133 = scmp.eq.s32.totalorder %s29, 0
      %p134 = por %p132, %p133
      %p135 = scmp.ne.s32.totalorder %s123, %s124
      %p136 = scmp.eq.s32.totalorder %s30, 1
      %p137 = por %p135, %p136
      %p139 = scmp.ne.s32.totalorder %s124, %s138
      %p140 = scmp.eq.s32.totalorder %s30, 0
      %p141 = por %p139, %p140
      %s143 = sadd.s32 %s142, 1
      %p146 = scmp.eq.s32.totalorder %s24, 1
      %p147 = scmp.ne.s32.totalorder %s142, %s144
      %p148 = scmp.eq.s32.totalorder %s24, 0
      %p149 = por %p147, %p148
      %p150 = scmp.ne.s32.totalorder %s142, %s144
      %p151 = scmp.eq.s32.totalorder %s29, 1
      %p152 = por %p150, %p151
      %p153 = scmp.ne.s32.totalorder %s144, %s145
      %p154 = scmp.eq.s32.totalorder %s29, 0
      %p155 = por %p153, %p154
      %p156 = scmp.ne.s32.totalorder %s144, %s145
      %p157 = scmp.eq.s32.totalorder %s30, 1
      %p158 = por %p156, %p157
      %p160 = scmp.ne.s32.totalorder %s145, %s159
      %p161 = scmp.eq.s32.totalorder %s30, 0
      %p162 = por %p160, %p161
      %s164 = sadd.s32 %s163, 1
      %p167 = scmp.eq.s32.totalorder %s24, 1
      %p168 = scmp.ne.s32.totalorder %s163, %s165
      %p169 = scmp.eq.s32.totalorder %s24, 0
      %p170 = por %p168, %p169
      %p171 = scmp.ne.s32.totalorder %s163, %s165
      %p172 = scmp.eq.s32.totalorder %s29, 1
      %p173 = por %p171, %p172
      %p174 = scmp.ne.s32.totalorder %s165, %s166
      %p175 = scmp.eq.s32.totalorder %s29, 0
      %p176 = por %p174, %p175
      %p177 = scmp.ne.s32.totalorder %s165, %s166
      %p178 = scmp.eq.s32.totalorder %s30, 1
      %p179 = por %p177, %p178
      %p181 = scmp.ne.s32.totalorder %s166, %s180
      %p182 = scmp.eq.s32.totalorder %s30, 0
      %p183 = por %p181, %p182
      %s185 = sadd.s32 %s184, 1
      %p188 = scmp.eq.s32.totalorder %s24, 1
      %p189 = scmp.ne.s32.totalorder %s184, %s186
      %p190 = scmp.eq.s32.totalorder %s24, 0
      %p191 = por %p189, %p190
      %p192 = scmp.ne.s32.totalorder %s184, %s186
      %p193 = scmp.eq.s32.totalorder %s29, 1
      %p194 = por %p192, %p193
      %p195 = scmp.ne.s32.totalorder %s186, %s187
      %p196 = scmp.eq.s32.totalorder %s29, 0
      %p197 = por %p195, %p196
      %p198 = scmp.ne.s32.totalorder %s186, %s187
      %p199 = scmp.eq.s32.totalorder %s30, 1
      %p200 = por %p198, %p199
      %p202 = scmp.ne.s32.totalorder %s187, %s201
      %p203 = scmp.eq.s32.totalorder %s30, 0
      %p204 = por %p202, %p203
      %s206 = sadd.s32 %s205, 1
      %p209 = scmp.eq.s32.totalorder %s24, 1
      %p210 = scmp.ne.s32.totalorder %s205, %s207
      %p211 = scmp.eq.s32.totalorder %s24, 0
      %p212 = por %p210, %p211
      %p213 = scmp.ne.s32.totalorder %s205, %s207
      %p214 = scmp.eq.s32.totalorder %s29, 1
      %p215 = por %p213, %p214
      %p216 = scmp.ne.s32.totalorder %s207, %s208
      %p217 = scmp.eq.s32.totalorder %s29, 0
      %p218 = por %p216, %p217
      %p219 = scmp.ne.s32.totalorder %s207, %s208
      %p220 = scmp.eq.s32.totalorder %s30, 1
      %p221 = por %p219, %p220
      %p223 = scmp.ne.s32.totalorder %s208, %s222
      %p224 = scmp.eq.s32.totalorder %s30, 0
      %p225 = por %p223, %p224
      %s227 = sadd.s32 %s226, 1
      %p230 = scmp.eq.s32.totalorder %s24, 1
      %p231 = scmp.ne.s32.totalorder %s226, %s228
      %p232 = scmp.eq.s32.totalorder %s24, 0
      %p233 = por %p231, %p232
      %p234 = scmp.ne.s32.totalorder %s226, %s228
      %p235 = scmp.eq.s32.totalorder %s29, 1
      %p236 = por %p234, %p235
      %p237 = scmp.ne.s32.totalorder %s228, %s229
      %p238 = scmp.eq.s32.totalorder %s29, 0
      %p239 = por %p237, %p238
      %p240 = scmp.ne.s32.totalorder %s228, %s229
      %p241 = scmp.eq.s32.totalorder %s30, 1
      %p242 = por %p240, %p241
      %p244 = scmp.ne.s32.totalorder %s229, %s243
      %p245 = scmp.eq.s32.totalorder %s30, 0
      %p246 = por %p244, %p245
      %s248 = sadd.s32 %s247, 1
      %p251 = scmp.eq.s32.totalorder %s24, 1
      %p252 = scmp.ne.s32.totalorder %s247, %s249
      %p253 = scmp.eq.s32.totalorder %s24, 0
      %p254 = por %p252, %p253
      %p255 = scmp.ne.s32.totalorder %s247, %s249
      %p256 = scmp.eq.s32.totalorder %s29, 1
      %p257 = por %p255, %p256
      %p258 = scmp.ne.s32.totalorder %s249, %s250
      %p259 = scmp.eq.s32.totalorder %s29, 0
      %p260 = por %p258, %p259
      %p261 = scmp.ne.s32.totalorder %s249, %s250
      %p262 = scmp.eq.s32.totalorder %s30, 1
      %p263 = por %p261, %p262
      %p265 = scmp.ne.s32.totalorder %s250, %s264
      %p266 = scmp.eq.s32.totalorder %s30, 0
      %p267 = por %p265, %p266
      %s269 = sadd.s32 %s268, 1
      %p272 = scmp.eq.s32.totalorder %s24, 1
      %p273 = scmp.ne.s32.totalorder %s268, %s270
      %p274 = scmp.eq.s32.totalorder %s24, 0
      %p275 = por %p273, %p274
      %p276 = scmp.ne.s32.totalorder %s268, %s270
      %p277 = scmp.eq.s32.totalorder %s29, 1
      %p278 = por %p276, %p277
      %p279 = scmp.ne.s32.totalorder %s270, %s271
      %p280 = scmp.eq.s32.totalorder %s29, 0
      %p281 = por %p279, %p280
      %p282 = scmp.ne.s32.totalorder %s270, %s271
      %p283 = scmp.eq.s32.totalorder %s30, 1
      %p284 = por %p282, %p283
      %p286 = scmp.ne.s32.totalorder %s271, %s285
      %p287 = scmp.eq.s32.totalorder %s30, 0
      %p288 = por %p286, %p287
      %s289 = ssub.s32 %s24, %s31
      %p290 = scmp.eq.s32.totalorder %s289, 0
      %s292 = sadd.s32 %s291, 1
      %s293 = scalar_select %p290, %s291, %s292
      %p296 = pneg %p290
      %p297 = scmp.eq.s32.totalorder %s24, 1
      %p298 = por %p296, %p297
      %p299 = scmp.ne.s32.totalorder %s291, %s294
      %p300 = scmp.eq.s32.totalorder %s24, 0
      %p301 = por %p299, %p300
      %p302 = scmp.ne.s32.totalorder %s291, %s294
      %p303 = scmp.eq.s32.totalorder %s29, 1
      %p304 = por %p302, %p303
      %p305 = scmp.ne.s32.totalorder %s294, %s295
      %p306 = scmp.eq.s32.totalorder %s29, 0
      %p307 = por %p305, %p306
      %p308 = scmp.ne.s32.totalorder %s294, %s295
      %p309 = scmp.eq.s32.totalorder %s30, 1
      %p310 = por %p308, %p309
      %p312 = scmp.ne.s32.totalorder %s295, %s311
      %p313 = scmp.eq.s32.totalorder %s30, 0
      %p314 = por %p312, %p313
      %p315 = scmp.le.s32.totalorder 1, %s24
      %p316 = scmp.lt.s32.totalorder %s24, 3
      %p317 = pnand %p315, %p316
      %p318 = pneg %p317
      // Predicated region
      $region9: #{mnist_cnn_forward.1} parent=5 // pred_check
        _
      $region10: #{mnist_cnn_forward.1} parent=5 // pred_check_branch
        %320 = sbr.rel (%p317) target = $region12
      $region11: #{mnist_cnn_forward.1} parent=5 // pred_region
        %s321 = ssub.s32 %s24, 1
        // Predicated region
        $region13: #{mnist_cnn_forward.1} parent=11 // pred_check
          %p322 = pneg %p71
        $region14: #{mnist_cnn_forward.1} parent=11 // pred_check_branch
          %324 = sbr.rel (%p322) target = $region16
        $region15: #{mnist_cnn_forward.1} parent=11 // pred_region
          _
        $region16: #{mnist_cnn_forward.1} parent=11 // pred_fallthru
          _
        // Predicated region
        $region17: #{mnist_cnn_forward.1} parent=11 // pred_check
          %p325 = pneg %p92
        $region18: #{mnist_cnn_forward.1} parent=11 // pred_check_branch
          %327 = sbr.rel (%p325) target = $region20
        $region19: #{mnist_cnn_forward.1} parent=11 // pred_region
          _
        $region20: #{mnist_cnn_forward.1} parent=11 // pred_fallthru
          _
        // Predicated region
        $region21: #{mnist_cnn_forward.1} parent=11 // pred_check
          %p328 = pneg %p113
        $region22: #{mnist_cnn_forward.1} parent=11 // pred_check_branch
          %330 = sbr.rel (%p328) target = $region24
        $region23: #{mnist_cnn_forward.1} parent=11 // pred_region
          _
        $region24: #{mnist_cnn_forward.1} parent=11 // pred_fallthru
          _
        // Predicated region
        $region25: #{mnist_cnn_forward.1} parent=11 // pred_check
          %p331 = pneg %p134
        $region26: #{mnist_cnn_forward.1} parent=11 // pred_check_branch
          %333 = sbr.rel (%p331) target = $region28
        $region27: #{mnist_cnn_forward.1} parent=11 // pred_region
          %s335 = ssub.s32 1344, 1344
          %336 = vsyncadd [#allocation3], %s335
          %s337 = sshll.u32 [#allocation2], 4
          %s338 = int_to_ptr.vmem [resolvable:$true] %s337
          %343 = dma.hbm_to_vmem [thread:$0]  %s4, 1344, %s338, [#allocation3], 64, 64, 4
        $region28: #{mnist_cnn_forward.1} parent=11 // pred_fallthru
          _
        // Predicated region
        $region29: #{mnist_cnn_forward.1} parent=11 // pred_check
          %p344 = pneg %p155
        $region30: #{mnist_cnn_forward.1} parent=11 // pred_check_branch
          %346 = sbr.rel (%p344) target = $region32
        $region31: #{mnist_cnn_forward.1} parent=11 // pred_region
          %s348 = ssub.s32 5376, 5376
          %349 = vsyncadd [#allocation6], %s348
          %s350 = sshll.u32 [#allocation5], 4
          %s351 = int_to_ptr.vmem [resolvable:$true] %s350
          %356 = dma.hbm_to_vmem [thread:$0]  %s5, 5376, %s351, [#allocation6], 64, 64, 4
        $region32: #{mnist_cnn_forward.1} parent=11 // pred_fallthru
          _
        // Predicated region
        $region33: #{mnist_cnn_forward.1} parent=11 // pred_check
          %p357 = pneg %p176
        $region34: #{mnist_cnn_forward.1} parent=11 // pred_check_branch
          %359 = sbr.rel (%p357) target = $region36
        $region35: #{mnist_cnn_forward.1} parent=11 // pred_region
          %s361 = ssub.s32 16, 16
          %362 = vsyncadd [#allocation6], %s361
          %s364 = sshll.u32 [#allocation7], 4
          %s365 = int_to_ptr.vmem [resolvable:$true] %s364
          %367 = dma.hbm_to_vmem [thread:$0]  %s6, 16, %s365, [#allocation6]
        $region36: #{mnist_cnn_forward.1} parent=11 // pred_fallthru
          _
        // Predicated region
        $region37: #{mnist_cnn_forward.1} parent=11 // pred_check
          %p368 = pneg %p197
        $region38: #{mnist_cnn_forward.1} parent=11 // pred_check_branch
          %370 = sbr.rel (%p368) target = $region40
        $region39: #{mnist_cnn_forward.1} parent=11 // pred_region
          _
        $region40: #{mnist_cnn_forward.1} parent=11 // pred_fallthru
          _
        // Predicated region
        $region41: #{mnist_cnn_forward.1} parent=11 // pred_check
          %p371 = pneg %p218
        $region42: #{mnist_cnn_forward.1} parent=11 // pred_check_branch
          %373 = sbr.rel (%p371) target = $region44
        $region43: #{mnist_cnn_forward.1} parent=11 // pred_region
          _
        $region44: #{mnist_cnn_forward.1} parent=11 // pred_fallthru
          _
        // Predicated region
        $region45: #{mnist_cnn_forward.1} parent=11 // pred_check
          %p374 = pneg %p239
        $region46: #{mnist_cnn_forward.1} parent=11 // pred_check_branch
          %376 = sbr.rel (%p374) target = $region48
        $region47: #{mnist_cnn_forward.1} parent=11 // pred_region
          %s378 = ssub.s32 16, 16
          %379 = vsyncadd [#allocation9], %s378
          %s381 = sshll.u32 [#allocation8], 4
          %s382 = int_to_ptr.vmem [resolvable:$true] %s381
          %384 = dma.hbm_to_vmem [thread:$0]  %s9, 16, %s382, [#allocation9]
        $region48: #{mnist_cnn_forward.1} parent=11 // pred_fallthru
          _
        // Predicated region
        $region49: #{mnist_cnn_forward.1} parent=11 // pred_check
          %p385 = pneg %p260
        $region50: #{mnist_cnn_forward.1} parent=11 // pred_check_branch
          %387 = sbr.rel (%p385) target = $region52
        $region51: #{mnist_cnn_forward.1} parent=11 // pred_region
          _
        $region52: #{mnist_cnn_forward.1} parent=11 // pred_fallthru
          _
        // Predicated region
        $region53: #{mnist_cnn_forward.1} parent=11 // pred_check
          %p388 = pneg %p281
        $region54: #{mnist_cnn_forward.1} parent=11 // pred_check_branch
          %390 = sbr.rel (%p388) target = $region56
        $region55: #{mnist_cnn_forward.1} parent=11 // pred_region
          _
        $region56: #{mnist_cnn_forward.1} parent=11 // pred_fallthru
          _
      $region12: #{mnist_cnn_forward.1} parent=5 // pred_fallthru
        _
      %p391 = scmp.lt.s32.totalorder %s24, 2
      // Predicated region
      $region57: #{mnist_cnn_forward.1} parent=5 // pred_check
        %p392 = pneg %p391
      $region58: #{mnist_cnn_forward.1} parent=5 // pred_check_branch
        %394 = sbr.rel (%p392) target = $region60
      $region59: #{mnist_cnn_forward.1} parent=5 // pred_region
        // Predicated region
        $region61: #{mnist_cnn_forward.1} parent=59 // pred_check
          %p395 = pneg %p44
        $region62: #{mnist_cnn_forward.1} parent=59 // pred_check_branch
          %397 = sbr.rel (%p395) target = $region64
        $region63: #{mnist_cnn_forward.1} parent=59 // pred_region
          %s398 = smul.u32 28, %s24
          %p399 = scmp.lt.s32.totalorder %s398, 55
          %s400 = scalar_select %p399, %s398, 55
          %s401 = smul.addr %s400, 8
          %s402 = scalar_lea.vmem %s0, %s401
          %s403 = smul.u32 28, %s24
        $region64: #{mnist_cnn_forward.1} parent=59 // pred_fallthru
          _
      $region60: #{mnist_cnn_forward.1} parent=5 // pred_fallthru
        _
      %p404 = scmp.le.s32.totalorder 1, %s24
      %p405 = scmp.lt.s32.totalorder %s24, 3
      %p406 = pnand %p404, %p405
      %p407 = pneg %p406
      // Predicated region
      $region65: #{mnist_cnn_forward.1} parent=5 // pred_check
        _
      $region66: #{mnist_cnn_forward.1} parent=5 // pred_check_branch
        %409 = sbr.rel (%p406) target = $region68
      $region67: #{mnist_cnn_forward.1} parent=5 // pred_region
        %s410 = ssub.s32 %s24, 1
        // Predicated region
        $region69: #{mnist_cnn_forward.1} parent=67 // pred_check
          %p411 = pneg %p134
        $region70: #{mnist_cnn_forward.1} parent=67 // pred_check_branch
          %413 = sbr.rel (%p411) target = $region72
        $region71: #{mnist_cnn_forward.1} parent=67 // pred_region
          %414 = dma.done [#allocation3], 1344
        $region72: #{mnist_cnn_forward.1} parent=67 // pred_fallthru
          _
        // Predicated region
        $region73: #{mnist_cnn_forward.1} parent=67 // pred_check
          %p415 = pneg %p155
        $region74: #{mnist_cnn_forward.1} parent=67 // pred_check_branch
          %417 = sbr.rel (%p415) target = $region76
        $region75: #{mnist_cnn_forward.1} parent=67 // pred_region
          %418 = dma.done [#allocation6], 5376
        $region76: #{mnist_cnn_forward.1} parent=67 // pred_fallthru
          _
        // Predicated region
        $region77: #{mnist_cnn_forward.1} parent=67 // pred_check
          %p419 = pneg %p176
        $region78: #{mnist_cnn_forward.1} parent=67 // pred_check_branch
          %421 = sbr.rel (%p419) target = $region80
        $region79: #{mnist_cnn_forward.1} parent=67 // pred_region
          %422 = dma.done [#allocation6], 16
        $region80: #{mnist_cnn_forward.1} parent=67 // pred_fallthru
          _
        // Predicated region
        $region81: #{mnist_cnn_forward.1} parent=67 // pred_check
          %p423 = pneg %p239
        $region82: #{mnist_cnn_forward.1} parent=67 // pred_check_branch
          %425 = sbr.rel (%p423) target = $region84
        $region83: #{mnist_cnn_forward.1} parent=67 // pred_region
          %426 = dma.done [#allocation9], 16
        $region84: #{mnist_cnn_forward.1} parent=67 // pred_fallthru
          _
        %s427 = smul.u32 28, %s29
        %p428 = scmp.lt.s32.totalorder %s427, 55
        %s429 = scalar_select %p428, %s427, 55
        %s430 = smul.addr %s429, 8
        %s431 = scalar_lea.vmem %s0, %s430
        %p432 = pneg %p50
        %p433 = pneg %p47
        %p434 = pneg %p71
        %p435 = pneg %p68
        %p436 = pneg %p92
        %p437 = pneg %p89
        %p438 = pneg %p113
        %p439 = pneg %p110
        %p440 = pneg %p134
        %p441 = pneg %p131
        %p442 = pneg %p155
        %p443 = pneg %p152
        %p444 = pneg %p176
        %p445 = pneg %p173
        %p446 = pneg %p197
        %p447 = pneg %p194
        %p448 = pneg %p218
        %p449 = pneg %p215
        %p450 = pneg %p239
        %p451 = pneg %p236
        %p452 = pneg %p260
        %p453 = pneg %p257
        %p454 = pneg %p281
        %p455 = pneg %p278
        %p456 = pneg %p307
        %p457 = pneg %p304
        %s458 = sand.u32 %s294, 1
        %s459 = scalar_lea.sflag [#allocation4], %s458
        %s460 = sand.u32 %s294, 1
        %s461 = smul.addr %s460, 8
        %s462 = scalar_lea.vmem [#allocation10], %s461
        %s463 = smul.u32 28, %s29
        %p464 = scmp.lt.s32.totalorder %s463, 55
        %s465 = scalar_select %p464, %s463, 55
        %s466 = smul.addr %s465, 8
        %s467 = scalar_lea.vmem %s0, %s466
        %s468 = smul.u32 28, %s29
        %v470 = vld [vmem:[%s467] sm:$0xff]
        %v471 = vld [vmem:[%s467 + $0x8] sm:$0xff]
        %v472 = vld [vmem:[%s467 + $0x10] sm:$0xff]
        %v473 = vld [vmem:[%s467 + $0x18] sm:$0xff]
        %v474 = vld [vmem:[%s467 + $0x20] sm:$0xff]
        %v475 = vld [vmem:[%s467 + $0x28] sm:$0xff]
        %v476 = vld [vmem:[%s467 + $0x30] sm:$0xff]
        %v477 = vld [vmem:[%s467 + $0x38] sm:$0xff]
        %v478 = vld [vmem:[%s467 + $0x40] sm:$0xff]
        %v479 = vld [vmem:[%s467 + $0x48] sm:$0xff]
        %v480 = vld [vmem:[%s467 + $0x50] sm:$0xff]
        %v481 = vld [vmem:[%s467 + $0x58] sm:$0xff]
        %v482 = vld [vmem:[%s467 + $0x60] sm:$0xff]
        %v483 = vld [vmem:[%s467 + $0x68] sm:$0xff]
        %v484 = vld [vmem:[%s467 + $0x70] sm:$0xff]
        %v485 = vld [vmem:[%s467 + $0x78] sm:$0xff]
        %v486 = vld [vmem:[%s467 + $0x80] sm:$0xff]
        %v487 = vld [vmem:[%s467 + $0x88] sm:$0xff]
        %v488 = vld [vmem:[%s467 + $0x90] sm:$0xff]
        %v489 = vld [vmem:[%s467 + $0x98] sm:$0xff]
        %v490 = vld [vmem:[%s467 + $0xa0] sm:$0xff]
        %v491 = vld [vmem:[%s467 + $0xa8] sm:$0xff]
        %v492 = vld [vmem:[%s467 + $0xb0] sm:$0xff]
        %v493 = vld [vmem:[%s467 + $0xb8] sm:$0xff]
        %v494 = vld [vmem:[%s467 + $0xc0] sm:$0xff]
        %v495 = vld [vmem:[%s467 + $0xc8] sm:$0xff]
        %v496 = vld [vmem:[%s467 + $0xd0] sm:$0xff]
        %v497 = vld [vmem:[%s467 + $0xd8] sm:$0xff]
        %v498 = vpack.c.bf16 %v471, %v470
        %v499 = vpack.c.bf16 %v473, %v472
        %v500 = vpack.c.bf16 %v475, %v474
        %v501 = vpack.c.bf16 %v477, %v476
        %v502 = vpack.c.bf16 %v479, %v478
        %v503 = vpack.c.bf16 %v481, %v480
        %v504 = vpack.c.bf16 %v483, %v482
        %v505 = vpack.c.bf16 %v485, %v484
        %v506 = vpack.c.bf16 %v487, %v486
        %v507 = vpack.c.bf16 %v489, %v488
        %v508 = vpack.c.bf16 %v491, %v490
        %v509 = vpack.c.bf16 %v493, %v492
        %v510 = vpack.c.bf16 %v495, %v494
        %v511 = vpack.c.bf16 %v497, %v496
        %v512 = vld [vmem:[%s1] sm:$0xff]
        %v513 = vld [vmem:[%s1 + $0x8] sm:$0xff]
        %v514 = vld [vmem:[%s1 + $0x10] sm:$0xff]
        %v515 = vld [vmem:[%s1 + $0x18] sm:$0xff]
        %v516 = vld [vmem:[%s1 + $0x20] sm:$0xff]
        %v517 = vld [vmem:[%s1 + $0x28] sm:$0xff]
        %v518 = vld [vmem:[%s1 + $0x30] sm:$0xff]
        %v519 = vld [vmem:[%s1 + $0x38] sm:$0xff]
        %v520 = vld [vmem:[%s1 + $0x40] sm:$0xff]
        %v521 = vld [vmem:[%s1 + $0x48] sm:$0xff]
        %v522 = vld [vmem:[%s1 + $0x50] sm:$0xff]
        %v523 = vld [vmem:[%s1 + $0x58] sm:$0xff]
        %v524 = vld [vmem:[%s1 + $0x60] sm:$0xff]
        %v525 = vld [vmem:[%s1 + $0x68] sm:$0xff]
        %v526 = vld [vmem:[%s1 + $0x70] sm:$0xff]
        %v527 = vld [vmem:[%s1 + $0x78] sm:$0xff]
        %v528 = vld [vmem:[%s1 + $0x80] sm:$0xff]
        %v529 = vld [vmem:[%s1 + $0x88] sm:$0xff]
        %v530 = vld [vmem:[%s1 + $0x90] sm:$0xff]
        %v531 = vld [vmem:[%s1 + $0x98] sm:$0xff]
        %v532 = vld [vmem:[%s1 + $0xa0] sm:$0xff]
        %v533 = vld [vmem:[%s1 + $0xa8] sm:$0xff]
        %v534 = vld [vmem:[%s1 + $0xb0] sm:$0xff]
        %v535 = vld [vmem:[%s1 + $0xb8] sm:$0xff]
        %v536 = vld [vmem:[%s1 + $0xc0] sm:$0xff]
        %v537 = vld [vmem:[%s1 + $0xc8] sm:$0xff]
        %v538 = vld [vmem:[%s1 + $0xd0] sm:$0xff]
        %v539 = vld [vmem:[%s1 + $0xd8] sm:$0xff]
        %v540 = vld [vmem:[%s1 + $0xe0] sm:$0xff]
        %v541 = vld [vmem:[%s1 + $0xe8] sm:$0xff]
        %v542 = vld [vmem:[%s1 + $0xf0] sm:$0xff]
        %v543 = vld [vmem:[%s1 + $0xf8] sm:$0xff]
        %v544 = vld [vmem:[%s1 + $0x100] sm:$0xff]
        %v545 = vld [vmem:[%s1 + $0x108] sm:$0xff]
        %v546 = vld [vmem:[%s1 + $0x110] sm:$0xff]
        %v547 = vld [vmem:[%s1 + $0x118] sm:$0xff]
        %v548 = vld [vmem:[%s1 + $0x120] sm:$0xff]
        %v549 = vld [vmem:[%s1 + $0x128] sm:$0xff]
        %v550 = vld [vmem:[%s1 + $0x130] sm:$0xff]
        %v551 = vld [vmem:[%s1 + $0x138] sm:$0xff]
        %v552 = vld [vmem:[%s1 + $0x140] sm:$0xff]
        %v553 = vld [vmem:[%s1 + $0x148] sm:$0xff]
        %v596 = vunpack.c.l.b16 %v512
        %v597 = vunpack.c.h.b16 %v512
        %v598 = vunpack.c.l.b16 %v513
        %v599 = vunpack.c.h.b16 %v513
        %v600 = vunpack.c.l.b16 %v514
        %v601 = vunpack.c.h.b16 %v514
        %v602 = vunpack.c.l.b16 %v515
        %v603 = vunpack.c.h.b16 %v515
        %v604 = vunpack.c.l.b16 %v516
        %v605 = vunpack.c.h.b16 %v516
        %v606 = vunpack.c.l.b16 %v517
        %v607 = vunpack.c.h.b16 %v517
        %v608 = vunpack.c.l.b16 %v518
        %v609 = vunpack.c.h.b16 %v518
        %v610 = vunpack.c.l.b16 %v519
        %v611 = vunpack.c.h.b16 %v519
        %v612 = vunpack.c.l.b16 %v520
        %v613 = vunpack.c.h.b16 %v520
        %v614 = vunpack.c.l.b16 %v521
        %v615 = vunpack.c.h.b16 %v521
        %v616 = vunpack.c.l.b16 %v522
        %v617 = vunpack.c.h.b16 %v522
        %v618 = vunpack.c.l.b16 %v523
        %v619 = vunpack.c.h.b16 %v523
        %v620 = vunpack.c.l.b16 %v524
        %v621 = vunpack.c.h.b16 %v524
        %v622 = vunpack.c.l.b16 %v525
        %v623 = vunpack.c.h.b16 %v525
        %v624 = vunpack.c.l.b16 %v526
        %v625 = vunpack.c.h.b16 %v526
        %v626 = vunpack.c.l.b16 %v527
        %v627 = vunpack.c.h.b16 %v527
        %v628 = vunpack.c.l.b16 %v528
        %v629 = vunpack.c.h.b16 %v528
        %v630 = vunpack.c.l.b16 %v529
        %v631 = vunpack.c.h.b16 %v529
        %v632 = vunpack.c.l.b16 %v530
        %v633 = vunpack.c.h.b16 %v530
        %v634 = vunpack.c.l.b16 %v531
        %v635 = vunpack.c.h.b16 %v531
        %v636 = vunpack.c.l.b16 %v532
        %v637 = vunpack.c.h.b16 %v532
        %v638 = vunpack.c.l.b16 %v533
        %v639 = vunpack.c.h.b16 %v533
        %v640 = vunpack.c.l.b16 %v534
        %v641 = vunpack.c.h.b16 %v534
        %v642 = vunpack.c.l.b16 %v535
        %v643 = vunpack.c.h.b16 %v535
        %v644 = vunpack.c.l.b16 %v536
        %v645 = vunpack.c.h.b16 %v536
        %v646 = vunpack.c.l.b16 %v537
        %v647 = vunpack.c.h.b16 %v537
        %v648 = vunpack.c.l.b16 %v538
        %v649 = vunpack.c.h.b16 %v538
        %v650 = vunpack.c.l.b16 %v539
        %v651 = vunpack.c.h.b16 %v539
        %v652 = vunpack.c.l.b16 %v540
        %v653 = vunpack.c.h.b16 %v540
        %v654 = vunpack.c.l.b16 %v541
        %v655 = vunpack.c.h.b16 %v541
        %v656 = vunpack.c.l.b16 %v542
        %v657 = vunpack.c.h.b16 %v542
        %v658 = vunpack.c.l.b16 %v543
        %v659 = vunpack.c.h.b16 %v543
        %v660 = vunpack.c.l.b16 %v544
        %v661 = vunpack.c.h.b16 %v544
        %v662 = vunpack.c.l.b16 %v545
        %v663 = vunpack.c.h.b16 %v545
        %v664 = vunpack.c.l.b16 %v546
        %v665 = vunpack.c.h.b16 %v546
        %v666 = vunpack.c.l.b16 %v547
        %v667 = vunpack.c.h.b16 %v547
        %v668 = vunpack.c.l.b16 %v548
        %v669 = vunpack.c.h.b16 %v548
        %v670 = vunpack.c.l.b16 %v549
        %v671 = vunpack.c.h.b16 %v549
        %v672 = vunpack.c.l.b16 %v550
        %v673 = vunpack.c.h.b16 %v550
        %v674 = vunpack.c.l.b16 %v551
        %v675 = vunpack.c.h.b16 %v551
        %v676 = vunpack.c.l.b16 %v552
        %v677 = vunpack.c.h.b16 %v552
        %v678 = vunpack.c.l.b16 %v553
        %v679 = vunpack.c.h.b16 %v553
        %v680 = vpack.c.b16 %v598, %v596
        %v681 = vpack.c.b16 %v599, %v597
        %v682 = vpack.c.b16 %v602, %v600
        %v683 = vpack.c.b16 %v603, %v601
        %v684 = vpack.c.b16 %v606, %v604
        %v685 = vpack.c.b16 %v607, %v605
        %v686 = vpack.c.b16 %v610, %v608
        %v687 = vpack.c.b16 %v611, %v609
        %v688 = vpack.c.b16 %v614, %v612
        %v689 = vpack.c.b16 %v615, %v613
        %v690 = vpack.c.b16 %v618, %v616
        %v691 = vpack.c.b16 %v619, %v617
        %v692 = vpack.c.b16 %v622, %v620
        %v693 = vpack.c.b16 %v623, %v621
        %v694 = vpack.c.b16 %v626, %v624
        %v695 = vpack.c.b16 %v627, %v625
        %v696 = vpack.c.b16 %v630, %v628
        %v697 = vpack.c.b16 %v631, %v629
        %v698 = vpack.c.b16 %v634, %v632
        %v699 = vpack.c.b16 %v635, %v633
        %v700 = vpack.c.b16 %v638, %v636
        %v701 = vpack.c.b16 %v639, %v637
        %v702 = vpack.c.b16 %v642, %v640
        %v703 = vpack.c.b16 %v643, %v641
        %v704 = vpack.c.b16 %v646, %v644
        %v705 = vpack.c.b16 %v647, %v645
        %v706 = vpack.c.b16 %v650, %v648
        %v707 = vpack.c.b16 %v651, %v649
        %v708 = vpack.c.b16 %v654, %v652
        %v709 = vpack.c.b16 %v655, %v653
        %v710 = vpack.c.b16 %v658, %v656
        %v711 = vpack.c.b16 %v659, %v657
        %v712 = vpack.c.b16 %v662, %v660
        %v713 = vpack.c.b16 %v663, %v661
        %v714 = vpack.c.b16 %v666, %v664
        %v715 = vpack.c.b16 %v667, %v665
        %v716 = vpack.c.b16 %v670, %v668
        %v717 = vpack.c.b16 %v671, %v669
        %v718 = vpack.c.b16 %v674, %v672
        %v719 = vpack.c.b16 %v675, %v673
        %v720 = vpack.c.b16 %v678, %v676
        %v721 = vpack.c.b16 %v679, %v677
        %vm743 = vcmask 785408
        %v745 = vsel %vm743, %v681, 0
        %v748 = vsel %vm743, %v683, 0
        %v751 = vsel %vm743, %v685, 0
        %v754 = vsel %vm743, %v687, 0
        %v757 = vsel %vm743, %v689, 0
        %v760 = vsel %vm743, %v691, 0
        %v763 = vsel %vm743, %v693, 0
        %v766 = vsel %vm743, %v695, 0
        %v769 = vsel %vm743, %v697, 0
        %v772 = vsel %vm743, %v699, 0
        %v775 = vsel %vm743, %v701, 0
        %v778 = vsel %vm743, %v703, 0
        %v781 = vsel %vm743, %v705, 0
        %v784 = vsel %vm743, %v707, 0
        %v787 = vsel %vm743, %v709, 0
        %v790 = vsel %vm743, %v711, 0
        %v793 = vsel %vm743, %v713, 0
        %v796 = vsel %vm743, %v715, 0
        %v799 = vsel %vm743, %v717, 0
        %v802 = vsel %vm743, %v719, 0
        %v805 = vsel %vm743, %v721, 0
        %807 = vmatprep.subr.bf16.mxu0 0
        %808 = vmatpush1.bf16.msra.mxu0 %v498
        %809 = vmatprep.subr.bf16.mxu0 0
        %810 = vmatpush1.bf16.msra.mxu0 %v499
        %811 = vmatprep.subr.bf16.mxu0 0
        %812 = vmatpush1.bf16.msra.mxu0 %v500
        %813 = vmatprep.subr.bf16.mxu0 0
        %814 = vmatpush1.bf16.msra.mxu0 %v501
        %815 = vmatprep.subr.bf16.mxu0 0
        %816 = vmatpush1.bf16.msra.mxu0 %v502
        %817 = vmatprep.subr.bf16.mxu0 0
        %818 = vmatpush1.bf16.msra.mxu0 %v503
        %819 = vmatprep.subr.bf16.mxu0 0
        %820 = vmatpush1.bf16.msra.mxu0 %v504
        %821 = vmatprep.subr.bf16.mxu0 0
        %822 = vmatpush1.bf16.msra.mxu0 %v505
        %823 = vmatprep.subr.bf16.mxu0 0
        %824 = vmatpush1.bf16.msra.mxu0 %v506
        %825 = vmatprep.subr.bf16.mxu0 0
        %826 = vmatpush1.bf16.msra.mxu0 %v507
        %827 = vmatprep.subr.bf16.mxu0 0
        %828 = vmatpush1.bf16.msra.mxu0 %v508
        %829 = vmatprep.subr.bf16.mxu0 0
        %830 = vmatpush1.bf16.msra.mxu0 %v509
        %831 = vmatprep.subr.bf16.mxu0 0
        %832 = vmatpush1.bf16.msra.mxu0 %v510
        %833 = vmatprep.subr.bf16.mxu0 0
        %834 = vmatpush1.bf16.msra.mxu0 %v511
        %835 = vmatprep.subr.bf16.mxu0 0
        %836 = vmatpush1.bf16.msra.mxu0 0
        %837 = vmatprep.subr.bf16.mxu0 0
        %838 = vmatpush1.bf16.msra.mxu0 0
        %839 = vmatprep.mubr.bf16.mxu0 %v745
        %840 = vmatmul.mubr.bf16.gmra.mrb[0].mxu0 %v680
        %v841 = vpop.f32.mrb[0].mxu0
        %v842 = vadd.f32 0.0, %v841
        %v843 = vpop.f32.mrb[0].mxu0
        %v844 = vpop.f32.mrb[0].mxu0
        %v845 = vadd.f32 0.0, %v844
        %v846 = vpop.f32.mrb[0].mxu0
        %847 = vmatprep.mubr.bf16.mxu0 %v748
        %848 = vmatmul.mubr.bf16.gmra.mrb[0].mxu0 %v682
        %v849 = vpop.f32.mrb[0].mxu0
        %v850 = vadd.f32 0.0, %v849
        %v851 = vpop.f32.mrb[0].mxu0
        %v852 = vpop.f32.mrb[0].mxu0
        %v853 = vadd.f32 0.0, %v852
        %v854 = vpop.f32.mrb[0].mxu0
        %855 = vmatprep.mubr.bf16.mxu0 %v751
        %856 = vmatmul.mubr.bf16.gmra.mrb[0].mxu0 %v684
        %v857 = vpop.f32.mrb[0].mxu0
        %v858 = vadd.f32 0.0, %v857
        %v859 = vpop.f32.mrb[0].mxu0
        %v860 = vpop.f32.mrb[0].mxu0
        %v861 = vadd.f32 0.0, %v860
        %v862 = vpop.f32.mrb[0].mxu0
        %863 = vmatprep.mubr.bf16.mxu0 %v754
        %864 = vmatmul.mubr.bf16.gmra.mrb[0].mxu0 %v686
        %v865 = vpop.f32.mrb[0].mxu0
        %v866 = vadd.f32 0.0, %v865
        %v867 = vpop.f32.mrb[0].mxu0
        %v868 = vpop.f32.mrb[0].mxu0
        %v869 = vadd.f32 0.0, %v868
        %v870 = vpop.f32.mrb[0].mxu0
        %871 = vmatprep.mubr.bf16.mxu0 %v757
        %872 = vmatmul.mubr.bf16.gmra.mrb[0].mxu0 %v688
        %v873 = vpop.f32.mrb[0].mxu0
        %v874 = vadd.f32 0.0, %v873
        %v875 = vpop.f32.mrb[0].mxu0
        %v876 = vpop.f32.mrb[0].mxu0
        %v877 = vadd.f32 0.0, %v876
        %v878 = vpop.f32.mrb[0].mxu0
        %879 = vmatprep.mubr.bf16.mxu0 %v760
        %880 = vmatmul.mubr.bf16.gmra.mrb[0].mxu0 %v690
        %v881 = vpop.f32.mrb[0].mxu0
        %v882 = vadd.f32 0.0, %v881
        %v883 = vpop.f32.mrb[0].mxu0
        %v884 = vpop.f32.mrb[0].mxu0
        %v885 = vadd.f32 0.0, %v884
        %v886 = vpop.f32.mrb[0].mxu0
        %887 = vmatprep.mubr.bf16.mxu0 %v763
        %888 = vmatmul.mubr.bf16.gmra.mrb[0].mxu0 %v692
        %v889 = vpop.f32.mrb[0].mxu0
        %v890 = vadd.f32 0.0, %v889
        %v891 = vpop.f32.mrb[0].mxu0
        %v892 = vpop.f32.mrb[0].mxu0
        %v893 = vadd.f32 0.0, %v892
        %v894 = vpop.f32.mrb[0].mxu0
        %895 = vmatprep.mubr.bf16.mxu0 %v766
        %896 = vmatmul.mubr.bf16.gmra.mrb[0].mxu0 %v694
        %v897 = vpop.f32.mrb[0].mxu0
        %v898 = vadd.f32 0.0, %v897
        %v899 = vpop.f32.mrb[0].mxu0
        %v900 = vpop.f32.mrb[0].mxu0
        %v901 = vadd.f32 0.0, %v900
        %v902 = vpop.f32.mrb[0].mxu0
        %903 = vmatprep.mubr.bf16.mxu0 %v769
        %904 = vmatmul.mubr.bf16.gmra.mrb[0].mxu0 %v696
        %v905 = vpop.f32.mrb[0].mxu0
        %v906 = vadd.f32 0.0, %v905
        %v907 = vpop.f32.mrb[0].mxu0
        %v908 = vpop.f32.mrb[0].mxu0
        %v909 = vadd.f32 0.0, %v908
        %v910 = vpop.f32.mrb[0].mxu0
        %911 = vmatprep.mubr.bf16.mxu0 %v772
        %912 = vmatmul.mubr.bf16.gmra.mrb[0].mxu0 %v698
        %v913 = vpop.f32.mrb[0].mxu0
        %v914 = vadd.f32 0.0, %v913
        %v915 = vpop.f32.mrb[0].mxu0
        %v916 = vpop.f32.mrb[0].mxu0
        %v917 = vadd.f32 0.0, %v916
        %v918 = vpop.f32.mrb[0].mxu0
        %919 = vmatprep.mubr.bf16.mxu0 %v775
        %920 = vmatmul.mubr.bf16.gmra.mrb[0].mxu0 %v700
        %v921 = vpop.f32.mrb[0].mxu0
        %v922 = vadd.f32 0.0, %v921
        %v923 = vpop.f32.mrb[0].mxu0
        %v924 = vpop.f32.mrb[0].mxu0
        %v925 = vadd.f32 0.0, %v924
        %v926 = vpop.f32.mrb[0].mxu0
        %927 = vmatprep.mubr.bf16.mxu0 %v778
        %928 = vmatmul.mubr.bf16.gmra.mrb[0].mxu0 %v702
        %v929 = vpop.f32.mrb[0].mxu0
        %v930 = vadd.f32 0.0, %v929
        %v931 = vpop.f32.mrb[0].mxu0
        %v932 = vpop.f32.mrb[0].mxu0
        %v933 = vadd.f32 0.0, %v932
        %v934 = vpop.f32.mrb[0].mxu0
        %935 = vmatprep.mubr.bf16.mxu0 %v781
        %936 = vmatmul.mubr.bf16.gmra.mrb[0].mxu0 %v704
        %v937 = vpop.f32.mrb[0].mxu0
        %v938 = vadd.f32 0.0, %v937
        %v939 = vpop.f32.mrb[0].mxu0
        %v940 = vpop.f32.mrb[0].mxu0
        %v941 = vadd.f32 0.0, %v940
        %v942 = vpop.f32.mrb[0].mxu0
        %943 = vmatprep.mubr.bf16.mxu0 %v784
        %944 = vmatmul.mubr.bf16.gmra.mrb[0].mxu0 %v706
        %v945 = vpop.f32.mrb[0].mxu0
        %v946 = vadd.f32 0.0, %v945
        %v947 = vpop.f32.mrb[0].mxu0
        %v948 = vpop.f32.mrb[0].mxu0
        %v949 = vadd.f32 0.0, %v948
        %v950 = vpop.f32.mrb[0].mxu0
        %951 = vmatprep.mubr.bf16.mxu0 %v787
        %952 = vmatmul.mubr.bf16.gmra.mrb[0].mxu0 %v708
        %v953 = vpop.f32.mrb[0].mxu0
        %v954 = vadd.f32 0.0, %v953
        %v955 = vpop.f32.mrb[0].mxu0
        %v956 = vpop.f32.mrb[0].mxu0
        %v957 = vadd.f32 0.0, %v956
        %v958 = vpop.f32.mrb[0].mxu0
        %959 = vmatprep.mubr.bf16.mxu0 %v790
        %960 = vmatmul.mubr.bf16.gmra.mrb[0].mxu0 %v710
        %v961 = vpop.f32.mrb[0].mxu0
        %v962 = vadd.f32 0.0, %v961
        %v963 = vpop.f32.mrb[0].mxu0
        %v964 = vpop.f32.mrb[0].mxu0
        %v965 = vadd.f32 0.0, %v964
        %v966 = vpop.f32.mrb[0].mxu0
        %967 = vmatprep.mubr.bf16.mxu0 %v793
        %968 = vmatmul.mubr.bf16.gmra.mrb[0].mxu0 %v712
        %v969 = vpop.f32.mrb[0].mxu0
        %v970 = vadd.f32 0.0, %v969
        %v971 = vpop.f32.mrb[0].mxu0
        %v972 = vpop.f32.mrb[0].mxu0
        %v973 = vadd.f32 0.0, %v972
        %v974 = vpop.f32.mrb[0].mxu0
        %975 = vmatprep.mubr.bf16.mxu0 %v796
        %976 = vmatmul.mubr.bf16.gmra.mrb[0].mxu0 %v714
        %v977 = vpop.f32.mrb[0].mxu0
        %v978 = vadd.f32 0.0, %v977
        %v979 = vpop.f32.mrb[0].mxu0
        %v980 = vpop.f32.mrb[0].mxu0
        %v981 = vadd.f32 0.0, %v980
        %v982 = vpop.f32.mrb[0].mxu0
        %983 = vmatprep.mubr.bf16.mxu0 %v799
        %984 = vmatmul.mubr.bf16.gmra.mrb[0].mxu0 %v716
        %v985 = vpop.f32.mrb[0].mxu0
        %v986 = vadd.f32 0.0, %v985
        %v987 = vpop.f32.mrb[0].mxu0
        %v988 = vpop.f32.mrb[0].mxu0
        %v989 = vadd.f32 0.0, %v988
        %v990 = vpop.f32.mrb[0].mxu0
        %991 = vmatprep.mubr.bf16.mxu0 %v802
        %992 = vmatmul.mubr.bf16.gmra.mrb[0].mxu0 %v718
        %v993 = vpop.f32.mrb[0].mxu0
        %v994 = vadd.f32 0.0, %v993
        %v995 = vpop.f32.mrb[0].mxu0
        %v996 = vpop.f32.mrb[0].mxu0
        %v997 = vadd.f32 0.0, %v996
        %v998 = vpop.f32.mrb[0].mxu0
        %999 = vmatprep.mubr.bf16.mxu0 %v805
        %1000 = vmatmul.mubr.bf16.gmra.mrb[0].mxu0 %v720
        %v1001 = vpop.f32.mrb[0].mxu0
        %v1002 = vadd.f32 0.0, %v1001
        %v1003 = vpop.f32.mrb[0].mxu0
        %v1004 = vpop.f32.mrb[0].mxu0
        %v1005 = vadd.f32 0.0, %v1004
        %v1006 = vpop.f32.mrb[0].mxu0
        %1007 = vdwg.mxu0
        %v1008 = vpack.c.bf16 %v845, %v842
        %v1009 = vpack.c.bf16 %v853, %v850
        %v1010 = vpack.c.bf16 %v861, %v858
        %v1011 = vpack.c.bf16 %v869, %v866
        %v1012 = vpack.c.bf16 %v877, %v874
        %v1013 = vpack.c.bf16 %v885, %v882
        %v1014 = vpack.c.bf16 %v893, %v890
        %v1015 = vpack.c.bf16 %v901, %v898
        %v1016 = vpack.c.bf16 %v909, %v906
        %v1017 = vpack.c.bf16 %v917, %v914
        %v1018 = vpack.c.bf16 %v925, %v922
        %v1019 = vpack.c.bf16 %v933, %v930
        %v1020 = vpack.c.bf16 %v941, %v938
        %v1021 = vpack.c.bf16 %v949, %v946
        %v1022 = vpack.c.bf16 %v957, %v954
        %v1023 = vpack.c.bf16 %v965, %v962
        %v1024 = vpack.c.bf16 %v973, %v970
        %v1025 = vpack.c.bf16 %v981, %v978
        %v1026 = vpack.c.bf16 %v989, %v986
        %v1027 = vpack.c.bf16 %v997, %v994
        %v1028 = vpack.c.bf16 %v1005, %v1002
        %v1029 = vld [vmem:[%s2] sm:$0xff]
        %v1030 = vld [vmem:[%s2 + $0x8] sm:$0xff]
        %v1031 = vld [vmem:[%s2 + $0x10] sm:$0xff]
        %v1032 = vld [vmem:[%s2 + $0x18] sm:$0x33]
        %s1033 = scalar_lea.vmem %s2, 32
        %v1034 = vld [vmem:[%s1033] sm:$0xff]
        %v1035 = vld [vmem:[%s1033 + $0x8] sm:$0xff]
        %v1036 = vld [vmem:[%s1033 + $0x10] sm:$0xff]
        %v1037 = vld [vmem:[%s1033 + $0x18] sm:$0x33]
        %v1042 = vunpack.c.l.b16 %v1034
        %v1043 = vunpack.c.h.b16 %v1034
        %v1044 = vunpack.c.l.b16 %v1035
        %v1045 = vunpack.c.h.b16 %v1035
        %v1046 = vunpack.c.l.b16 %v1036
        %v1047 = vunpack.c.h.b16 %v1036
        %v1048 = vunpack.c.l.b16 %v1037
        %v1049 = vunpack.c.h.b16 %v1037
        %v1050 = vpack.c.b16 %v1044, %v1042
        %v1051 = vpack.c.b16 %v1045, %v1043
        %v1052 = vpack.c.b16 %v1048, %v1046
        %v1053 = vpack.c.b16 %v1049, %v1047
        %vm1056 = vcmask 228352
        %v1058 = vsel %vm1056, %v1015, 0
        %v1061 = vsel %vm1056, %v1016, 0
        %v1064 = vsel %vm1056, %v1017, 0
        %v1067 = vsel %vm1056, %v1018, 0
        %v1070 = vsel %vm1056, %v1019, 0
        %v1073 = vsel %vm1056, %v1020, 0
        %v1076 = vsel %vm1056, %v1021, 0
        %vm1078 = vcmask 1045504
        %v1080 = vsel %vm1078, %v1052, 0
        %v1083 = vsel %vm1078, %v1053, 0
        %1085 = vmatprep.subr.bf16.mxu0 %v1051
        %1086 = vmatpush1.bf16.msra.mxu0 %v1050
        %1087 = vmatprep.subr.bf16.mxu0 %v1083
        %1088 = vmatpush1.bf16.msra.mxu0 %v1080
        %1089 = vmatprep.subr.bf16.mxu0 0
        %1090 = vmatpush1.bf16.msra.mxu0 0
        %1091 = vmatprep.subr.bf16.mxu0 0
        %1092 = vmatpush1.bf16.msra.mxu0 0
        %1093 = vmatprep.subr.bf16.mxu0 0
        %1094 = vmatpush1.bf16.msra.mxu0 0
        %1095 = vmatprep.subr.bf16.mxu0 0
        %1096 = vmatpush1.bf16.msra.mxu0 0
        %1097 = vmatprep.subr.bf16.mxu0 0
        %1098 = vmatpush1.bf16.msra.mxu0 0
        %1099 = vmatprep.subr.bf16.mxu0 0
        %1100 = vmatpush1.bf16.msra.mxu0 0
        %1101 = vmatprep.subr.bf16.mxu0 0
        %1102 = vmatpush1.bf16.msra.mxu0 0
        %1103 = vmatprep.subr.bf16.mxu0 0
        %1104 = vmatpush1.bf16.msra.mxu0 0
        %1105 = vmatprep.subr.bf16.mxu0 0
        %1106 = vmatpush1.bf16.msra.mxu0 0
        %1107 = vmatprep.subr.bf16.mxu0 0
        %1108 = vmatpush1.bf16.msra.mxu0 0
        %1109 = vmatprep.subr.bf16.mxu0 0
        %1110 = vmatpush1.bf16.msra.mxu0 0
        %1111 = vmatprep.subr.bf16.mxu0 0
        %1112 = vmatpush1.bf16.msra.mxu0 0
        %1113 = vmatprep.subr.bf16.mxu0 0
        %1114 = vmatpush1.bf16.msra.mxu0 0
        %1115 = vmatprep.subr.bf16.mxu0 0
        %1116 = vmatpush1.bf16.msra.mxu0 0
        %1117 = vmatprep.mubr.bf16.mxu0 0
        %1118 = vmatmul.mubr.bf16.gmra.mrb[0].mxu0 %v1058
        %v1119 = vpop.f32.mrb[0].mxu0
        %v1120 = vadd.f32 0.0, %v1119
        %v1121 = vpop.f32.mrb[0].mxu0
        %v1122 = vadd.f32 0.0, %v1121
        %v1123 = vpop.f32.mrb[0].mxu0
        %v1124 = vadd.f32 0.0, %v1123
        %v1125 = vpop.f32.mrb[0].mxu0
        %v1126 = vadd.f32 0.0, %v1125
        %1127 = vmatprep.mubr.bf16.mxu0 0
        %1128 = vmatmul.mubr.bf16.gmra.mrb[0].mxu0 %v1061
        %v1129 = vpop.f32.mrb[0].mxu0
        %v1130 = vadd.f32 0.0, %v1129
        %v1131 = vpop.f32.mrb[0].mxu0
        %v1132 = vadd.f32 0.0, %v1131
        %v1133 = vpop.f32.mrb[0].mxu0
        %v1134 = vadd.f32 0.0, %v1133
        %v1135 = vpop.f32.mrb[0].mxu0
        %v1136 = vadd.f32 0.0, %v1135
        %1137 = vmatprep.mubr.bf16.mxu0 0
        %1138 = vmatmul.mubr.bf16.gmra.mrb[0].mxu0 %v1064
        %v1139 = vpop.f32.mrb[0].mxu0
        %v1140 = vadd.f32 0.0, %v1139
        %v1141 = vpop.f32.mrb[0].mxu0
        %v1142 = vadd.f32 0.0, %v1141
        %v1143 = vpop.f32.mrb[0].mxu0
        %v1144 = vadd.f32 0.0, %v1143
        %v1145 = vpop.f32.mrb[0].mxu0
        %v1146 = vadd.f32 0.0, %v1145
        %1147 = vmatprep.mubr.bf16.mxu0 0
        %1148 = vmatmul.mubr.bf16.gmra.mrb[0].mxu0 %v1067
        %v1149 = vpop.f32.mrb[0].mxu0
        %v1150 = vadd.f32 0.0, %v1149
        %v1151 = vpop.f32.mrb[0].mxu0
        %v1152 = vadd.f32 0.0, %v1151
        %v1153 = vpop.f32.mrb[0].mxu0
        %v1154 = vadd.f32 0.0, %v1153
        %v1155 = vpop.f32.mrb[0].mxu0
        %v1156 = vadd.f32 0.0, %v1155
        %1157 = vmatprep.mubr.bf16.mxu0 0
        %1158 = vmatmul.mubr.bf16.gmra.mrb[0].mxu0 %v1070
        %v1159 = vpop.f32.mrb[0].mxu0
        %v1160 = vadd.f32 0.0, %v1159
        %v1161 = vpop.f32.mrb[0].mxu0
        %v1162 = vadd.f32 0.0, %v1161
        %v1163 = vpop.f32.mrb[0].mxu0
        %v1164 = vadd.f32 0.0, %v1163
        %v1165 = vpop.f32.mrb[0].mxu0
        %v1166 = vadd.f32 0.0, %v1165
        %1167 = vmatprep.mubr.bf16.mxu0 0
        %1168 = vmatmul.mubr.bf16.gmra.mrb[0].mxu0 %v1073
        %v1169 = vpop.f32.mrb[0].mxu0
        %v1170 = vadd.f32 0.0, %v1169
        %v1171 = vpop.f32.mrb[0].mxu0
        %v1172 = vadd.f32 0.0, %v1171
        %v1173 = vpop.f32.mrb[0].mxu0
        %v1174 = vadd.f32 0.0, %v1173
        %v1175 = vpop.f32.mrb[0].mxu0
        %v1176 = vadd.f32 0.0, %v1175
        %1177 = vmatprep.mubr.bf16.mxu0 0
        %1178 = vmatmul.mubr.bf16.gmra.mrb[0].mxu0 %v1076
        %v1179 = vpop.f32.mrb[0].mxu0
        %v1180 = vadd.f32 0.0, %v1179
        %v1181 = vpop.f32.mrb[0].mxu0
        %v1182 = vadd.f32 0.0, %v1181
        %v1183 = vpop.f32.mrb[0].mxu0
        %v1184 = vadd.f32 0.0, %v1183
        %v1185 = vpop.f32.mrb[0].mxu0
        %v1186 = vadd.f32 0.0, %v1185
        %1187 = vdwg.mxu0
        %v1192 = vunpack.c.l.b16 %v1029
        %v1193 = vunpack.c.h.b16 %v1029
        %v1194 = vunpack.c.l.b16 %v1030
        %v1195 = vunpack.c.h.b16 %v1030
        %v1196 = vunpack.c.l.b16 %v1031
        %v1197 = vunpack.c.h.b16 %v1031
        %v1198 = vunpack.c.l.b16 %v1032
        %v1199 = vunpack.c.h.b16 %v1032
        %v1200 = vpack.c.b16 %v1194, %v1192
        %v1201 = vpack.c.b16 %v1195, %v1193
        %v1202 = vpack.c.b16 %v1198, %v1196
        %v1203 = vpack.c.b16 %v1199, %v1197
        %v1207 = vsel %vm1056, %v1008, 0
        %v1210 = vsel %vm1056, %v1009, 0
        %v1213 = vsel %vm1056, %v1010, 0
        %v1216 = vsel %vm1056, %v1011, 0
        %v1219 = vsel %vm1056, %v1012, 0
        %v1222 = vsel %vm1056, %v1013, 0
        %v1225 = vsel %vm1056, %v1014, 0
        %v1228 = vsel %vm1078, %v1202, 0
        %v1231 = vsel %vm1078, %v1203, 0
        %1233 = vmatprep.subr.bf16.mxu0 %v1201
        %1234 = vmatpush1.bf16.msra.mxu0 %v1200
        %1235 = vmatprep.subr.bf16.mxu0 %v1231
        %1236 = vmatpush1.bf16.msra.mxu0 %v1228
        %1237 = vmatprep.subr.bf16.mxu0 0
        %1238 = vmatpush1.bf16.msra.mxu0 0
        %1239 = vmatprep.subr.bf16.mxu0 0
        %1240 = vmatpush1.bf16.msra.mxu0 0
        %1241 = vmatprep.subr.bf16.mxu0 0
        %1242 = vmatpush1.bf16.msra.mxu0 0
        %1243 = vmatprep.subr.bf16.mxu0 0
        %1244 = vmatpush1.bf16.msra.mxu0 0
        %1245 = vmatprep.subr.bf16.mxu0 0
        %1246 = vmatpush1.bf16.msra.mxu0 0
        %1247 = vmatprep.subr.bf16.mxu0 0
        %1248 = vmatpush1.bf16.msra.mxu0 0
        %1249 = vmatprep.subr.bf16.mxu0 0
        %1250 = vmatpush1.bf16.msra.mxu0 0
        %1251 = vmatprep.subr.bf16.mxu0 0
        %1252 = vmatpush1.bf16.msra.mxu0 0
        %1253 = vmatprep.subr.bf16.mxu0 0
        %1254 = vmatpush1.bf16.msra.mxu0 0
        %1255 = vmatprep.subr.bf16.mxu0 0
        %1256 = vmatpush1.bf16.msra.mxu0 0
        %1257 = vmatprep.subr.bf16.mxu0 0
        %1258 = vmatpush1.bf16.msra.mxu0 0
        %1259 = vmatprep.subr.bf16.mxu0 0
        %1260 = vmatpush1.bf16.msra.mxu0 0
        %1261 = vmatprep.subr.bf16.mxu0 0
        %1262 = vmatpush1.bf16.msra.mxu0 0
        %1263 = vmatprep.subr.bf16.mxu0 0
        %1264 = vmatpush1.bf16.msra.mxu0 0
        %1265 = vmatprep.mubr.bf16.mxu0 0
        %1266 = vmatmul.mubr.bf16.gmra.mrb[0].mxu0 %v1207
        %v1267 = vpop.f32.mrb[0].mxu0
        %v1268 = vadd.f32 %v1120, %v1267
        %v1269 = vpop.f32.mrb[0].mxu0
        %v1270 = vadd.f32 %v1122, %v1269
        %v1271 = vpop.f32.mrb[0].mxu0
        %v1272 = vadd.f32 %v1124, %v1271
        %v1273 = vpop.f32.mrb[0].mxu0
        %v1274 = vadd.f32 %v1126, %v1273
        %1275 = vmatprep.mubr.bf16.mxu0 0
        %1276 = vmatmul.mubr.bf16.gmra.mrb[0].mxu0 %v1210
        %v1277 = vpop.f32.mrb[0].mxu0
        %v1278 = vadd.f32 %v1130, %v1277
        %v1279 = vpop.f32.mrb[0].mxu0
        %v1280 = vadd.f32 %v1132, %v1279
        %v1281 = vpop.f32.mrb[0].mxu0
        %v1282 = vadd.f32 %v1134, %v1281
        %v1283 = vpop.f32.mrb[0].mxu0
        %v1284 = vadd.f32 %v1136, %v1283
        %1285 = vmatprep.mubr.bf16.mxu0 0
        %1286 = vmatmul.mubr.bf16.gmra.mrb[0].mxu0 %v1213
        %v1287 = vpop.f32.mrb[0].mxu0
        %v1288 = vadd.f32 %v1140, %v1287
        %v1289 = vpop.f32.mrb[0].mxu0
        %v1290 = vadd.f32 %v1142, %v1289
        %v1291 = vpop.f32.mrb[0].mxu0
        %v1292 = vadd.f32 %v1144, %v1291
        %v1293 = vpop.f32.mrb[0].mxu0
        %v1294 = vadd.f32 %v1146, %v1293
        %1295 = vmatprep.mubr.bf16.mxu0 0
        %1296 = vmatmul.mubr.bf16.gmra.mrb[0].mxu0 %v1216
        %v1297 = vpop.f32.mrb[0].mxu0
        %v1298 = vadd.f32 %v1150, %v1297
        %v1299 = vpop.f32.mrb[0].mxu0
        %v1300 = vadd.f32 %v1152, %v1299
        %v1301 = vpop.f32.mrb[0].mxu0
        %v1302 = vadd.f32 %v1154, %v1301
        %v1303 = vpop.f32.mrb[0].mxu0
        %v1304 = vadd.f32 %v1156, %v1303
        %1305 = vmatprep.mubr.bf16.mxu0 0
        %1306 = vmatmul.mubr.bf16.gmra.mrb[0].mxu0 %v1219
        %v1307 = vpop.f32.mrb[0].mxu0
        %v1308 = vadd.f32 %v1160, %v1307
        %v1309 = vpop.f32.mrb[0].mxu0
        %v1310 = vadd.f32 %v1162, %v1309
        %v1311 = vpop.f32.mrb[0].mxu0
        %v1312 = vadd.f32 %v1164, %v1311
        %v1313 = vpop.f32.mrb[0].mxu0
        %v1314 = vadd.f32 %v1166, %v1313
        %1315 = vmatprep.mubr.bf16.mxu0 0
        %1316 = vmatmul.mubr.bf16.gmra.mrb[0].mxu0 %v1222
        %v1317 = vpop.f32.mrb[0].mxu0
        %v1318 = vadd.f32 %v1170, %v1317
        %v1319 = vpop.f32.mrb[0].mxu0
        %v1320 = vadd.f32 %v1172, %v1319
        %v1321 = vpop.f32.mrb[0].mxu0
        %v1322 = vadd.f32 %v1174, %v1321
        %v1323 = vpop.f32.mrb[0].mxu0
        %v1324 = vadd.f32 %v1176, %v1323
        %1325 = vmatprep.mubr.bf16.mxu0 0
        %1326 = vmatmul.mubr.bf16.gmra.mrb[0].mxu0 %v1225
        %v1327 = vpop.f32.mrb[0].mxu0
        %v1328 = vadd.f32 %v1180, %v1327
        %v1329 = vpop.f32.mrb[0].mxu0
        %v1330 = vadd.f32 %v1182, %v1329
        %v1331 = vpop.f32.mrb[0].mxu0
        %v1332 = vadd.f32 %v1184, %v1331
        %v1333 = vpop.f32.mrb[0].mxu0
        %v1334 = vadd.f32 %v1186, %v1333
        %1335 = vdwg.mxu0
        %s1336 = scalar_lea.vmem %s2, 64
        %v1337 = vld [vmem:[%s1336] sm:$0xff]
        %v1338 = vld [vmem:[%s1336 + $0x8] sm:$0xff]
        %v1339 = vld [vmem:[%s1336 + $0x10] sm:$0xff]
        %v1340 = vld [vmem:[%s1336 + $0x18] sm:$0x33]
        %v1345 = vunpack.c.l.b16 %v1337
        %v1346 = vunpack.c.h.b16 %v1337
        %v1347 = vunpack.c.l.b16 %v1338
        %v1348 = vunpack.c.h.b16 %v1338
        %v1349 = vunpack.c.l.b16 %v1339
        %v1350 = vunpack.c.h.b16 %v1339
        %v1351 = vunpack.c.l.b16 %v1340
        %v1352 = vunpack.c.h.b16 %v1340
        %v1353 = vpack.c.b16 %v1347, %v1345
        %v1354 = vpack.c.b16 %v1348, %v1346
        %v1355 = vpack.c.b16 %v1351, %v1349
        %v1356 = vpack.c.b16 %v1352, %v1350
        %v1360 = vsel %vm1056, %v1022, 0
        %v1363 = vsel %vm1056, %v1023, 0
        %v1366 = vsel %vm1056, %v1024, 0
        %v1369 = vsel %vm1056, %v1025, 0
        %v1372 = vsel %vm1056, %v1026, 0
        %v1375 = vsel %vm1056, %v1027, 0
        %v1378 = vsel %vm1056, %v1028, 0
        %v1381 = vsel %vm1078, %v1355, 0
        %v1384 = vsel %vm1078, %v1356, 0
        %1386 = vmatprep.subr.bf16.mxu0 %v1354
        %1387 = vmatpush1.bf16.msra.mxu0 %v1353
        %1388 = vmatprep.subr.bf16.mxu0 %v1384
        %1389 = vmatpush1.bf16.msra.mxu0 %v1381
        %1390 = vmatprep.subr.bf16.mxu0 0
        %1391 = vmatpush1.bf16.msra.mxu0 0
        %1392 = vmatprep.subr.bf16.mxu0 0
        %1393 = vmatpush1.bf16.msra.mxu0 0
        %1394 = vmatprep.subr.bf16.mxu0 0
        %1395 = vmatpush1.bf16.msra.mxu0 0
        %1396 = vmatprep.subr.bf16.mxu0 0
        %1397 = vmatpush1.bf16.msra.mxu0 0
        %1398 = vmatprep.subr.bf16.mxu0 0
        %1399 = vmatpush1.bf16.msra.mxu0 0
        %1400 = vmatprep.subr.bf16.mxu0 0
        %1401 = vmatpush1.bf16.msra.mxu0 0
        %1402 = vmatprep.subr.bf16.mxu0 0
        %1403 = vmatpush1.bf16.msra.mxu0 0
        %1404 = vmatprep.subr.bf16.mxu0 0
        %1405 = vmatpush1.bf16.msra.mxu0 0
        %1406 = vmatprep.subr.bf16.mxu0 0
        %1407 = vmatpush1.bf16.msra.mxu0 0
        %1408 = vmatprep.subr.bf16.mxu0 0
        %1409 = vmatpush1.bf16.msra.mxu0 0
        %1410 = vmatprep.subr.bf16.mxu0 0
        %1411 = vmatpush1.bf16.msra.mxu0 0
        %1412 = vmatprep.subr.bf16.mxu0 0
        %1413 = vmatpush1.bf16.msra.mxu0 0
        %1414 = vmatprep.subr.bf16.mxu0 0
        %1415 = vmatpush1.bf16.msra.mxu0 0
        %1416 = vmatprep.subr.bf16.mxu0 0
        %1417 = vmatpush1.bf16.msra.mxu0 0
        %1418 = vmatprep.mubr.bf16.mxu0 0
        %1419 = vmatmul.mubr.bf16.gmra.mrb[0].mxu0 %v1360
        %v1420 = vpop.f32.mrb[0].mxu0
        %v1421 = vadd.f32 0.0, %v1420
        %v1422 = vpop.f32.mrb[0].mxu0
        %v1423 = vadd.f32 0.0, %v1422
        %v1424 = vpop.f32.mrb[0].mxu0
        %v1425 = vadd.f32 0.0, %v1424
        %v1426 = vpop.f32.mrb[0].mxu0
        %v1427 = vadd.f32 0.0, %v1426
        %1428 = vmatprep.mubr.bf16.mxu0 0
        %1429 = vmatmul.mubr.bf16.gmra.mrb[0].mxu0 %v1363
        %v1430 = vpop.f32.mrb[0].mxu0
        %v1431 = vadd.f32 0.0, %v1430
        %v1432 = vpop.f32.mrb[0].mxu0
        %v1433 = vadd.f32 0.0, %v1432
        %v1434 = vpop.f32.mrb[0].mxu0
        %v1435 = vadd.f32 0.0, %v1434
        %v1436 = vpop.f32.mrb[0].mxu0
        %v1437 = vadd.f32 0.0, %v1436
        %1438 = vmatprep.mubr.bf16.mxu0 0
        %1439 = vmatmul.mubr.bf16.gmra.mrb[0].mxu0 %v1366
        %v1440 = vpop.f32.mrb[0].mxu0
        %v1441 = vadd.f32 0.0, %v1440
        %v1442 = vpop.f32.mrb[0].mxu0
        %v1443 = vadd.f32 0.0, %v1442
        %v1444 = vpop.f32.mrb[0].mxu0
        %v1445 = vadd.f32 0.0, %v1444
        %v1446 = vpop.f32.mrb[0].mxu0
        %v1447 = vadd.f32 0.0, %v1446
        %1448 = vmatprep.mubr.bf16.mxu0 0
        %1449 = vmatmul.mubr.bf16.gmra.mrb[0].mxu0 %v1369
        %v1450 = vpop.f32.mrb[0].mxu0
        %v1451 = vadd.f32 0.0, %v1450
        %v1452 = vpop.f32.mrb[0].mxu0
        %v1453 = vadd.f32 0.0, %v1452
        %v1454 = vpop.f32.mrb[0].mxu0
        %v1455 = vadd.f32 0.0, %v1454
        %v1456 = vpop.f32.mrb[0].mxu0
        %v1457 = vadd.f32 0.0, %v1456
        %1458 = vmatprep.mubr.bf16.mxu0 0
        %1459 = vmatmul.mubr.bf16.gmra.mrb[0].mxu0 %v1372
        %v1460 = vpop.f32.mrb[0].mxu0
        %v1461 = vadd.f32 0.0, %v1460
        %v1462 = vpop.f32.mrb[0].mxu0
        %v1463 = vadd.f32 0.0, %v1462
        %v1464 = vpop.f32.mrb[0].mxu0
        %v1465 = vadd.f32 0.0, %v1464
        %v1466 = vpop.f32.mrb[0].mxu0
        %v1467 = vadd.f32 0.0, %v1466
        %1468 = vmatprep.mubr.bf16.mxu0 0
        %1469 = vmatmul.mubr.bf16.gmra.mrb[0].mxu0 %v1375
        %v1470 = vpop.f32.mrb[0].mxu0
        %v1471 = vadd.f32 0.0, %v1470
        %v1472 = vpop.f32.mrb[0].mxu0
        %v1473 = vadd.f32 0.0, %v1472
        %v1474 = vpop.f32.mrb[0].mxu0
        %v1475 = vadd.f32 0.0, %v1474
        %v1476 = vpop.f32.mrb[0].mxu0
        %v1477 = vadd.f32 0.0, %v1476
        %1478 = vmatprep.mubr.bf16.mxu0 0
        %1479 = vmatmul.mubr.bf16.gmra.mrb[0].mxu0 %v1378
        %v1480 = vpop.f32.mrb[0].mxu0
        %v1481 = vadd.f32 0.0, %v1480
        %v1482 = vpop.f32.mrb[0].mxu0
        %v1483 = vadd.f32 0.0, %v1482
        %v1484 = vpop.f32.mrb[0].mxu0
        %v1485 = vadd.f32 0.0, %v1484
        %v1486 = vpop.f32.mrb[0].mxu0
        %v1487 = vadd.f32 0.0, %v1486
        %1488 = vdwg.mxu0
        %v1489 = vadd.f32 %v1268, %v1421
        %v1490 = vadd.f32 %v1270, %v1423
        %v1491 = vadd.f32 %v1272, %v1425
        %v1492 = vadd.f32 %v1274, %v1427
        %v1493 = vadd.f32 %v1278, %v1431
        %v1494 = vadd.f32 %v1280, %v1433
        %v1495 = vadd.f32 %v1282, %v1435
        %v1496 = vadd.f32 %v1284, %v1437
        %v1497 = vadd.f32 %v1288, %v1441
        %v1498 = vadd.f32 %v1290, %v1443
        %v1499 = vadd.f32 %v1292, %v1445
        %v1500 = vadd.f32 %v1294, %v1447
        %v1501 = vadd.f32 %v1298, %v1451
        %v1502 = vadd.f32 %v1300, %v1453
        %v1503 = vadd.f32 %v1302, %v1455
        %v1504 = vadd.f32 %v1304, %v1457
        %v1505 = vadd.f32 %v1308, %v1461
        %v1506 = vadd.f32 %v1310, %v1463
        %v1507 = vadd.f32 %v1312, %v1465
        %v1508 = vadd.f32 %v1314, %v1467
        %v1509 = vadd.f32 %v1318, %v1471
        %v1510 = vadd.f32 %v1320, %v1473
        %v1511 = vadd.f32 %v1322, %v1475
        %v1512 = vadd.f32 %v1324, %v1477
        %v1513 = vadd.f32 %v1328, %v1481
        %v1514 = vadd.f32 %v1330, %v1483
        %v1515 = vadd.f32 %v1332, %v1485
        %v1516 = vadd.f32 %v1334, %v1487
        %v1517 = vld [vmem:[%s3] sm:$0x3]
        %v1519 = vlaneseq
        %v1520 = vshrl.u32 %v1519, 7
        %v1521 = vsub.s32 0, %v1520
        %v1522 = vrot.slane %v1517, %v1521
        %v1523 = vlaneseq
        %v1524 = vshrl.u32 %v1523, 7
        %v1525 = vsub.s32 1, %v1524
        %v1526 = vrot.slane %v1517, %v1525
        %v1529 = vadd.f32 %v1489, %v1522
        %v1530 = vadd.f32 %v1490, %v1526
        %v1531 = vadd.f32 %v1491, %v1522
        %v1532 = vadd.f32 %v1492, %v1526
        %v1533 = vadd.f32 %v1493, %v1522
        %v1534 = vadd.f32 %v1494, %v1526
        %v1535 = vadd.f32 %v1495, %v1522
        %v1536 = vadd.f32 %v1496, %v1526
        %v1537 = vadd.f32 %v1497, %v1522
        %v1538 = vadd.f32 %v1498, %v1526
        %v1539 = vadd.f32 %v1499, %v1522
        %v1540 = vadd.f32 %v1500, %v1526
        %v1541 = vadd.f32 %v1501, %v1522
        %v1542 = vadd.f32 %v1502, %v1526
        %v1543 = vadd.f32 %v1503, %v1522
        %v1544 = vadd.f32 %v1504, %v1526
        %v1545 = vadd.f32 %v1505, %v1522
        %v1546 = vadd.f32 %v1506, %v1526
        %v1547 = vadd.f32 %v1507, %v1522
        %v1548 = vadd.f32 %v1508, %v1526
        %v1549 = vadd.f32 %v1509, %v1522
        %v1550 = vadd.f32 %v1510, %v1526
        %v1551 = vadd.f32 %v1511, %v1522
        %v1552 = vadd.f32 %v1512, %v1526
        %v1553 = vadd.f32 %v1513, %v1522
        %v1554 = vadd.f32 %v1514, %v1526
        %v1555 = vadd.f32 %v1515, %v1522
        %v1556 = vadd.f32 %v1516, %v1526
        %v1557 = vmax.f32 %v1529, 0.0
        %v1558 = vmax.f32 %v1530, 0.0
        %v1559 = vmax.f32 %v1531, 0.0
        %v1560 = vmax.f32 %v1532, 0.0
        %v1561 = vmax.f32 %v1533, 0.0
        %v1562 = vmax.f32 %v1534, 0.0
        %v1563 = vmax.f32 %v1535, 0.0
        %v1564 = vmax.f32 %v1536, 0.0
        %v1565 = vmax.f32 %v1537, 0.0
        %v1566 = vmax.f32 %v1538, 0.0
        %v1567 = vmax.f32 %v1539, 0.0
        %v1568 = vmax.f32 %v1540, 0.0
        %v1569 = vmax.f32 %v1541, 0.0
        %v1570 = vmax.f32 %v1542, 0.0
        %v1571 = vmax.f32 %v1543, 0.0
        %v1572 = vmax.f32 %v1544, 0.0
        %v1573 = vmax.f32 %v1545, 0.0
        %v1574 = vmax.f32 %v1546, 0.0
        %v1575 = vmax.f32 %v1547, 0.0
        %v1576 = vmax.f32 %v1548, 0.0
        %v1577 = vmax.f32 %v1549, 0.0
        %v1578 = vmax.f32 %v1550, 0.0
        %v1579 = vmax.f32 %v1551, 0.0
        %v1580 = vmax.f32 %v1552, 0.0
        %v1581 = vmax.f32 %v1553, 0.0
        %v1582 = vmax.f32 %v1554, 0.0
        %v1583 = vmax.f32 %v1555, 0.0
        %v1584 = vmax.f32 %v1556, 0.0
        %v1585 = vpack.c.bf16 %v1559, %v1557
        %v1586 = vpack.c.bf16 %v1560, %v1558
        %v1587 = vpack.c.bf16 %v1563, %v1561
        %v1588 = vpack.c.bf16 %v1564, %v1562
        %v1589 = vpack.c.bf16 %v1567, %v1565
        %v1590 = vpack.c.bf16 %v1568, %v1566
        %v1591 = vpack.c.bf16 %v1571, %v1569
        %v1592 = vpack.c.bf16 %v1572, %v1570
        %v1593 = vpack.c.bf16 %v1575, %v1573
        %v1594 = vpack.c.bf16 %v1576, %v1574
        %v1595 = vpack.c.bf16 %v1579, %v1577
        %v1596 = vpack.c.bf16 %v1580, %v1578
        %v1597 = vpack.c.bf16 %v1583, %v1581
        %v1598 = vpack.c.bf16 %v1584, %v1582
        %v1599 = vld [vmem:[#allocation2] sm:$0xf]
        %v1600 = vld [vmem:[#allocation2 + $0x4] sm:$0xf]
        %v1601 = vld [vmem:[#allocation2 + $0x8] sm:$0xf]
        %v1602 = vld [vmem:[#allocation2 + $0xc] sm:$0xf]
        %v1603 = vld [vmem:[#allocation2 + $0x10] sm:$0xf]
        %v1604 = vld [vmem:[#allocation2 + $0x14] sm:$0xf]
        %v1605 = vld [vmem:[#allocation2 + $0x18] sm:$0xf]
        %v1606 = vld [vmem:[#allocation2 + $0x1c] sm:$0xf]
        %v1607 = vld [vmem:[#allocation2 + $0x20] sm:$0xf]
        %v1608 = vld [vmem:[#allocation2 + $0x24] sm:$0xf]
        %v1609 = vld [vmem:[#allocation2 + $0x28] sm:$0xf]
        %v1610 = vld [vmem:[#allocation2 + $0x2c] sm:$0xf]
        %v1611 = vld [vmem:[#allocation2 + $0x30] sm:$0xf]
        %v1612 = vld [vmem:[#allocation2 + $0x34] sm:$0xf]
        %v1613 = vld [vmem:[#allocation2 + $0x38] sm:$0xf]
        %v1614 = vld [vmem:[#allocation2 + $0x3c] sm:$0xf]
        %v1615 = vld [vmem:[#allocation2 + $0x40] sm:$0xf]
        %v1616 = vld [vmem:[#allocation2 + $0x44] sm:$0xf]
        %v1617 = vld [vmem:[#allocation2 + $0x48] sm:$0xf]
        %v1618 = vld [vmem:[#allocation2 + $0x4c] sm:$0xf]
        %v1619 = vld [vmem:[#allocation2 + $0x50] sm:$0xf]
        %v1641 = vunpack.c.l.b16 %v1599
        %v1642 = vunpack.c.l.b16 %v1600
        %v1643 = vunpack.c.l.b16 %v1601
        %v1644 = vunpack.c.l.b16 %v1602
        %v1645 = vunpack.c.l.b16 %v1603
        %v1646 = vunpack.c.l.b16 %v1604
        %v1647 = vunpack.c.l.b16 %v1605
        %v1648 = vunpack.c.l.b16 %v1606
        %v1649 = vunpack.c.l.b16 %v1607
        %v1650 = vunpack.c.l.b16 %v1608
        %v1651 = vunpack.c.l.b16 %v1609
        %v1652 = vunpack.c.l.b16 %v1610
        %v1653 = vunpack.c.l.b16 %v1611
        %v1654 = vunpack.c.l.b16 %v1612
        %v1655 = vunpack.c.l.b16 %v1613
        %v1656 = vunpack.c.l.b16 %v1614
        %v1657 = vunpack.c.l.b16 %v1615
        %v1658 = vunpack.c.l.b16 %v1616
        %v1659 = vunpack.c.l.b16 %v1617
        %v1660 = vunpack.c.l.b16 %v1618
        %v1661 = vunpack.c.l.b16 %v1619
        %v1662 = vpack.c.b16 %v1642, %v1641
        %v1663 = vpack.c.b16 %v1644, %v1643
        %v1664 = vpack.c.b16 %v1646, %v1645
        %v1665 = vpack.c.b16 %v1648, %v1647
        %v1666 = vpack.c.b16 %v1650, %v1649
        %v1667 = vpack.c.b16 %v1652, %v1651
        %v1668 = vpack.c.b16 %v1654, %v1653
        %v1669 = vpack.c.b16 %v1656, %v1655
        %v1670 = vpack.c.b16 %v1658, %v1657
        %v1671 = vpack.c.b16 %v1660, %v1659
        %v1672 = vpack.c.b16 %v1661, %v1661
        %vm1673 = vcmask 916480
        %v1675 = vsel %vm1673, %v1662, 0
        %v1678 = vsel %vm1673, %v1663, 0
        %v1681 = vsel %vm1673, %v1664, 0
        %v1684 = vsel %vm1673, %v1665, 0
        %v1687 = vsel %vm1673, %v1666, 0
        %v1690 = vsel %vm1673, %v1667, 0
        %v1693 = vsel %vm1673, %v1668, 0
        %v1696 = vsel %vm1673, %v1669, 0
        %v1699 = vsel %vm1673, %v1670, 0
        %v1702 = vsel %vm1673, %v1671, 0
        %v1705 = vsel %vm1673, %v1672, 0
        %1707 = vmatprep.subr.bf16.mxu0 %v1586
        %1708 = vmatpush1.bf16.msra.mxu0 %v1585
        %1709 = vmatprep.subr.bf16.mxu0 %v1588
        %1710 = vmatpush1.bf16.msra.mxu0 %v1587
        %1711 = vmatprep.subr.bf16.mxu0 %v1590
        %1712 = vmatpush1.bf16.msra.mxu0 %v1589
        %1713 = vmatprep.subr.bf16.mxu0 %v1592
        %1714 = vmatpush1.bf16.msra.mxu0 %v1591
        %1715 = vmatprep.subr.bf16.mxu0 %v1594
        %1716 = vmatpush1.bf16.msra.mxu0 %v1593
        %1717 = vmatprep.subr.bf16.mxu0 %v1596
        %1718 = vmatpush1.bf16.msra.mxu0 %v1595
        %1719 = vmatprep.subr.bf16.mxu0 %v1598
        %1720 = vmatpush1.bf16.msra.mxu0 %v1597
        %1721 = vmatprep.subr.bf16.mxu0 0
        %1722 = vmatpush1.bf16.msra.mxu0 0
        %1723 = vmatprep.subr.bf16.mxu0 0
        %1724 = vmatpush1.bf16.msra.mxu0 0
        %1725 = vmatprep.subr.bf16.mxu0 0
        %1726 = vmatpush1.bf16.msra.mxu0 0
        %1727 = vmatprep.subr.bf16.mxu0 0
        %1728 = vmatpush1.bf16.msra.mxu0 0
        %1729 = vmatprep.subr.bf16.mxu0 0
        %1730 = vmatpush1.bf16.msra.mxu0 0
        %1731 = vmatprep.subr.bf16.mxu0 0
        %1732 = vmatpush1.bf16.msra.mxu0 0
        %1733 = vmatprep.subr.bf16.mxu0 0
        %1734 = vmatpush1.bf16.msra.mxu0 0
        %1735 = vmatprep.subr.bf16.mxu0 0
        %1736 = vmatpush1.bf16.msra.mxu0 0
        %1737 = vmatprep.subr.bf16.mxu0 0
        %1738 = vmatpush1.bf16.msra.mxu0 0
        %1739 = vmatprep.mubr.bf16.mxu0 0
        %1740 = vmatmul.mubr.bf16.gmra.mrb[0].mxu0 %v1675
        %v1741 = vpop.f32.mrb[0].mxu0
        %v1742 = vadd.f32 0.0, %v1741
        %v1743 = vpop.f32.mrb[0].mxu0
        %v1744 = vadd.f32 0.0, %v1743
        %v1745 = vpop.f32.mrb[0].mxu0
        %v1746 = vadd.f32 0.0, %v1745
        %v1747 = vpop.f32.mrb[0].mxu0
        %v1748 = vadd.f32 0.0, %v1747
        %1749 = vmatprep.mubr.bf16.mxu0 0
        %1750 = vmatmul.mubr.bf16.gmra.mrb[0].mxu0 %v1678
        %v1751 = vpop.f32.mrb[0].mxu0
        %v1752 = vadd.f32 0.0, %v1751
        %v1753 = vpop.f32.mrb[0].mxu0
        %v1754 = vadd.f32 0.0, %v1753
        %v1755 = vpop.f32.mrb[0].mxu0
        %v1756 = vadd.f32 0.0, %v1755
        %v1757 = vpop.f32.mrb[0].mxu0
        %v1758 = vadd.f32 0.0, %v1757
        %1759 = vmatprep.mubr.bf16.mxu0 0
        %1760 = vmatmul.mubr.bf16.gmra.mrb[0].mxu0 %v1681
        %v1761 = vpop.f32.mrb[0].mxu0
        %v1762 = vadd.f32 0.0, %v1761
        %v1763 = vpop.f32.mrb[0].mxu0
        %v1764 = vadd.f32 0.0, %v1763
        %v1765 = vpop.f32.mrb[0].mxu0
        %v1766 = vadd.f32 0.0, %v1765
        %v1767 = vpop.f32.mrb[0].mxu0
        %v1768 = vadd.f32 0.0, %v1767
        %1769 = vmatprep.mubr.bf16.mxu0 0
        %1770 = vmatmul.mubr.bf16.gmra.mrb[0].mxu0 %v1684
        %v1771 = vpop.f32.mrb[0].mxu0
        %v1772 = vadd.f32 0.0, %v1771
        %v1773 = vpop.f32.mrb[0].mxu0
        %v1774 = vadd.f32 0.0, %v1773
        %v1775 = vpop.f32.mrb[0].mxu0
        %v1776 = vadd.f32 0.0, %v1775
        %v1777 = vpop.f32.mrb[0].mxu0
        %v1778 = vadd.f32 0.0, %v1777
        %1779 = vmatprep.mubr.bf16.mxu0 0
        %1780 = vmatmul.mubr.bf16.gmra.mrb[0].mxu0 %v1687
        %v1781 = vpop.f32.mrb[0].mxu0
        %v1782 = vadd.f32 0.0, %v1781
        %v1783 = vpop.f32.mrb[0].mxu0
        %v1784 = vadd.f32 0.0, %v1783
        %v1785 = vpop.f32.mrb[0].mxu0
        %v1786 = vadd.f32 0.0, %v1785
        %v1787 = vpop.f32.mrb[0].mxu0
        %v1788 = vadd.f32 0.0, %v1787
        %1789 = vmatprep.mubr.bf16.mxu0 0
        %1790 = vmatmul.mubr.bf16.gmra.mrb[0].mxu0 %v1690
        %v1791 = vpop.f32.mrb[0].mxu0
        %v1792 = vadd.f32 0.0, %v1791
        %v1793 = vpop.f32.mrb[0].mxu0
        %v1794 = vadd.f32 0.0, %v1793
        %v1795 = vpop.f32.mrb[0].mxu0
        %v1796 = vadd.f32 0.0, %v1795
        %v1797 = vpop.f32.mrb[0].mxu0
        %v1798 = vadd.f32 0.0, %v1797
        %1799 = vmatprep.mubr.bf16.mxu0 0
        %1800 = vmatmul.mubr.bf16.gmra.mrb[0].mxu0 %v1693
        %v1801 = vpop.f32.mrb[0].mxu0
        %v1802 = vadd.f32 0.0, %v1801
        %v1803 = vpop.f32.mrb[0].mxu0
        %v1804 = vadd.f32 0.0, %v1803
        %v1805 = vpop.f32.mrb[0].mxu0
        %v1806 = vadd.f32 0.0, %v1805
        %v1807 = vpop.f32.mrb[0].mxu0
        %v1808 = vadd.f32 0.0, %v1807
        %1809 = vmatprep.mubr.bf16.mxu0 0
        %1810 = vmatmul.mubr.bf16.gmra.mrb[0].mxu0 %v1696
        %v1811 = vpop.f32.mrb[0].mxu0
        %v1812 = vadd.f32 0.0, %v1811
        %v1813 = vpop.f32.mrb[0].mxu0
        %v1814 = vadd.f32 0.0, %v1813
        %v1815 = vpop.f32.mrb[0].mxu0
        %v1816 = vadd.f32 0.0, %v1815
        %v1817 = vpop.f32.mrb[0].mxu0
        %v1818 = vadd.f32 0.0, %v1817
        %1819 = vmatprep.mubr.bf16.mxu0 0
        %1820 = vmatmul.mubr.bf16.gmra.mrb[0].mxu0 %v1699
        %v1821 = vpop.f32.mrb[0].mxu0
        %v1822 = vadd.f32 0.0, %v1821
        %v1823 = vpop.f32.mrb[0].mxu0
        %v1824 = vadd.f32 0.0, %v1823
        %v1825 = vpop.f32.mrb[0].mxu0
        %v1826 = vadd.f32 0.0, %v1825
        %v1827 = vpop.f32.mrb[0].mxu0
        %v1828 = vadd.f32 0.0, %v1827
        %1829 = vmatprep.mubr.bf16.mxu0 0
        %1830 = vmatmul.mubr.bf16.gmra.mrb[0].mxu0 %v1702
        %v1831 = vpop.f32.mrb[0].mxu0
        %v1832 = vadd.f32 0.0, %v1831
        %v1833 = vpop.f32.mrb[0].mxu0
        %v1834 = vadd.f32 0.0, %v1833
        %v1835 = vpop.f32.mrb[0].mxu0
        %v1836 = vadd.f32 0.0, %v1835
        %v1837 = vpop.f32.mrb[0].mxu0
        %v1838 = vadd.f32 0.0, %v1837
        %1839 = vmatprep.mubr.bf16.mxu0 0
        %1840 = vmatmul.mubr.bf16.gmra.mrb[0].mxu0 %v1705
        %v1841 = vpop.f32.mrb[0].mxu0
        %v1842 = vadd.f32 0.0, %v1841
        %v1843 = vpop.f32.mrb[0].mxu0
        %v1844 = vadd.f32 0.0, %v1843
        %v1845 = vpop.f32.mrb[0].mxu0
        %v1846 = vpop.f32.mrb[0].mxu0
        %1847 = vdwg.mxu0
        %v1848 = vpack.c.bf16 %v1746, %v1742
        %v1849 = vpack.c.bf16 %v1748, %v1744
        %v1850 = vpack.c.bf16 %v1756, %v1752
        %v1851 = vpack.c.bf16 %v1758, %v1754
        %v1852 = vpack.c.bf16 %v1766, %v1762
        %v1853 = vpack.c.bf16 %v1768, %v1764
        %v1854 = vpack.c.bf16 %v1776, %v1772
        %v1855 = vpack.c.bf16 %v1778, %v1774
        %v1856 = vpack.c.bf16 %v1786, %v1782
        %v1857 = vpack.c.bf16 %v1788, %v1784
        %v1858 = vpack.c.bf16 %v1796, %v1792
        %v1859 = vpack.c.bf16 %v1798, %v1794
        %v1860 = vpack.c.bf16 %v1806, %v1802
        %v1861 = vpack.c.bf16 %v1808, %v1804
        %v1862 = vpack.c.bf16 %v1816, %v1812
        %v1863 = vpack.c.bf16 %v1818, %v1814
        %v1864 = vpack.c.bf16 %v1826, %v1822
        %v1865 = vpack.c.bf16 %v1828, %v1824
        %v1866 = vpack.c.bf16 %v1836, %v1832
        %v1867 = vpack.c.bf16 %v1838, %v1834
        %v1868 = vpack.c.bf16 %v1842, %v1842
        %v1869 = vpack.c.bf16 %v1844, %v1844
        %v1870 = vld [vmem:[#allocation5] sm:$0xf]
        %v1871 = vld [vmem:[#allocation5 + $0x4] sm:$0xf]
        %v1872 = vld [vmem:[#allocation5 + $0x8] sm:$0xf]
        %v1873 = vld [vmem:[#allocation5 + $0xc] sm:$0xf]
        %v1874 = vld [vmem:[#allocation5 + $0x10] sm:$0xf]
        %v1875 = vld [vmem:[#allocation5 + $0x14] sm:$0xf]
        %v1876 = vld [vmem:[#allocation5 + $0x18] sm:$0xf]
        %v1877 = vld [vmem:[#allocation5 + $0x1c] sm:$0xf]
        %v1878 = vld [vmem:[#allocation5 + $0x20] sm:$0xf]
        %v1879 = vld [vmem:[#allocation5 + $0x24] sm:$0xf]
        %v1880 = vld [vmem:[#allocation5 + $0x28] sm:$0xf]
        %v1881 = vld [vmem:[#allocation5 + $0x2c] sm:$0xf]
        %v1882 = vld [vmem:[#allocation5 + $0x30] sm:$0xf]
        %v1883 = vld [vmem:[#allocation5 + $0x34] sm:$0xf]
        %v1884 = vld [vmem:[#allocation5 + $0x38] sm:$0xf]
        %v1885 = vld [vmem:[#allocation5 + $0x3c] sm:$0xf]
        %v1886 = vld [vmem:[#allocation5 + $0x40] sm:$0xf]
        %v1887 = vld [vmem:[#allocation5 + $0x44] sm:$0xf]
        %v1888 = vld [vmem:[#allocation5 + $0x48] sm:$0xf]
        %v1889 = vld [vmem:[#allocation5 + $0x4c] sm:$0xf]
        %v1890 = vld [vmem:[#allocation5 + $0x50] sm:$0xf]
        %v1891 = vld [vmem:[#allocation5 + $0x54] sm:$0xf]
        %v1892 = vld [vmem:[#allocation5 + $0x58] sm:$0xf]
        %v1893 = vld [vmem:[#allocation5 + $0x5c] sm:$0xf]
        %v1894 = vld [vmem:[#allocation5 + $0x60] sm:$0xf]
        %v1895 = vld [vmem:[#allocation5 + $0x64] sm:$0xf]
        %v1896 = vld [vmem:[#allocation5 + $0x68] sm:$0xf]
        %v1897 = vld [vmem:[#allocation5 + $0x6c] sm:$0xf]
        %s1898 = scalar_lea.vmem [#allocation5], 112
        %v1899 = vld [vmem:[%s1898] sm:$0xf]
        %v1900 = vld [vmem:[%s1898 + $0x4] sm:$0xf]
        %v1901 = vld [vmem:[%s1898 + $0x8] sm:$0xf]
        %v1902 = vld [vmem:[%s1898 + $0xc] sm:$0xf]
        %v1903 = vld [vmem:[%s1898 + $0x10] sm:$0xf]
        %v1904 = vld [vmem:[%s1898 + $0x14] sm:$0xf]
        %v1905 = vld [vmem:[%s1898 + $0x18] sm:$0xf]
        %v1906 = vld [vmem:[%s1898 + $0x1c] sm:$0xf]
        %v1907 = vld [vmem:[%s1898 + $0x20] sm:$0xf]
        %v1908 = vld [vmem:[%s1898 + $0x24] sm:$0xf]
        %v1909 = vld [vmem:[%s1898 + $0x28] sm:$0xf]
        %v1910 = vld [vmem:[%s1898 + $0x2c] sm:$0xf]
        %v1911 = vld [vmem:[%s1898 + $0x30] sm:$0xf]
        %v1912 = vld [vmem:[%s1898 + $0x34] sm:$0xf]
        %v1913 = vld [vmem:[%s1898 + $0x38] sm:$0xf]
        %v1914 = vld [vmem:[%s1898 + $0x3c] sm:$0xf]
        %v1915 = vld [vmem:[%s1898 + $0x40] sm:$0xf]
        %v1916 = vld [vmem:[%s1898 + $0x44] sm:$0xf]
        %v1917 = vld [vmem:[%s1898 + $0x48] sm:$0xf]
        %v1918 = vld [vmem:[%s1898 + $0x4c] sm:$0xf]
        %v1919 = vld [vmem:[%s1898 + $0x50] sm:$0xf]
        %v1920 = vld [vmem:[%s1898 + $0x54] sm:$0xf]
        %v1921 = vld [vmem:[%s1898 + $0x58] sm:$0xf]
        %v1922 = vld [vmem:[%s1898 + $0x5c] sm:$0xf]
        %v1923 = vld [vmem:[%s1898 + $0x60] sm:$0xf]
        %v1924 = vld [vmem:[%s1898 + $0x64] sm:$0xf]
        %v1925 = vld [vmem:[%s1898 + $0x68] sm:$0xf]
        %v1926 = vld [vmem:[%s1898 + $0x6c] sm:$0xf]
        %vm1935 = vcmask 1043456
        %v1936 = vrot.slane %v1854, 4
        %v1937 = vrot.slane %v1856, 4
        %v1938 = vsel %vm1935, %v1936, %v1937
        %v1939 = vrot.slane %v1855, 4
        %v1940 = vrot.slane %v1857, 4
        %v1941 = vsel %vm1935, %v1939, %v1940
        %v1942 = vrot.slane %v1858, 4
        %v1943 = vsel %vm1935, %v1937, %v1942
        %v1944 = vrot.slane %v1859, 4
        %v1945 = vsel %vm1935, %v1940, %v1944
        %v1946 = vrot.slane %v1860, 4
        %v1947 = vsel %vm1935, %v1942, %v1946
        %v1948 = vrot.slane %v1861, 4
        %v1949 = vsel %vm1935, %v1944, %v1948
        %v1982 = vunpack.c.l.b16 %v1899
        %v1983 = vunpack.c.l.b16 %v1900
        %v1984 = vunpack.c.l.b16 %v1901
        %v1985 = vunpack.c.l.b16 %v1902
        %v1986 = vunpack.c.l.b16 %v1903
        %v1987 = vunpack.c.l.b16 %v1904
        %v1988 = vunpack.c.l.b16 %v1905
        %v1989 = vunpack.c.l.b16 %v1906
        %v1990 = vunpack.c.l.b16 %v1907
        %v1991 = vunpack.c.l.b16 %v1908
        %v1992 = vunpack.c.l.b16 %v1909
        %v1993 = vunpack.c.l.b16 %v1910
        %v1994 = vunpack.c.l.b16 %v1911
        %v1995 = vunpack.c.l.b16 %v1912
        %v1996 = vunpack.c.l.b16 %v1913
        %v1997 = vunpack.c.l.b16 %v1914
        %v1998 = vunpack.c.l.b16 %v1915
        %v1999 = vunpack.c.l.b16 %v1916
        %v2000 = vunpack.c.l.b16 %v1917
        %v2001 = vunpack.c.l.b16 %v1918
        %v2002 = vunpack.c.l.b16 %v1919
        %v2003 = vunpack.c.l.b16 %v1920
        %v2004 = vunpack.c.l.b16 %v1921
        %v2005 = vunpack.c.l.b16 %v1922
        %v2006 = vunpack.c.l.b16 %v1923
        %v2007 = vunpack.c.l.b16 %v1924
        %v2008 = vunpack.c.l.b16 %v1925
        %v2009 = vunpack.c.l.b16 %v1926
        %v2010 = vpack.c.b16 %v1983, %v1982
        %v2011 = vpack.c.b16 %v1985, %v1984
        %v2012 = vpack.c.b16 %v1987, %v1986
        %v2013 = vpack.c.b16 %v1989, %v1988
        %v2014 = vpack.c.b16 %v1991, %v1990
        %v2015 = vpack.c.b16 %v1993, %v1992
        %v2016 = vpack.c.b16 %v1995, %v1994
        %v2017 = vpack.c.b16 %v1997, %v1996
        %v2018 = vpack.c.b16 %v1999, %v1998
        %v2019 = vpack.c.b16 %v2001, %v2000
        %v2020 = vpack.c.b16 %v2003, %v2002
        %v2021 = vpack.c.b16 %v2005, %v2004
        %v2022 = vpack.c.b16 %v2007, %v2006
        %v2023 = vpack.c.b16 %v2009, %v2008
        %v2039 = vsel %vm743, %v1941, 0
        %v2042 = vsel %vm743, %v1945, 0
        %v2045 = vsel %vm743, %v1949, 0
        %v2048 = vsel %vm743, %v1948, 0
        %2050 = vmatprep.subr.bf16.mxu0 0
        %2051 = vmatpush1.bf16.msra.mxu0 %v2010
        %2052 = vmatprep.subr.bf16.mxu0 0
        %2053 = vmatpush1.bf16.msra.mxu0 %v2011
        %2054 = vmatprep.subr.bf16.mxu0 0
        %2055 = vmatpush1.bf16.msra.mxu0 %v2012
        %2056 = vmatprep.subr.bf16.mxu0 0
        %2057 = vmatpush1.bf16.msra.mxu0 %v2013
        %2058 = vmatprep.subr.bf16.mxu0 0
        %2059 = vmatpush1.bf16.msra.mxu0 %v2014
        %2060 = vmatprep.subr.bf16.mxu0 0
        %2061 = vmatpush1.bf16.msra.mxu0 %v2015
        %2062 = vmatprep.subr.bf16.mxu0 0
        %2063 = vmatpush1.bf16.msra.mxu0 %v2016
        %2064 = vmatprep.subr.bf16.mxu0 0
        %2065 = vmatpush1.bf16.msra.mxu0 %v2017
        %2066 = vmatprep.subr.bf16.mxu0 0
        %2067 = vmatpush1.bf16.msra.mxu0 %v2018
        %2068 = vmatprep.subr.bf16.mxu0 0
        %2069 = vmatpush1.bf16.msra.mxu0 %v2019
        %2070 = vmatprep.subr.bf16.mxu0 0
        %2071 = vmatpush1.bf16.msra.mxu0 %v2020
        %2072 = vmatprep.subr.bf16.mxu0 0
        %2073 = vmatpush1.bf16.msra.mxu0 %v2021
        %2074 = vmatprep.subr.bf16.mxu0 0
        %2075 = vmatpush1.bf16.msra.mxu0 %v2022
        %2076 = vmatprep.subr.bf16.mxu0 0
        %2077 = vmatpush1.bf16.msra.mxu0 %v2023
        %2078 = vmatprep.subr.bf16.mxu0 0
        %2079 = vmatpush1.bf16.msra.mxu0 0
        %2080 = vmatprep.subr.bf16.mxu0 0
        %2081 = vmatpush1.bf16.msra.mxu0 0
        %2082 = vmatprep.mubr.bf16.mxu0 %v2039
        %2083 = vmatmul.mubr.bf16.gmra.mrb[0].mxu0 %v1938
        %v2084 = vpop.f32.mrb[0].mxu0
        %v2085 = vadd.f32 0.0, %v2084
        %v2086 = vpop.f32.mrb[0].mxu0
        %v2087 = vpop.f32.mrb[0].mxu0
        %v2088 = vadd.f32 0.0, %v2087
        %v2089 = vpop.f32.mrb[0].mxu0
        %2090 = vmatprep.mubr.bf16.mxu0 %v2042
        %2091 = vmatmul.mubr.bf16.gmra.mrb[0].mxu0 %v1943
        %v2092 = vpop.f32.mrb[0].mxu0
        %v2093 = vadd.f32 0.0, %v2092
        %v2094 = vpop.f32.mrb[0].mxu0
        %v2095 = vpop.f32.mrb[0].mxu0
        %v2096 = vadd.f32 0.0, %v2095
        %v2097 = vpop.f32.mrb[0].mxu0
        %2098 = vmatprep.mubr.bf16.mxu0 %v2045
        %2099 = vmatmul.mubr.bf16.gmra.mrb[0].mxu0 %v1947
        %v2100 = vpop.f32.mrb[0].mxu0
        %v2101 = vadd.f32 0.0, %v2100
        %v2102 = vpop.f32.mrb[0].mxu0
        %v2103 = vpop.f32.mrb[0].mxu0
        %v2104 = vadd.f32 0.0, %v2103
        %v2105 = vpop.f32.mrb[0].mxu0
        %2106 = vmatprep.mubr.bf16.mxu0 %v2048
        %2107 = vmatmul.mubr.bf16.gmra.mrb[0].mxu0 %v1946
        %v2108 = vpop.f32.mrb[0].mxu0
        %v2109 = vadd.f32 0.0, %v2108
        %v2110 = vpop.f32.mrb[0].mxu0
        %v2111 = vpop.f32.mrb[0].mxu0
        %v2112 = vpop.f32.mrb[0].mxu0
        %2113 = vdwg.mxu0
        %v2142 = vunpack.c.l.b16 %v1870
        %v2143 = vunpack.c.l.b16 %v1871
        %v2144 = vunpack.c.l.b16 %v1872
        %v2145 = vunpack.c.l.b16 %v1873
        %v2146 = vunpack.c.l.b16 %v1874
        %v2147 = vunpack.c.l.b16 %v1875
        %v2148 = vunpack.c.l.b16 %v1876
        %v2149 = vunpack.c.l.b16 %v1877
        %v2150 = vunpack.c.l.b16 %v1878
        %v2151 = vunpack.c.l.b16 %v1879
        %v2152 = vunpack.c.l.b16 %v1880
        %v2153 = vunpack.c.l.b16 %v1881
        %v2154 = vunpack.c.l.b16 %v1882
        %v2155 = vunpack.c.l.b16 %v1883
        %v2156 = vunpack.c.l.b16 %v1884
        %v2157 = vunpack.c.l.b16 %v1885
        %v2158 = vunpack.c.l.b16 %v1886
        %v2159 = vunpack.c.l.b16 %v1887
        %v2160 = vunpack.c.l.b16 %v1888
        %v2161 = vunpack.c.l.b16 %v1889
        %v2162 = vunpack.c.l.b16 %v1890
        %v2163 = vunpack.c.l.b16 %v1891
        %v2164 = vunpack.c.l.b16 %v1892
        %v2165 = vunpack.c.l.b16 %v1893
        %v2166 = vunpack.c.l.b16 %v1894
        %v2167 = vunpack.c.l.b16 %v1895
        %v2168 = vunpack.c.l.b16 %v1896
        %v2169 = vunpack.c.l.b16 %v1897
        %v2170 = vpack.c.b16 %v2143, %v2142
        %v2171 = vpack.c.b16 %v2145, %v2144
        %v2172 = vpack.c.b16 %v2147, %v2146
        %v2173 = vpack.c.b16 %v2149, %v2148
        %v2174 = vpack.c.b16 %v2151, %v2150
        %v2175 = vpack.c.b16 %v2153, %v2152
        %v2176 = vpack.c.b16 %v2155, %v2154
        %v2177 = vpack.c.b16 %v2157, %v2156
        %v2178 = vpack.c.b16 %v2159, %v2158
        %v2179 = vpack.c.b16 %v2161, %v2160
        %v2180 = vpack.c.b16 %v2163, %v2162
        %v2181 = vpack.c.b16 %v2165, %v2164
        %v2182 = vpack.c.b16 %v2167, %v2166
        %v2183 = vpack.c.b16 %v2169, %v2168
        %v2199 = vsel %vm743, %v1849, 0
        %v2202 = vsel %vm743, %v1851, 0
        %v2205 = vsel %vm743, %v1853, 0
        %v2208 = vsel %vm743, %v1855, 0
        %2210 = vmatprep.subr.bf16.mxu0 0
        %2211 = vmatpush1.bf16.msra.mxu0 %v2170
        %2212 = vmatprep.subr.bf16.mxu0 0
        %2213 = vmatpush1.bf16.msra.mxu0 %v2171
        %2214 = vmatprep.subr.bf16.mxu0 0
        %2215 = vmatpush1.bf16.msra.mxu0 %v2172
        %2216 = vmatprep.subr.bf16.mxu0 0
        %2217 = vmatpush1.bf16.msra.mxu0 %v2173
        %2218 = vmatprep.subr.bf16.mxu0 0
        %2219 = vmatpush1.bf16.msra.mxu0 %v2174
        %2220 = vmatprep.subr.bf16.mxu0 0
        %2221 = vmatpush1.bf16.msra.mxu0 %v2175
        %2222 = vmatprep.subr.bf16.mxu0 0
        %2223 = vmatpush1.bf16.msra.mxu0 %v2176
        %2224 = vmatprep.subr.bf16.mxu0 0
        %2225 = vmatpush1.bf16.msra.mxu0 %v2177
        %2226 = vmatprep.subr.bf16.mxu0 0
        %2227 = vmatpush1.bf16.msra.mxu0 %v2178
        %2228 = vmatprep.subr.bf16.mxu0 0
        %2229 = vmatpush1.bf16.msra.mxu0 %v2179
        %2230 = vmatprep.subr.bf16.mxu0 0
        %2231 = vmatpush1.bf16.msra.mxu0 %v2180
        %2232 = vmatprep.subr.bf16.mxu0 0
        %2233 = vmatpush1.bf16.msra.mxu0 %v2181
        %2234 = vmatprep.subr.bf16.mxu0 0
        %2235 = vmatpush1.bf16.msra.mxu0 %v2182
        %2236 = vmatprep.subr.bf16.mxu0 0
        %2237 = vmatpush1.bf16.msra.mxu0 %v2183
        %2238 = vmatprep.subr.bf16.mxu0 0
        %2239 = vmatpush1.bf16.msra.mxu0 0
        %2240 = vmatprep.subr.bf16.mxu0 0
        %2241 = vmatpush1.bf16.msra.mxu0 0
        %2242 = vmatprep.mubr.bf16.mxu0 %v2199
        %2243 = vmatmul.mubr.bf16.gmra.mrb[0].mxu0 %v1848
        %v2244 = vpop.f32.mrb[0].mxu0
        %v2245 = vadd.f32 %v2085, %v2244
        %v2246 = vpop.f32.mrb[0].mxu0
        %v2247 = vpop.f32.mrb[0].mxu0
        %v2248 = vadd.f32 %v2088, %v2247
        %v2249 = vpop.f32.mrb[0].mxu0
        %2250 = vmatprep.mubr.bf16.mxu0 %v2202
        %2251 = vmatmul.mubr.bf16.gmra.mrb[0].mxu0 %v1850
        %v2252 = vpop.f32.mrb[0].mxu0
        %v2253 = vadd.f32 %v2093, %v2252
        %v2254 = vpop.f32.mrb[0].mxu0
        %v2255 = vpop.f32.mrb[0].mxu0
        %v2256 = vadd.f32 %v2096, %v2255
        %v2257 = vpop.f32.mrb[0].mxu0
        %2258 = vmatprep.mubr.bf16.mxu0 %v2205
        %2259 = vmatmul.mubr.bf16.gmra.mrb[0].mxu0 %v1852
        %v2260 = vpop.f32.mrb[0].mxu0
        %v2261 = vadd.f32 %v2101, %v2260
        %v2262 = vpop.f32.mrb[0].mxu0
        %v2263 = vpop.f32.mrb[0].mxu0
        %v2264 = vadd.f32 %v2104, %v2263
        %v2265 = vpop.f32.mrb[0].mxu0
        %2266 = vmatprep.mubr.bf16.mxu0 %v2208
        %2267 = vmatmul.mubr.bf16.gmra.mrb[0].mxu0 %v1854
        %v2268 = vpop.f32.mrb[0].mxu0
        %v2269 = vadd.f32 %v2109, %v2268
        %v2270 = vpop.f32.mrb[0].mxu0
        %v2271 = vpop.f32.mrb[0].mxu0
        %v2272 = vpop.f32.mrb[0].mxu0
        %2273 = vdwg.mxu0
        %s2274 = scalar_lea.vmem [#allocation5], 224
        %v2275 = vld [vmem:[%s2274] sm:$0xf]
        %v2276 = vld [vmem:[%s2274 + $0x4] sm:$0xf]
        %v2277 = vld [vmem:[%s2274 + $0x8] sm:$0xf]
        %v2278 = vld [vmem:[%s2274 + $0xc] sm:$0xf]
        %v2279 = vld [vmem:[%s2274 + $0x10] sm:$0xf]
        %v2280 = vld [vmem:[%s2274 + $0x14] sm:$0xf]
        %v2281 = vld [vmem:[%s2274 + $0x18] sm:$0xf]
        %v2282 = vld [vmem:[%s2274 + $0x1c] sm:$0xf]
        %v2283 = vld [vmem:[%s2274 + $0x20] sm:$0xf]
        %v2284 = vld [vmem:[%s2274 + $0x24] sm:$0xf]
        %v2285 = vld [vmem:[%s2274 + $0x28] sm:$0xf]
        %v2286 = vld [vmem:[%s2274 + $0x2c] sm:$0xf]
        %v2287 = vld [vmem:[%s2274 + $0x30] sm:$0xf]
        %v2288 = vld [vmem:[%s2274 + $0x34] sm:$0xf]
        %v2289 = vld [vmem:[%s2274 + $0x38] sm:$0xf]
        %v2290 = vld [vmem:[%s2274 + $0x3c] sm:$0xf]
        %v2291 = vld [vmem:[%s2274 + $0x40] sm:$0xf]
        %v2292 = vld [vmem:[%s2274 + $0x44] sm:$0xf]
        %v2293 = vld [vmem:[%s2274 + $0x48] sm:$0xf]
        %v2294 = vld [vmem:[%s2274 + $0x4c] sm:$0xf]
        %v2295 = vld [vmem:[%s2274 + $0x50] sm:$0xf]
        %v2296 = vld [vmem:[%s2274 + $0x54] sm:$0xf]
        %v2297 = vld [vmem:[%s2274 + $0x58] sm:$0xf]
        %v2298 = vld [vmem:[%s2274 + $0x5c] sm:$0xf]
        %v2299 = vld [vmem:[%s2274 + $0x60] sm:$0xf]
        %v2300 = vld [vmem:[%s2274 + $0x64] sm:$0xf]
        %v2301 = vld [vmem:[%s2274 + $0x68] sm:$0xf]
        %v2302 = vld [vmem:[%s2274 + $0x6c] sm:$0xf]
        %v2331 = vunpack.c.l.b16 %v2275
        %v2332 = vunpack.c.l.b16 %v2276
        %v2333 = vunpack.c.l.b16 %v2277
        %v2334 = vunpack.c.l.b16 %v2278
        %v2335 = vunpack.c.l.b16 %v2279
        %v2336 = vunpack.c.l.b16 %v2280
        %v2337 = vunpack.c.l.b16 %v2281
        %v2338 = vunpack.c.l.b16 %v2282
        %v2339 = vunpack.c.l.b16 %v2283
        %v2340 = vunpack.c.l.b16 %v2284
        %v2341 = vunpack.c.l.b16 %v2285
        %v2342 = vunpack.c.l.b16 %v2286
        %v2343 = vunpack.c.l.b16 %v2287
        %v2344 = vunpack.c.l.b16 %v2288
        %v2345 = vunpack.c.l.b16 %v2289
        %v2346 = vunpack.c.l.b16 %v2290
        %v2347 = vunpack.c.l.b16 %v2291
        %v2348 = vunpack.c.l.b16 %v2292
        %v2349 = vunpack.c.l.b16 %v2293
        %v2350 = vunpack.c.l.b16 %v2294
        %v2351 = vunpack.c.l.b16 %v2295
        %v2352 = vunpack.c.l.b16 %v2296
        %v2353 = vunpack.c.l.b16 %v2297
        %v2354 = vunpack.c.l.b16 %v2298
        %v2355 = vunpack.c.l.b16 %v2299
        %v2356 = vunpack.c.l.b16 %v2300
        %v2357 = vunpack.c.l.b16 %v2301
        %v2358 = vunpack.c.l.b16 %v2302
        %v2359 = vpack.c.b16 %v2332, %v2331
        %v2360 = vpack.c.b16 %v2334, %v2333
        %v2361 = vpack.c.b16 %v2336, %v2335
        %v2362 = vpack.c.b16 %v2338, %v2337
        %v2363 = vpack.c.b16 %v2340, %v2339
        %v2364 = vpack.c.b16 %v2342, %v2341
        %v2365 = vpack.c.b16 %v2344, %v2343
        %v2366 = vpack.c.b16 %v2346, %v2345
        %v2367 = vpack.c.b16 %v2348, %v2347
        %v2368 = vpack.c.b16 %v2350, %v2349
        %v2369 = vpack.c.b16 %v2352, %v2351
        %v2370 = vpack.c.b16 %v2354, %v2353
        %v2371 = vpack.c.b16 %v2356, %v2355
        %v2372 = vpack.c.b16 %v2358, %v2357
        %v2388 = vsel %vm743, %v1863, 0
        %v2391 = vsel %vm743, %v1865, 0
        %v2394 = vsel %vm743, %v1867, 0
        %v2397 = vsel %vm743, %v1869, 0
        %2399 = vmatprep.subr.bf16.mxu0 0
        %2400 = vmatpush1.bf16.msra.mxu0 %v2359
        %2401 = vmatprep.subr.bf16.mxu0 0
        %2402 = vmatpush1.bf16.msra.mxu0 %v2360
        %2403 = vmatprep.subr.bf16.mxu0 0
        %2404 = vmatpush1.bf16.msra.mxu0 %v2361
        %2405 = vmatprep.subr.bf16.mxu0 0
        %2406 = vmatpush1.bf16.msra.mxu0 %v2362
        %2407 = vmatprep.subr.bf16.mxu0 0
        %2408 = vmatpush1.bf16.msra.mxu0 %v2363
        %2409 = vmatprep.subr.bf16.mxu0 0
        %2410 = vmatpush1.bf16.msra.mxu0 %v2364
        %2411 = vmatprep.subr.bf16.mxu0 0
        %2412 = vmatpush1.bf16.msra.mxu0 %v2365
        %2413 = vmatprep.subr.bf16.mxu0 0
        %2414 = vmatpush1.bf16.msra.mxu0 %v2366
        %2415 = vmatprep.subr.bf16.mxu0 0
        %2416 = vmatpush1.bf16.msra.mxu0 %v2367
        %2417 = vmatprep.subr.bf16.mxu0 0
        %2418 = vmatpush1.bf16.msra.mxu0 %v2368
        %2419 = vmatprep.subr.bf16.mxu0 0
        %2420 = vmatpush1.bf16.msra.mxu0 %v2369
        %2421 = vmatprep.subr.bf16.mxu0 0
        %2422 = vmatpush1.bf16.msra.mxu0 %v2370
        %2423 = vmatprep.subr.bf16.mxu0 0
        %2424 = vmatpush1.bf16.msra.mxu0 %v2371
        %2425 = vmatprep.subr.bf16.mxu0 0
        %2426 = vmatpush1.bf16.msra.mxu0 %v2372
        %2427 = vmatprep.subr.bf16.mxu0 0
        %2428 = vmatpush1.bf16.msra.mxu0 0
        %2429 = vmatprep.subr.bf16.mxu0 0
        %2430 = vmatpush1.bf16.msra.mxu0 0
        %2431 = vmatprep.mubr.bf16.mxu0 %v2388
        %2432 = vmatmul.mubr.bf16.gmra.mrb[0].mxu0 %v1862
        %v2433 = vpop.f32.mrb[0].mxu0
        %v2434 = vadd.f32 0.0, %v2433
        %v2435 = vpop.f32.mrb[0].mxu0
        %v2436 = vpop.f32.mrb[0].mxu0
        %v2437 = vadd.f32 0.0, %v2436
        %v2438 = vpop.f32.mrb[0].mxu0
        %2439 = vmatprep.mubr.bf16.mxu0 %v2391
        %2440 = vmatmul.mubr.bf16.gmra.mrb[0].mxu0 %v1864
        %v2441 = vpop.f32.mrb[0].mxu0
        %v2442 = vadd.f32 0.0, %v2441
        %v2443 = vpop.f32.mrb[0].mxu0
        %v2444 = vpop.f32.mrb[0].mxu0
        %v2445 = vadd.f32 0.0, %v2444
        %v2446 = vpop.f32.mrb[0].mxu0
        %2447 = vmatprep.mubr.bf16.mxu0 %v2394
        %2448 = vmatmul.mubr.bf16.gmra.mrb[0].mxu0 %v1866
        %v2449 = vpop.f32.mrb[0].mxu0
        %v2450 = vadd.f32 0.0, %v2449
        %v2451 = vpop.f32.mrb[0].mxu0
        %v2452 = vpop.f32.mrb[0].mxu0
        %v2453 = vadd.f32 0.0, %v2452
        %v2454 = vpop.f32.mrb[0].mxu0
        %2455 = vmatprep.mubr.bf16.mxu0 %v2397
        %2456 = vmatmul.mubr.bf16.gmra.mrb[0].mxu0 %v1868
        %v2457 = vpop.f32.mrb[0].mxu0
        %v2458 = vadd.f32 0.0, %v2457
        %v2459 = vpop.f32.mrb[0].mxu0
        %v2460 = vpop.f32.mrb[0].mxu0
        %v2461 = vpop.f32.mrb[0].mxu0
        %2462 = vdwg.mxu0
        %v2463 = vadd.f32 %v2245, %v2434
        %v2464 = vadd.f32 %v2248, %v2437
        %v2465 = vadd.f32 %v2253, %v2442
        %v2466 = vadd.f32 %v2256, %v2445
        %v2467 = vadd.f32 %v2261, %v2450
        %v2468 = vadd.f32 %v2264, %v2453
        %v2469 = vadd.f32 %v2269, %v2458
        %v2470 = vld [vmem:[#allocation7] sm:$0x1]
        %v2472 = vlaneseq
        %v2473 = vshrl.u32 %v2472, 7
        %v2474 = vsub.s32 0, %v2473
        %v2475 = vrot.slane %v2470, %v2474
        %v2477 = vadd.f32 %v2463, %v2475
        %v2478 = vadd.f32 %v2464, %v2475
        %v2479 = vadd.f32 %v2465, %v2475
        %v2480 = vadd.f32 %v2466, %v2475
        %v2481 = vadd.f32 %v2467, %v2475
        %v2482 = vadd.f32 %v2468, %v2475
        %v2483 = vadd.f32 %v2469, %v2475
        %v2484 = vmax.f32 %v2477, 0.0
        %v2485 = vmax.f32 %v2478, 0.0
        %v2486 = vmax.f32 %v2479, 0.0
        %v2487 = vmax.f32 %v2480, 0.0
        %v2488 = vmax.f32 %v2481, 0.0
        %v2489 = vmax.f32 %v2482, 0.0
        %v2490 = vmax.f32 %v2483, 0.0
        %v2491 = vpack.c.bf16 %v2485, %v2484
        %v2492 = vpack.c.bf16 %v2487, %v2486
        %v2493 = vpack.c.bf16 %v2489, %v2488
        %v2494 = vpack.c.bf16 %v2490, %v2490
        %v2495 = vld [vmem:[%s7] sm:$0xf]
        %v2496 = vld [vmem:[%s7 + $0x4] sm:$0xf]
        %v2497 = vld [vmem:[%s7 + $0x8] sm:$0xf]
        %v2498 = vld [vmem:[%s7 + $0xc] sm:$0xf]
        %v2499 = vld [vmem:[%s7 + $0x10] sm:$0xf]
        %v2500 = vld [vmem:[%s7 + $0x14] sm:$0xf]
        %v2501 = vld [vmem:[%s7 + $0x18] sm:$0xf]
        %v2502 = vld [vmem:[%s7 + $0x1c] sm:$0xf]
        %v2503 = vld [vmem:[%s7 + $0x20] sm:$0xf]
        %v2504 = vld [vmem:[%s7 + $0x24] sm:$0xf]
        %v2505 = vld [vmem:[%s7 + $0x28] sm:$0xf]
        %v2506 = vld [vmem:[%s7 + $0x2c] sm:$0xf]
        %v2519 = vunpack.c.l.b16 %v2495
        %v2520 = vunpack.c.l.b16 %v2496
        %v2521 = vunpack.c.l.b16 %v2497
        %v2522 = vunpack.c.l.b16 %v2498
        %v2523 = vunpack.c.l.b16 %v2499
        %v2524 = vunpack.c.l.b16 %v2500
        %v2525 = vunpack.c.l.b16 %v2501
        %v2526 = vunpack.c.l.b16 %v2502
        %v2527 = vunpack.c.l.b16 %v2503
        %v2528 = vunpack.c.l.b16 %v2504
        %v2529 = vunpack.c.l.b16 %v2505
        %v2530 = vunpack.c.l.b16 %v2506
        %v2531 = vpack.c.b16 %v2520, %v2519
        %v2532 = vpack.c.b16 %v2522, %v2521
        %v2533 = vpack.c.b16 %v2524, %v2523
        %v2534 = vpack.c.b16 %v2526, %v2525
        %v2535 = vpack.c.b16 %v2528, %v2527
        %v2536 = vpack.c.b16 %v2530, %v2529
        %vm2537 = vcmask 457728
        %v2539 = vsel %vm2537, %v2531, 0
        %v2542 = vsel %vm2537, %v2532, 0
        %v2545 = vsel %vm2537, %v2533, 0
        %v2548 = vsel %vm2537, %v2534, 0
        %v2551 = vsel %vm2537, %v2535, 0
        %v2554 = vsel %vm2537, %v2536, 0
        %vm2556 = vcmask 1043456
        %v2558 = vsel %vm2556, %v2494, 0
        %2560 = vmatprep.subr.bf16.mxu0 0
        %2561 = vmatpush1.bf16.msra.mxu0 %v2491
        %2562 = vmatprep.subr.bf16.mxu0 0
        %2563 = vmatpush1.bf16.msra.mxu0 %v2492
        %2564 = vmatprep.subr.bf16.mxu0 0
        %2565 = vmatpush1.bf16.msra.mxu0 %v2493
        %2566 = vmatprep.subr.bf16.mxu0 0
        %2567 = vmatpush1.bf16.msra.mxu0 %v2558
        %2568 = vmatprep.subr.bf16.mxu0 0
        %2569 = vmatpush1.bf16.msra.mxu0 0
        %2570 = vmatprep.subr.bf16.mxu0 0
        %2571 = vmatpush1.bf16.msra.mxu0 0
        %2572 = vmatprep.subr.bf16.mxu0 0
        %2573 = vmatpush1.bf16.msra.mxu0 0
        %2574 = vmatprep.subr.bf16.mxu0 0
        %2575 = vmatpush1.bf16.msra.mxu0 0
        %2576 = vmatprep.subr.bf16.mxu0 0
        %2577 = vmatpush1.bf16.msra.mxu0 0
        %2578 = vmatprep.subr.bf16.mxu0 0
        %2579 = vmatpush1.bf16.msra.mxu0 0
        %2580 = vmatprep.subr.bf16.mxu0 0
        %2581 = vmatpush1.bf16.msra.mxu0 0
        %2582 = vmatprep.subr.bf16.mxu0 0
        %2583 = vmatpush1.bf16.msra.mxu0 0
        %2584 = vmatprep.subr.bf16.mxu0 0
        %2585 = vmatpush1.bf16.msra.mxu0 0
        %2586 = vmatprep.subr.bf16.mxu0 0
        %2587 = vmatpush1.bf16.msra.mxu0 0
        %2588 = vmatprep.subr.bf16.mxu0 0
        %2589 = vmatpush1.bf16.msra.mxu0 0
        %2590 = vmatprep.subr.bf16.mxu0 0
        %2591 = vmatpush1.bf16.msra.mxu0 0
        %2592 = vmatprep.mubr.bf16.mxu0 0
        %2593 = vmatmul.mubr.bf16.gmra.mrb[0].mxu0 %v2539
        %v2594 = vpop.f32.mrb[0].mxu0
        %v2595 = vadd.f32 0.0, %v2594
        %v2596 = vpop.f32.mrb[0].mxu0
        %v2597 = vpop.f32.mrb[0].mxu0
        %v2598 = vadd.f32 0.0, %v2597
        %v2599 = vpop.f32.mrb[0].mxu0
        %2600 = vmatprep.mubr.bf16.mxu0 0
        %2601 = vmatmul.mubr.bf16.gmra.mrb[0].mxu0 %v2542
        %v2602 = vpop.f32.mrb[0].mxu0
        %v2603 = vadd.f32 0.0, %v2602
        %v2604 = vpop.f32.mrb[0].mxu0
        %v2605 = vpop.f32.mrb[0].mxu0
        %v2606 = vadd.f32 0.0, %v2605
        %v2607 = vpop.f32.mrb[0].mxu0
        %2608 = vmatprep.mubr.bf16.mxu0 0
        %2609 = vmatmul.mubr.bf16.gmra.mrb[0].mxu0 %v2545
        %v2610 = vpop.f32.mrb[0].mxu0
        %v2611 = vadd.f32 0.0, %v2610
        %v2612 = vpop.f32.mrb[0].mxu0
        %v2613 = vpop.f32.mrb[0].mxu0
        %v2614 = vadd.f32 0.0, %v2613
        %v2615 = vpop.f32.mrb[0].mxu0
        %2616 = vmatprep.mubr.bf16.mxu0 0
        %2617 = vmatmul.mubr.bf16.gmra.mrb[0].mxu0 %v2548
        %v2618 = vpop.f32.mrb[0].mxu0
        %v2619 = vadd.f32 0.0, %v2618
        %v2620 = vpop.f32.mrb[0].mxu0
        %v2621 = vpop.f32.mrb[0].mxu0
        %v2622 = vadd.f32 0.0, %v2621
        %v2623 = vpop.f32.mrb[0].mxu0
        %2624 = vmatprep.mubr.bf16.mxu0 0
        %2625 = vmatmul.mubr.bf16.gmra.mrb[0].mxu0 %v2551
        %v2626 = vpop.f32.mrb[0].mxu0
        %v2627 = vadd.f32 0.0, %v2626
        %v2628 = vpop.f32.mrb[0].mxu0
        %v2629 = vpop.f32.mrb[0].mxu0
        %v2630 = vadd.f32 0.0, %v2629
        %v2631 = vpop.f32.mrb[0].mxu0
        %2632 = vmatprep.mubr.bf16.mxu0 0
        %2633 = vmatmul.mubr.bf16.gmra.mrb[0].mxu0 %v2554
        %v2634 = vpop.f32.mrb[0].mxu0
        %v2635 = vadd.f32 0.0, %v2634
        %v2636 = vpop.f32.mrb[0].mxu0
        %v2637 = vpop.f32.mrb[0].mxu0
        %v2638 = vadd.f32 0.0, %v2637
        %v2639 = vpop.f32.mrb[0].mxu0
        %2640 = vdwg.mxu0
        %v2641 = vpack.c.bf16 %v2598, %v2595
        %v2642 = vpack.c.bf16 %v2606, %v2603
        %v2643 = vpack.c.bf16 %v2614, %v2611
        %v2644 = vpack.c.bf16 %v2622, %v2619
        %v2645 = vpack.c.bf16 %v2630, %v2627
        %v2646 = vpack.c.bf16 %v2638, %v2635
        %v2647 = vld [vmem:[%s8] sm:$0xf]
        %v2648 = vld [vmem:[%s8 + $0x4] sm:$0xf]
        %v2649 = vld [vmem:[%s8 + $0x8] sm:$0xf]
        %v2650 = vld [vmem:[%s8 + $0xc] sm:$0xf]
        %v2651 = vld [vmem:[%s8 + $0x10] sm:$0xf]
        %v2652 = vld [vmem:[%s8 + $0x14] sm:$0xf]
        %v2653 = vld [vmem:[%s8 + $0x18] sm:$0xf]
        %v2654 = vld [vmem:[%s8 + $0x1c] sm:$0xf]
        %v2655 = vld [vmem:[%s8 + $0x20] sm:$0xf]
        %v2656 = vld [vmem:[%s8 + $0x24] sm:$0xf]
        %v2657 = vld [vmem:[%s8 + $0x28] sm:$0xf]
        %v2658 = vld [vmem:[%s8 + $0x2c] sm:$0xf]
        %v2659 = vld [vmem:[%s8 + $0x30] sm:$0xf]
        %v2660 = vld [vmem:[%s8 + $0x34] sm:$0xf]
        %s2661 = scalar_lea.vmem %s8, 56
        %v2662 = vld [vmem:[%s2661] sm:$0xf]
        %v2663 = vld [vmem:[%s2661 + $0x4] sm:$0xf]
        %v2664 = vld [vmem:[%s2661 + $0x8] sm:$0xf]
        %v2665 = vld [vmem:[%s2661 + $0xc] sm:$0xf]
        %v2666 = vld [vmem:[%s2661 + $0x10] sm:$0xf]
        %v2667 = vld [vmem:[%s2661 + $0x14] sm:$0xf]
        %v2668 = vld [vmem:[%s2661 + $0x18] sm:$0xf]
        %v2669 = vld [vmem:[%s2661 + $0x1c] sm:$0xf]
        %v2670 = vld [vmem:[%s2661 + $0x20] sm:$0xf]
        %v2671 = vld [vmem:[%s2661 + $0x24] sm:$0xf]
        %v2672 = vld [vmem:[%s2661 + $0x28] sm:$0xf]
        %v2673 = vld [vmem:[%s2661 + $0x2c] sm:$0xf]
        %v2674 = vld [vmem:[%s2661 + $0x30] sm:$0xf]
        %v2675 = vld [vmem:[%s2661 + $0x34] sm:$0xf]
        %v2690 = vunpack.c.l.b16 %v2662
        %v2691 = vunpack.c.l.b16 %v2663
        %v2692 = vunpack.c.l.b16 %v2664
        %v2693 = vunpack.c.l.b16 %v2665
        %v2694 = vunpack.c.l.b16 %v2666
        %v2695 = vunpack.c.l.b16 %v2667
        %v2696 = vunpack.c.l.b16 %v2668
        %v2697 = vunpack.c.l.b16 %v2669
        %v2698 = vunpack.c.l.b16 %v2670
        %v2699 = vunpack.c.l.b16 %v2671
        %v2700 = vunpack.c.l.b16 %v2672
        %v2701 = vunpack.c.l.b16 %v2673
        %v2702 = vunpack.c.l.b16 %v2674
        %v2703 = vunpack.c.l.b16 %v2675
        %v2704 = vpack.c.b16 %v2691, %v2690
        %v2705 = vpack.c.b16 %v2693, %v2692
        %v2706 = vpack.c.b16 %v2695, %v2694
        %v2707 = vpack.c.b16 %v2697, %v2696
        %v2708 = vpack.c.b16 %v2699, %v2698
        %v2709 = vpack.c.b16 %v2701, %v2700
        %v2710 = vpack.c.b16 %v2703, %v2702
        %v2719 = vsel %vm1673, %v2643, 0
        %v2722 = vsel %vm1673, %v2644, 0
        %2724 = vmatprep.subr.bf16.mxu0 0
        %2725 = vmatpush1.bf16.msra.mxu0 %v2704
        %2726 = vmatprep.subr.bf16.mxu0 0
        %2727 = vmatpush1.bf16.msra.mxu0 %v2705
        %2728 = vmatprep.subr.bf16.mxu0 0
        %2729 = vmatpush1.bf16.msra.mxu0 %v2706
        %2730 = vmatprep.subr.bf16.mxu0 0
        %2731 = vmatpush1.bf16.msra.mxu0 %v2707
        %2732 = vmatprep.subr.bf16.mxu0 0
        %2733 = vmatpush1.bf16.msra.mxu0 %v2708
        %2734 = vmatprep.subr.bf16.mxu0 0
        %2735 = vmatpush1.bf16.msra.mxu0 %v2709
        %2736 = vmatprep.subr.bf16.mxu0 0
        %2737 = vmatpush1.bf16.msra.mxu0 %v2710
        %2738 = vmatprep.subr.bf16.mxu0 0
        %2739 = vmatpush1.bf16.msra.mxu0 0
        %2740 = vmatprep.subr.bf16.mxu0 0
        %2741 = vmatpush1.bf16.msra.mxu0 0
        %2742 = vmatprep.subr.bf16.mxu0 0
        %2743 = vmatpush1.bf16.msra.mxu0 0
        %2744 = vmatprep.subr.bf16.mxu0 0
        %2745 = vmatpush1.bf16.msra.mxu0 0
        %2746 = vmatprep.subr.bf16.mxu0 0
        %2747 = vmatpush1.bf16.msra.mxu0 0
        %2748 = vmatprep.subr.bf16.mxu0 0
        %2749 = vmatpush1.bf16.msra.mxu0 0
        %2750 = vmatprep.subr.bf16.mxu0 0
        %2751 = vmatpush1.bf16.msra.mxu0 0
        %2752 = vmatprep.subr.bf16.mxu0 0
        %2753 = vmatpush1.bf16.msra.mxu0 0
        %2754 = vmatprep.subr.bf16.mxu0 0
        %2755 = vmatpush1.bf16.msra.mxu0 0
        %2756 = vmatprep.mubr.bf16.mxu0 0
        %2757 = vmatmul.mubr.bf16.gmra.mrb[0].mxu0 %v2719
        %v2758 = vpop.f32.mrb[0].mxu0
        %v2759 = vadd.f32 0.0, %v2758
        %v2760 = vpop.f32.mrb[0].mxu0
        %v2761 = vpop.f32.mrb[0].mxu0
        %v2762 = vadd.f32 0.0, %v2761
        %v2763 = vpop.f32.mrb[0].mxu0
        %2764 = vmatprep.mubr.bf16.mxu0 0
        %2765 = vmatmul.mubr.bf16.gmra.mrb[0].mxu0 %v2722
        %v2766 = vpop.f32.mrb[0].mxu0
        %v2767 = vadd.f32 0.0, %v2766
        %v2768 = vpop.f32.mrb[0].mxu0
        %v2769 = vpop.f32.mrb[0].mxu0
        %v2770 = vadd.f32 0.0, %v2769
        %v2771 = vpop.f32.mrb[0].mxu0
        %2772 = vdwg.mxu0
        %v2787 = vunpack.c.l.b16 %v2647
        %v2788 = vunpack.c.l.b16 %v2648
        %v2789 = vunpack.c.l.b16 %v2649
        %v2790 = vunpack.c.l.b16 %v2650
        %v2791 = vunpack.c.l.b16 %v2651
        %v2792 = vunpack.c.l.b16 %v2652
        %v2793 = vunpack.c.l.b16 %v2653
        %v2794 = vunpack.c.l.b16 %v2654
        %v2795 = vunpack.c.l.b16 %v2655
        %v2796 = vunpack.c.l.b16 %v2656
        %v2797 = vunpack.c.l.b16 %v2657
        %v2798 = vunpack.c.l.b16 %v2658
        %v2799 = vunpack.c.l.b16 %v2659
        %v2800 = vunpack.c.l.b16 %v2660
        %v2801 = vpack.c.b16 %v2788, %v2787
        %v2802 = vpack.c.b16 %v2790, %v2789
        %v2803 = vpack.c.b16 %v2792, %v2791
        %v2804 = vpack.c.b16 %v2794, %v2793
        %v2805 = vpack.c.b16 %v2796, %v2795
        %v2806 = vpack.c.b16 %v2798, %v2797
        %v2807 = vpack.c.b16 %v2800, %v2799
        %v2816 = vsel %vm1673, %v2641, 0
        %v2819 = vsel %vm1673, %v2642, 0
        %2821 = vmatprep.subr.bf16.mxu0 0
        %2822 = vmatpush1.bf16.msra.mxu0 %v2801
        %2823 = vmatprep.subr.bf16.mxu0 0
        %2824 = vmatpush1.bf16.msra.mxu0 %v2802
        %2825 = vmatprep.subr.bf16.mxu0 0
        %2826 = vmatpush1.bf16.msra.mxu0 %v2803
        %2827 = vmatprep.subr.bf16.mxu0 0
        %2828 = vmatpush1.bf16.msra.mxu0 %v2804
        %2829 = vmatprep.subr.bf16.mxu0 0
        %2830 = vmatpush1.bf16.msra.mxu0 %v2805
        %2831 = vmatprep.subr.bf16.mxu0 0
        %2832 = vmatpush1.bf16.msra.mxu0 %v2806
        %2833 = vmatprep.subr.bf16.mxu0 0
        %2834 = vmatpush1.bf16.msra.mxu0 %v2807
        %2835 = vmatprep.subr.bf16.mxu0 0
        %2836 = vmatpush1.bf16.msra.mxu0 0
        %2837 = vmatprep.subr.bf16.mxu0 0
        %2838 = vmatpush1.bf16.msra.mxu0 0
        %2839 = vmatprep.subr.bf16.mxu0 0
        %2840 = vmatpush1.bf16.msra.mxu0 0
        %2841 = vmatprep.subr.bf16.mxu0 0
        %2842 = vmatpush1.bf16.msra.mxu0 0
        %2843 = vmatprep.subr.bf16.mxu0 0
        %2844 = vmatpush1.bf16.msra.mxu0 0
        %2845 = vmatprep.subr.bf16.mxu0 0
        %2846 = vmatpush1.bf16.msra.mxu0 0
        %2847 = vmatprep.subr.bf16.mxu0 0
        %2848 = vmatpush1.bf16.msra.mxu0 0
        %2849 = vmatprep.subr.bf16.mxu0 0
        %2850 = vmatpush1.bf16.msra.mxu0 0
        %2851 = vmatprep.subr.bf16.mxu0 0
        %2852 = vmatpush1.bf16.msra.mxu0 0
        %2853 = vmatprep.mubr.bf16.mxu0 0
        %2854 = vmatmul.mubr.bf16.gmra.mrb[0].mxu0 %v2816
        %v2855 = vpop.f32.mrb[0].mxu0
        %v2856 = vadd.f32 %v2759, %v2855
        %v2857 = vpop.f32.mrb[0].mxu0
        %v2858 = vpop.f32.mrb[0].mxu0
        %v2859 = vadd.f32 %v2762, %v2858
        %v2860 = vpop.f32.mrb[0].mxu0
        %2861 = vmatprep.mubr.bf16.mxu0 0
        %2862 = vmatmul.mubr.bf16.gmra.mrb[0].mxu0 %v2819
        %v2863 = vpop.f32.mrb[0].mxu0
        %v2864 = vadd.f32 %v2767, %v2863
        %v2865 = vpop.f32.mrb[0].mxu0
        %v2866 = vpop.f32.mrb[0].mxu0
        %v2867 = vadd.f32 %v2770, %v2866
        %v2868 = vpop.f32.mrb[0].mxu0
        %2869 = vdwg.mxu0
        %s2870 = scalar_lea.vmem %s8, 112
        %v2871 = vld [vmem:[%s2870] sm:$0xf]
        %v2872 = vld [vmem:[%s2870 + $0x4] sm:$0xf]
        %v2873 = vld [vmem:[%s2870 + $0x8] sm:$0xf]
        %v2874 = vld [vmem:[%s2870 + $0xc] sm:$0xf]
        %v2875 = vld [vmem:[%s2870 + $0x10] sm:$0xf]
        %v2876 = vld [vmem:[%s2870 + $0x14] sm:$0xf]
        %v2877 = vld [vmem:[%s2870 + $0x18] sm:$0xf]
        %v2878 = vld [vmem:[%s2870 + $0x1c] sm:$0xf]
        %v2879 = vld [vmem:[%s2870 + $0x20] sm:$0xf]
        %v2880 = vld [vmem:[%s2870 + $0x24] sm:$0xf]
        %v2881 = vld [vmem:[%s2870 + $0x28] sm:$0xf]
        %v2882 = vld [vmem:[%s2870 + $0x2c] sm:$0xf]
        %v2883 = vld [vmem:[%s2870 + $0x30] sm:$0xf]
        %v2884 = vld [vmem:[%s2870 + $0x34] sm:$0xf]
        %v2899 = vunpack.c.l.b16 %v2871
        %v2900 = vunpack.c.l.b16 %v2872
        %v2901 = vunpack.c.l.b16 %v2873
        %v2902 = vunpack.c.l.b16 %v2874
        %v2903 = vunpack.c.l.b16 %v2875
        %v2904 = vunpack.c.l.b16 %v2876
        %v2905 = vunpack.c.l.b16 %v2877
        %v2906 = vunpack.c.l.b16 %v2878
        %v2907 = vunpack.c.l.b16 %v2879
        %v2908 = vunpack.c.l.b16 %v2880
        %v2909 = vunpack.c.l.b16 %v2881
        %v2910 = vunpack.c.l.b16 %v2882
        %v2911 = vunpack.c.l.b16 %v2883
        %v2912 = vunpack.c.l.b16 %v2884
        %v2913 = vpack.c.b16 %v2900, %v2899
        %v2914 = vpack.c.b16 %v2902, %v2901
        %v2915 = vpack.c.b16 %v2904, %v2903
        %v2916 = vpack.c.b16 %v2906, %v2905
        %v2917 = vpack.c.b16 %v2908, %v2907
        %v2918 = vpack.c.b16 %v2910, %v2909
        %v2919 = vpack.c.b16 %v2912, %v2911
        %v2928 = vsel %vm1673, %v2645, 0
        %v2931 = vsel %vm1673, %v2646, 0
        %2933 = vmatprep.subr.bf16.mxu0 0
        %2934 = vmatpush1.bf16.msra.mxu0 %v2913
        %2935 = vmatprep.subr.bf16.mxu0 0
        %2936 = vmatpush1.bf16.msra.mxu0 %v2914
        %2937 = vmatprep.subr.bf16.mxu0 0
        %2938 = vmatpush1.bf16.msra.mxu0 %v2915
        %2939 = vmatprep.subr.bf16.mxu0 0
        %2940 = vmatpush1.bf16.msra.mxu0 %v2916
        %2941 = vmatprep.subr.bf16.mxu0 0
        %2942 = vmatpush1.bf16.msra.mxu0 %v2917
        %2943 = vmatprep.subr.bf16.mxu0 0
        %2944 = vmatpush1.bf16.msra.mxu0 %v2918
        %2945 = vmatprep.subr.bf16.mxu0 0
        %2946 = vmatpush1.bf16.msra.mxu0 %v2919
        %2947 = vmatprep.subr.bf16.mxu0 0
        %2948 = vmatpush1.bf16.msra.mxu0 0
        %2949 = vmatprep.subr.bf16.mxu0 0
        %2950 = vmatpush1.bf16.msra.mxu0 0
        %2951 = vmatprep.subr.bf16.mxu0 0
        %2952 = vmatpush1.bf16.msra.mxu0 0
        %2953 = vmatprep.subr.bf16.mxu0 0
        %2954 = vmatpush1.bf16.msra.mxu0 0
        %2955 = vmatprep.subr.bf16.mxu0 0
        %2956 = vmatpush1.bf16.msra.mxu0 0
        %2957 = vmatprep.subr.bf16.mxu0 0
        %2958 = vmatpush1.bf16.msra.mxu0 0
        %2959 = vmatprep.subr.bf16.mxu0 0
        %2960 = vmatpush1.bf16.msra.mxu0 0
        %2961 = vmatprep.subr.bf16.mxu0 0
        %2962 = vmatpush1.bf16.msra.mxu0 0
        %2963 = vmatprep.subr.bf16.mxu0 0
        %2964 = vmatpush1.bf16.msra.mxu0 0
        %2965 = vmatprep.mubr.bf16.mxu0 0
        %2966 = vmatmul.mubr.bf16.gmra.mrb[0].mxu0 %v2928
        %v2967 = vpop.f32.mrb[0].mxu0
        %v2968 = vadd.f32 0.0, %v2967
        %v2969 = vpop.f32.mrb[0].mxu0
        %v2970 = vpop.f32.mrb[0].mxu0
        %v2971 = vadd.f32 0.0, %v2970
        %v2972 = vpop.f32.mrb[0].mxu0
        %2973 = vmatprep.mubr.bf16.mxu0 0
        %2974 = vmatmul.mubr.bf16.gmra.mrb[0].mxu0 %v2931
        %v2975 = vpop.f32.mrb[0].mxu0
        %v2976 = vadd.f32 0.0, %v2975
        %v2977 = vpop.f32.mrb[0].mxu0
        %v2978 = vpop.f32.mrb[0].mxu0
        %v2979 = vadd.f32 0.0, %v2978
        %v2980 = vpop.f32.mrb[0].mxu0
        %2981 = vdwg.mxu0
        %v2982 = vadd.f32 %v2856, %v2968
        %v2983 = vadd.f32 %v2859, %v2971
        %v2984 = vadd.f32 %v2864, %v2976
        %v2985 = vadd.f32 %v2867, %v2979
        %v2986 = vld [vmem:[#allocation8] sm:$0x1]
        %v2988 = vlaneseq
        %v2989 = vshrl.u32 %v2988, 7
        %v2990 = vsub.s32 0, %v2989
        %v2991 = vrot.slane %v2986, %v2990
        %v2993 = vadd.f32 %v2982, %v2991
        %v2994 = vadd.f32 %v2983, %v2991
        %v2995 = vadd.f32 %v2984, %v2991
        %v2996 = vadd.f32 %v2985, %v2991
        %v2997 = vmax.f32 %v2993, 0.0
        %v2998 = vmax.f32 %v2994, 0.0
        %v2999 = vmax.f32 %v2995, 0.0
        %v3000 = vmax.f32 %v2996, 0.0
        %v3001 = vpack.c.bf16 %v2998, %v2997
        %v3002 = vpack.c.bf16 %v3000, %v2999
        %v3003 = vld [vmem:[%s10] sm:$0xf]
        %vm3004 = vcmask 261120
        %v3006 = vsel %vm3004, %v3003, 0
        %3008 = vmatprep.subr.bf16.mxu0 0
        %3009 = vmatpush1.bf16.msra.mxu0 %v3001
        %3010 = vmatprep.subr.bf16.mxu0 0
        %3011 = vmatpush1.bf16.msra.mxu0 %v3002
        %3012 = vmatprep.subr.bf16.mxu0 0
        %3013 = vmatpush1.bf16.msra.mxu0 0
        %3014 = vmatprep.subr.bf16.mxu0 0
        %3015 = vmatpush1.bf16.msra.mxu0 0
        %3016 = vmatprep.subr.bf16.mxu0 0
        %3017 = vmatpush1.bf16.msra.mxu0 0
        %3018 = vmatprep.subr.bf16.mxu0 0
        %3019 = vmatpush1.bf16.msra.mxu0 0
        %3020 = vmatprep.subr.bf16.mxu0 0
        %3021 = vmatpush1.bf16.msra.mxu0 0
        %3022 = vmatprep.subr.bf16.mxu0 0
        %3023 = vmatpush1.bf16.msra.mxu0 0
        %3024 = vmatprep.subr.bf16.mxu0 0
        %3025 = vmatpush1.bf16.msra.mxu0 0
        %3026 = vmatprep.subr.bf16.mxu0 0
        %3027 = vmatpush1.bf16.msra.mxu0 0
        %3028 = vmatprep.subr.bf16.mxu0 0
        %3029 = vmatpush1.bf16.msra.mxu0 0
        %3030 = vmatprep.subr.bf16.mxu0 0
        %3031 = vmatpush1.bf16.msra.mxu0 0
        %3032 = vmatprep.subr.bf16.mxu0 0
        %3033 = vmatpush1.bf16.msra.mxu0 0
        %3034 = vmatprep.subr.bf16.mxu0 0
        %3035 = vmatpush1.bf16.msra.mxu0 0
        %3036 = vmatprep.subr.bf16.mxu0 0
        %3037 = vmatpush1.bf16.msra.mxu0 0
        %3038 = vmatprep.subr.bf16.mxu0 0
        %3039 = vmatpush1.bf16.msra.mxu0 0
        %3040 = vmatprep.mubr.bf16.mxu0 0
        %3041 = vmatmul.mubr.bf16.gmra.mrb[0].mxu0 %v3006
        %v3042 = vpop.f32.mrb[0].mxu0
        %v3043 = vadd.f32 0.0, %v3042
        %v3044 = vpop.f32.mrb[0].mxu0
        %v3045 = vpop.f32.mrb[0].mxu0
        %v3046 = vpop.f32.mrb[0].mxu0
        %3047 = vdwg.mxu0
        %v3048 = vpack.c.bf16 %v3043, %v3043
        %v3049 = vld [vmem:[%s11] sm:$0xf]
        %v3050 = vld [vmem:[%s11 + $0x4] sm:$0xf]
        %v3051 = vld [vmem:[%s11 + $0x8] sm:$0xf]
        %v3052 = vld [vmem:[%s11 + $0xc] sm:$0xf]
        %v3053 = vld [vmem:[%s11 + $0x10] sm:$0xf]
        %v3054 = vld [vmem:[%s11 + $0x14] sm:$0xf]
        %v3055 = vld [vmem:[%s11 + $0x18] sm:$0xf]
        %v3056 = vld [vmem:[%s11 + $0x1c] sm:$0xf]
        %v3057 = vld [vmem:[%s11 + $0x20] sm:$0xf]
        %v3058 = vld [vmem:[%s11 + $0x24] sm:$0xf]
        %v3059 = vld [vmem:[%s11 + $0x28] sm:$0xf]
        %v3060 = vld [vmem:[%s11 + $0x2c] sm:$0xf]
        %v3061 = vld [vmem:[%s11 + $0x30] sm:$0xf]
        %v3062 = vld [vmem:[%s11 + $0x34] sm:$0xf]
        %v3063 = vld [vmem:[%s11 + $0x38] sm:$0xf]
        %v3064 = vld [vmem:[%s11 + $0x3c] sm:$0xf]
        %v3081 = vunpack.c.l.b16 %v3049
        %v3082 = vunpack.c.l.b16 %v3050
        %v3083 = vunpack.c.l.b16 %v3051
        %v3084 = vunpack.c.l.b16 %v3052
        %v3085 = vunpack.c.l.b16 %v3053
        %v3086 = vunpack.c.l.b16 %v3054
        %v3087 = vunpack.c.l.b16 %v3055
        %v3088 = vunpack.c.l.b16 %v3056
        %v3089 = vunpack.c.l.b16 %v3057
        %v3090 = vunpack.c.l.b16 %v3058
        %v3091 = vunpack.c.l.b16 %v3059
        %v3092 = vunpack.c.l.b16 %v3060
        %v3093 = vunpack.c.l.b16 %v3061
        %v3094 = vunpack.c.l.b16 %v3062
        %v3095 = vunpack.c.l.b16 %v3063
        %v3096 = vunpack.c.l.b16 %v3064
        %v3097 = vpack.c.b16 %v3082, %v3081
        %v3098 = vpack.c.b16 %v3084, %v3083
        %v3099 = vpack.c.b16 %v3086, %v3085
        %v3100 = vpack.c.b16 %v3088, %v3087
        %v3101 = vpack.c.b16 %v3090, %v3089
        %v3102 = vpack.c.b16 %v3092, %v3091
        %v3103 = vpack.c.b16 %v3094, %v3093
        %v3104 = vpack.c.b16 %v3096, %v3095
        %3113 = vmatprep.subr.bf16.mxu0 0
        %3114 = vmatpush1.bf16.msra.mxu0 %v3097
        %3115 = vmatprep.subr.bf16.mxu0 0
        %3116 = vmatpush1.bf16.msra.mxu0 %v3098
        %3117 = vmatprep.subr.bf16.mxu0 0
        %3118 = vmatpush1.bf16.msra.mxu0 %v3099
        %3119 = vmatprep.subr.bf16.mxu0 0
        %3120 = vmatpush1.bf16.msra.mxu0 %v3100
        %3121 = vmatprep.subr.bf16.mxu0 0
        %3122 = vmatpush1.bf16.msra.mxu0 %v3101
        %3123 = vmatprep.subr.bf16.mxu0 0
        %3124 = vmatpush1.bf16.msra.mxu0 %v3102
        %3125 = vmatprep.subr.bf16.mxu0 0
        %3126 = vmatpush1.bf16.msra.mxu0 %v3103
        %3127 = vmatprep.subr.bf16.mxu0 0
        %3128 = vmatpush1.bf16.msra.mxu0 %v3104
        %3129 = vmatprep.subr.bf16.mxu0 0
        %3130 = vmatpush1.bf16.msra.mxu0 0
        %3131 = vmatprep.subr.bf16.mxu0 0
        %3132 = vmatpush1.bf16.msra.mxu0 0
        %3133 = vmatprep.subr.bf16.mxu0 0
        %3134 = vmatpush1.bf16.msra.mxu0 0
        %3135 = vmatprep.subr.bf16.mxu0 0
        %3136 = vmatpush1.bf16.msra.mxu0 0
        %3137 = vmatprep.subr.bf16.mxu0 0
        %3138 = vmatpush1.bf16.msra.mxu0 0
        %3139 = vmatprep.subr.bf16.mxu0 0
        %3140 = vmatpush1.bf16.msra.mxu0 0
        %3141 = vmatprep.subr.bf16.mxu0 0
        %3142 = vmatpush1.bf16.msra.mxu0 0
        %3143 = vmatprep.subr.bf16.mxu0 0
        %3144 = vmatpush1.bf16.msra.mxu0 0
        %3145 = vmatprep.mubr.bf16.mxu0 0
        %3146 = vmatmul.mubr.bf16.gmra.mrb[0].mxu0 %v3048
        %v3147 = vpop.f32.mrb[0].mxu0
        %v3148 = vadd.f32 0.0, %v3147
        %v3149 = vpop.f32.mrb[0].mxu0
        %v3150 = vpop.f32.mrb[0].mxu0
        %v3151 = vpop.f32.mrb[0].mxu0
        %3152 = vdwg.mxu0
        %3153 = vst [vmem:[%s462] sm:$0xff] %v3148
        %s3154 = sand.u32 %s294, 1
        %s3155 = scalar_lea.sflag [#allocation4], %s3154
        %s3156 = sand.u32 %s294, 1
        %s3157 = smul.addr %s3156, 8
        %s3158 = scalar_lea.vmem [#allocation10], %s3157
        // Predicated region
        $region85: #{mnist_cnn_forward.1} parent=67 // pred_check
          %p3159 = pneg %p304
        $region86: #{mnist_cnn_forward.1} parent=67 // pred_check_branch
          %3161 = sbr.rel (%p3159) target = $region88
        $region87: #{mnist_cnn_forward.1} parent=67 // pred_region
          %s3163 = ssub.s32 128, 128
          %3164 = vsyncadd %s3155, %s3163
          %s3165 = smul.addr %s29, 128
          %s3166 = scalar_lea.hbm %s12, %s3165
          %s3168 = sshll.u32 %s3158, 4
          %s3169 = int_to_ptr.vmem [resolvable:$true] %s3168
          %3171 = dma.vmem_to_hbm [thread:$0]  %s3169, 128, %s3166, %s3155
        $region88: #{mnist_cnn_forward.1} parent=67 // pred_fallthru
          _
      $region68: #{mnist_cnn_forward.1} parent=5 // pred_fallthru
        _
      %p3172 = scmp.le.s32.totalorder 2, %s24
      // Predicated region
      $region89: #{mnist_cnn_forward.1} parent=5 // pred_check
        %p3173 = pneg %p3172
      $region90: #{mnist_cnn_forward.1} parent=5 // pred_check_branch
        %3175 = sbr.rel (%p3173) target = $region92
      $region91: #{mnist_cnn_forward.1} parent=5 // pred_region
        %s3176 = ssub.s32 %s24, 2
        // Predicated region
        $region93: #{mnist_cnn_forward.1} parent=91 // pred_check
          %p3177 = pneg %p310
        $region94: #{mnist_cnn_forward.1} parent=91 // pred_check_branch
          %3179 = sbr.rel (%p3177) target = $region96
        $region95: #{mnist_cnn_forward.1} parent=91 // pred_region
          %s3180 = sand.u32 %s295, 1
          %s3181 = scalar_lea.sflag [#allocation4], %s3180
          %s3182 = sand.u32 %s295, 1
          %s3183 = smul.addr %s3182, 8
          %s3184 = scalar_lea.vmem [#allocation10], %s3183
          %3185 = dma.done %s3181, 128
        $region96: #{mnist_cnn_forward.1} parent=91 // pred_fallthru
          _
      $region92: #{mnist_cnn_forward.1} parent=5 // pred_fallthru
        _
    $region6: #{mnist_cnn_forward.1} parent=1 // loop_footer
      %s28 = sadd.s32 1, %s24
    $region7: #{mnist_cnn_forward.1} parent=1 // loop_footer_branch
      %23 = sbr.rel target = $region3
    $region8: #{mnist_cnn_forward.1} parent=1 // loop_exit
      _
    %3186 = vsyncpa [#allocation3], 1
    %s3187 = scalar_lea.sflag [#allocation3], 1
    %3188 = vsyncpa %s3187, 1
    %3189 = vsyncpa [#allocation6], 1
    %3190 = vsyncpa [#allocation9], 1
    %3191 = vsyncpa [#allocation4], 1
    %s3192 = scalar_lea.sflag [#allocation4], 1
    %3193 = vsyncpa %s3192, 1

</llo_original>
